<compile_context>
chip_gen: v7x
topology: tpu7x:2x2x1
jax: 0.10.0
libtpu: 0.0.40
codegen_flags: <defaults>
</compile_context>

<pallas_src>
import math

import jax
import jax.numpy as jnp
from jax.experimental import pallas as pl
from jax.experimental.pallas import tpu as pltpu


VMEM_LIMIT = 32 * 1024 * 1024   # safe on v5e/v6e/v7x; blocks below are sized to a few MB anyway
ROW_TILE = 512                  # default M-tile for row-tiled kernels


# --------------------------------------------------------------------------------------
# Row-tiled linear (+ optional ReLU)
# --------------------------------------------------------------------------------------
def _linear_kernel(x_ref, w_ref, b_ref, o_ref):
    o_ref[...] = (
        jnp.dot(x_ref[...], w_ref[...], preferred_element_type=jnp.float32) + b_ref[...]
    )


def _linear_relu_kernel(x_ref, w_ref, b_ref, o_ref):
    y = jnp.dot(x_ref[...], w_ref[...], preferred_element_type=jnp.float32) + b_ref[...]
    o_ref[...] = jnp.maximum(y, 0.0)


def linear(x, w, b, *, relu=False, tm=ROW_TILE):
    """(M, K) @ (K, Nout) + b, rows tiled with TM, weights/bias untiled."""
    M, K = x.shape
    Nout = w.shape[1]
    # Pad tiny contraction dims (K = 2 or 4 for the input embeddings) up to 8 with zeros.
    if K < 8:
        x = jnp.pad(x, ((0, 0), (0, 8 - K)))
        w = jnp.pad(w, ((0, 8 - K), (0, 0)))
        K = 8
    TM = min(M, tm)
    kern = _linear_relu_kernel if relu else _linear_kernel
    return pl.pallas_call(
        kern,
        out_shape=jax.ShapeDtypeStruct((M, Nout), jnp.float32),
        grid=(pl.cdiv(M, TM),),
        in_specs=[
            pl.BlockSpec((TM, K), lambda i: (i, 0)),
            pl.BlockSpec((K, Nout), lambda i: (0, 0)),
            pl.BlockSpec((1, Nout), lambda i: (0, 0)),
        ],
        out_specs=pl.BlockSpec((TM, Nout), lambda i: (i, 0)),
        compiler_params=pltpu.CompilerParams(
            dimension_semantics=("parallel",), vmem_limit_bytes=VMEM_LIMIT),
    )(x, w, b.reshape(1, Nout))


# --------------------------------------------------------------------------------------
# Fused edge-linear + gating + mean aggregation + single-pass BN statistics
# --------------------------------------------------------------------------------------
def _gated_fused_kernel(e_ref, ncat_ref, eU_w_ref, eU_b_ref,
                        e_tmp_ref, x_tmp_ref, stats_ref):
    Bt, N, _, H = e_ref.shape
    e_in = e_ref[...]                      # (Bt, N, N, H)  current edge features
    ncat = ncat_ref[...]                   # (Bt, N, 3H)    [Vx | Ux | NVx]
    Vx = ncat[:, :, 0:H]
    Ux = ncat[:, :, H:2 * H]
    NVx = ncat[:, :, 2 * H:3 * H]

    # Ue = e @ U_e + b  (MXU matmul fused in; no (E,H) Ue materialization in HBM)
    Ue = jnp.dot(e_in.reshape(Bt * N * N, H), eU_w_ref[...],
                 preferred_element_type=jnp.float32) + eU_b_ref[...]
    Ue = Ue.reshape(Bt, N, N, H)

    # EdgeFeatures: e_ij = Ue_ij + Vx_i + Vx_j
    e_tmp = Ue + Vx[:, :, None, :] + Vx[:, None, :, :]
    gate = jax.nn.sigmoid(e_tmp)

    # NodeFeatures ("mean" aggregation): x_i = Ux_i + sum_j gate_ij*NVx_j / (1e-20 + sum_j gate_ij)
    num = jnp.sum(gate * NVx[:, None, :, :], axis=2)
    den = jnp.sum(gate, axis=2)
    x_tmp = Ux + num * pl.reciprocal(den + 1e-20, approx=True)

    e_tmp_ref[...] = e_tmp
    x_tmp_ref[...] = x_tmp

    # Single-pass per-channel partial sums for the two BatchNorms (reduced across blocks in glue).
    e2 = e_tmp.reshape(Bt * N * N, H)
    x2 = x_tmp.reshape(Bt * N, H)
    sums = jnp.concatenate(
        [jnp.sum(e2, axis=0, keepdims=True),
         jnp.sum(e2 * e2, axis=0, keepdims=True),
         jnp.sum(x2, axis=0, keepdims=True),
         jnp.sum(x2 * x2, axis=0, keepdims=True)], axis=0)        # (4, H)
    stats_ref[...] = sums.reshape(1, 4, H)


def gated_fused(e, ncat, eU_w, eU_b, B, N, H):
    """e:(B*N*N,H), ncat:(B*N,3H) -> e_tmp:(B,N,N,H), x_tmp:(B,N,H), stats:(4,H)."""
    # Group several batch elements per grid step so each block is a few MB (per-step pipeline
    # overhead amortized), while staying well inside v7x's 64 MiB VMEM.
    per_b_bytes = N * N * H * 4
    target = 2 * 1024 * 1024
    Bt = max(1, min(B, target // max(per_b_bytes, 1)))
    while B % Bt != 0:
        Bt -= 1
    G = B // Bt

    e4 = e.reshape(B, N, N, H)
    n3 = ncat.reshape(B, N, 3 * H)

    e_tmp, x_tmp, stats = pl.pallas_call(
        _gated_fused_kernel,
        out_shape=(
            jax.ShapeDtypeStruct((B, N, N, H), jnp.float32),
            jax.ShapeDtypeStruct((B, N, H), jnp.float32),
            jax.ShapeDtypeStruct((G, 4, H), jnp.float32),
        ),
        grid=(G,),
        in_specs=[
            pl.BlockSpec((Bt, N, N, H), lambda g: (g, 0, 0, 0)),
            pl.BlockSpec((Bt, N, 3 * H), lambda g: (g, 0, 0)),
            pl.BlockSpec((H, H), lambda g: (0, 0)),
            pl.BlockSpec((1, H), lambda g: (0, 0)),
        ],
        out_specs=(
            pl.BlockSpec((Bt, N, N, H), lambda g: (g, 0, 0, 0)),
            pl.BlockSpec((Bt, N, H), lambda g: (g, 0, 0)),
            pl.BlockSpec((1, 4, H), lambda g: (g, 0, 0)),
        ),
        compiler_params=pltpu.CompilerParams(
            dimension_semantics=("parallel",), vmem_limit_bytes=VMEM_LIMIT),
    )(e4, n3, eU_w, eU_b.reshape(1, H))
    return e_tmp, x_tmp, stats.sum(axis=0)


# --------------------------------------------------------------------------------------
# BatchNorm-apply + ReLU + residual on a lane-dense folded view
# --------------------------------------------------------------------------------------
def bn_scale_shift(mean, var, gamma, beta, eps=1e-5):
    inv = jax.lax.rsqrt(var + eps)
    scale = gamma * inv
    shift = beta - mean * scale
    return scale, shift


def _bn_apply_kernel(y_ref, res_ref, scale_ref, shift_ref, o_ref):
    o_ref[...] = res_ref[...] + jnp.maximum(
        y_ref[...] * scale_ref[...] + shift_ref[...], 0.0)


def bn_relu_residual_apply(y, res, scale, shift, *, tm=ROW_TILE):
    """out = res + ReLU( y*scale + shift ), scale/shift precomputed from batch stats."""
    M, H = y.shape

    # Fold rows to get a 128-lane last dim when H < 128 (e.g. (M,32) -> (M/4,128)).
    fold = 1
    if H < 128 and 128 % H == 0:
        f = 128 // H
        if M % f == 0:
            fold = f
    Mf, Hf = M // fold, H * fold
    y_f = y.reshape(Mf, Hf)
    r_f = res.reshape(Mf, Hf)
    scale_f = jnp.tile(scale, fold).reshape(1, Hf)
    shift_f = jnp.tile(shift, fold).reshape(1, Hf)

    TM = min(Mf, tm)
    out = pl.pallas_call(
        _bn_apply_kernel,
        out_shape=jax.ShapeDtypeStruct((Mf, Hf), jnp.float32),
        grid=(pl.cdiv(Mf, TM),),
        in_specs=[
            pl.BlockSpec((TM, Hf), lambda i: (i, 0)),
            pl.BlockSpec((TM, Hf), lambda i: (i, 0)),
            pl.BlockSpec((1, Hf), lambda i: (0, 0)),
            pl.BlockSpec((1, Hf), lambda i: (0, 0)),
        ],
        out_specs=pl.BlockSpec((TM, Hf), lambda i: (i, 0)),
        compiler_params=pltpu.CompilerParams(
            dimension_semantics=("parallel",), vmem_limit_bytes=VMEM_LIMIT),
    )(y_f, r_f, scale_f, shift_f)
    return out.reshape(M, H)


# --------------------------------------------------------------------------------------
# Fused edge classifier: last-layer BN/ReLU/residual prologue + hidden ReLU layers + output
# --------------------------------------------------------------------------------------
def _make_mlp_bn_kernel(n_hidden):
    def kern(*refs):
        y_ref, res_ref, sc_ref, sh_ref = refs[0:4]
        o_ref = refs[-1]
        # Last-layer edge BN + ReLU + residual fused into the classifier prologue
        # (saves one (E,H) HBM round trip).
        h = res_ref[...] + jnp.maximum(y_ref[...] * sc_ref[...] + sh_ref[...], 0.0)
        idx = 4
        for _ in range(n_hidden):
            w = refs[idx][...]
            b = refs[idx + 1][...]
            idx += 2
            h = jnp.maximum(
                jnp.dot(h, w, preferred_element_type=jnp.float32) + b, 0.0)
        w = refs[idx][...]
        b = refs[idx + 1][...]
        o_ref[...] = jnp.dot(h, w, preferred_element_type=jnp.float32) + b
    return kern


def mlp_classifier(e_pre, e_res, scale, shift, hidden_wb, out_w, out_b, *, tm=ROW_TILE):
    M, H = e_pre.shape
    C = out_w.shape[1]
    TM = min(M, tm)
    n_hidden = len(hidden_wb)

    args = [e_pre, e_res, scale.reshape(1, H), shift.reshape(1, H)]
    in_specs = [pl.BlockSpec((TM, H), lambda i: (i, 0)),
                pl.BlockSpec((TM, H), lambda i: (i, 0)),
                pl.BlockSpec((1, H), lambda i: (0, 0)),
                pl.BlockSpec((1, H), lambda i: (0, 0))]
    for (w, b) in hidden_wb:
        args += [w, b.reshape(1, w.shape[1])]
        in_specs += [pl.BlockSpec(w.shape, lambda i: (0, 0)),
                     pl.BlockSpec((1, w.shape[1]), lambda i: (0, 0))]
    args += [out_w, out_b.reshape(1, C)]
    in_specs += [pl.BlockSpec(out_w.shape, lambda i: (0, 0)),
                 pl.BlockSpec((1, C), lambda i: (0, 0))]

    return pl.pallas_call(
        _make_mlp_bn_kernel(n_hidden),
        out_shape=jax.ShapeDtypeStruct((M, C), jnp.float32),
        grid=(pl.cdiv(M, TM),),
        in_specs=in_specs,
        out_specs=pl.BlockSpec((TM, C), lambda i: (i, 0)),
        compiler_params=pltpu.CompilerParams(
            dimension_semantics=("parallel",), vmem_limit_bytes=VMEM_LIMIT),
    )(*args)


# --------------------------------------------------------------------------------------
# Deterministic parameter initialization (synthetic, shapes match the PyTorch module)
# --------------------------------------------------------------------------------------
def init_params(key, *, hidden_dim=32, num_layers=2, mlp_layers=2,
                node_dim=2, voc_edges_in=3, voc_edges_out=2):
    def lin_init(k, fan_in, fan_out, bias=True):
        k1, k2 = jax.random.split(k)
        bound = 1.0 / math.sqrt(fan_in)
        w = jax.random.uniform(k1, (fan_in, fan_out), jnp.float32, -bound, bound)
        if bias:
            b = jax.random.uniform(k2, (fan_out,), jnp.float32, -bound, bound)
        else:
            b = jnp.zeros((fan_out,), jnp.float32)
        return w, b

    keyit = iter(jax.random.split(key, 8 + 8 * num_layers + 2 * mlp_layers))
    p = {}
    p["coord_w"], p["coord_b"] = lin_init(next(keyit), node_dim, hidden_dim, bias=False)
    p["eval_w"], p["eval_b"] = lin_init(next(keyit), 1, hidden_dim // 2, bias=False)
    p["edge_emb"] = jax.random.normal(next(keyit), (voc_edges_in, hidden_dim // 2), jnp.float32)

    layers = []
    for _ in range(num_layers):
        lp = {}
        lp["eU_w"], lp["eU_b"] = lin_init(next(keyit), hidden_dim, hidden_dim)
        lp["eV_w"], lp["eV_b"] = lin_init(next(keyit), hidden_dim, hidden_dim)
        lp["nU_w"], lp["nU_b"] = lin_init(next(keyit), hidden_dim, hidden_dim)
        lp["nV_w"], lp["nV_b"] = lin_init(next(keyit), hidden_dim, hidden_dim)
        lp["bn_e_g"] = jnp.ones((hidden_dim,), jnp.float32)
        lp["bn_e_b"] = jnp.zeros((hidden_dim,), jnp.float32)
        lp["bn_n_g"] = jnp.ones((hidden_dim,), jnp.float32)
        lp["bn_n_b"] = jnp.zeros((hidden_dim,), jnp.float32)
        layers.append(lp)
    p["layers"] = layers

    p["mlp_hidden"] = [lin_init(next(keyit), hidden_dim, hidden_dim) for _ in range(mlp_layers - 1)]
    p["mlp_out_w"], p["mlp_out_b"] = lin_init(next(keyit), hidden_dim, voc_edges_out)
    p["logit_noedge"] = jnp.zeros((1,), jnp.float32)   # nn.Parameter(torch.tensor([0.0]))
    return p


# --------------------------------------------------------------------------------------
# Forward pass (wrapper semantics + inner ResidualGatedGCN)
# --------------------------------------------------------------------------------------
def sparse_residual_gated_gcn_forward(params, x_edges, x_edges_values,
                                      x_nodes, x_nodes_coord,
                                      y_edges=None, edge_cw=None):
    B, N = x_nodes.shape
    H = params["coord_w"].shape[1]
    Hh = H // 2
    voc = params["edge_emb"].shape[0]
    E = B * N * N

    # ---- wrapper: torch.ones(B,N,N).nonzero() enumerates every (b,i,j) row-major, so the
    # sparse gather is a flatten (and the final scatter-back is a reshape).
    e_tag_sp = x_edges.reshape(E)               # == x_edges[edge_batch, edge_i, edge_j]
    e_val_sp = x_edges_values.reshape(E, 1)     # == x_edges_values[...] (unsqueezed)
    coord_sp = x_nodes_coord.reshape(B * N, x_nodes_coord.shape[-1])
    # x_nodes is gathered by the wrapper but unused by the inner ResidualGatedGCN model.

    # ---- input embeddings
    # node coord embedding: (B*N, node_dim) @ (node_dim, H)
    x = linear(coord_sp, params["coord_w"], params["coord_b"])        # (B*N, H)

    # edge embedding fused into ONE matmul:
    #   [value | one-hot(tag)] @ [[W_eval  0], [0  Emb]]  ==  concat([val@W_eval, Emb[tag]], -1)
    w_edge_in = jnp.zeros((1 + voc, H), jnp.float32)
    w_edge_in = w_edge_in.at[0, :Hh].set(params["eval_w"][0])
    w_edge_in = w_edge_in.at[1:, Hh:].set(params["edge_emb"])
    e_onehot = jax.nn.one_hot(e_tag_sp, voc, dtype=jnp.float32)       # (E, voc)
    e_in = jnp.concatenate([e_val_sp, e_onehot], axis=1)              # (E, 1+voc)
    e = linear(e_in, w_edge_in, jnp.zeros((H,), jnp.float32))         # (E, H)

    # ---- GCN layers: 4 pallas_calls per layer (3 for the last layer)
    num_layers = len(params["layers"])
    e_pre = e
    e_scale = jnp.ones((H,), jnp.float32)
    e_shift = jnp.zeros((H,), jnp.float32)
    for li, lp in enumerate(params["layers"]):
        last = (li == num_layers - 1)

        # one fused matmul for the 3 node linears: [Vx | Ux | NVx]
        w_cat = jnp.concatenate([lp["eV_w"], lp["nU_w"], lp["nV_w"]], axis=1)   # (H, 3H)
        b_cat = jnp.concatenate([lp["eV_b"], lp["nU_b"], lp["nV_b"]], axis=0)   # (3H,)
        ncat = linear(x, w_cat, b_cat)                                          # (B*N, 3H)

        # fused edge-linear + gating + mean aggregation + BN partial stats
        e_tmp, x_tmp, stats = gated_fused(e, ncat, lp["eU_w"], lp["eU_b"], B, N, H)

        # BN batch statistics (train mode, biased variance, eps=1e-5)
        e_mean = stats[0] / E
        e_var = jnp.maximum(stats[1] / E - e_mean * e_mean, 0.0)
        e_scale, e_shift = bn_scale_shift(e_mean, e_var, lp["bn_e_g"], lp["bn_e_b"])

        if not last:
            x_mean = stats[2] / (B * N)
            x_var = jnp.maximum(stats[3] / (B * N) - x_mean * x_mean, 0.0)
            x_scale, x_shift = bn_scale_shift(x_mean, x_var, lp["bn_n_g"], lp["bn_n_b"])

            # BN + ReLU + residual, lane-dense apply
            e_new = bn_relu_residual_apply(e_tmp.reshape(E, H), e, e_scale, e_shift)
            x = bn_relu_residual_apply(x_tmp.reshape(B * N, H), x, x_scale, x_shift)
            e = e_new
        else:
            # node features are dead after the last layer (classifier only reads edges);
            # defer the edge BN/ReLU/residual into the classifier prologue.
            e_pre = e_tmp.reshape(E, H)

    # ---- fused edge classifier MLP (with last-layer BN/ReLU/residual prologue)
    y_sparse = mlp_classifier(e_pre, e, e_scale, e_shift,
                              params["mlp_hidden"],
                              params["mlp_out_w"], params["mlp_out_b"])          # (E, C)
    C = y_sparse.shape[-1]

    # ---- wrapper scatter-back: the (edge_batch, edge_i, edge_j) enumeration is row-major over
    # every (b,i,j), so the scatter is exactly a reshape. The logit_noedge fill of the last class
    # is dead code in this fully-connected path (every entry is overwritten) and is dropped.
    y_dense = y_sparse.reshape(B, N, N, C)

    loss_dense = None
    return y_dense, loss_dense


# --------------------------------------------------------------------------------------
if __name__ == "__main__":
    B, N = 2, 8
    key = jax.random.PRNGKey(0)
    kp, kc = jax.random.split(key, 2)

    params = init_params(kp, hidden_dim=32, num_layers=2, mlp_layers=2)

    # Deterministic TSP-style inputs.
    x_nodes_coord = jax.random.uniform(kc, (B, N, 2), jnp.float32)                    # (B, N, 2)
    diff = x_nodes_coord[:, :, None, :] - x_nodes_coord[:, None, :, :]
    x_edges_values = jnp.sqrt(jnp.sum(diff * diff, axis=-1))                          # (B, N, N)
    eye = jnp.eye(N, dtype=jnp.int32)[None]
    x_edges = jnp.broadcast_to(jnp.where(eye == 1, 2, 1), (B, N, N)).astype(jnp.int32)  # (B, N, N)
    x_nodes = jnp.zeros((B, N), jnp.int32)                                            # (B, N)

    fwd = jax.jit(sparse_residual_gated_gcn_forward)
    y_preds_dense, loss_dense = fwd(params, x_edges, x_edges_values, x_nodes, x_nodes_coord)
    y_preds_dense = jax.block_until_ready(y_preds_dense)

    assert y_preds_dense.shape == (B, N, N, 2)
    assert bool(jnp.all(jnp.isfinite(y_preds_dense)))
    assert loss_dense is None
    print("KERNEL_OK")
</pallas_src>

<mosaic_0001>
module attributes {stable_mosaic.version = 11 : i64} {
  func.func @_linear_kernel(%arg0: i32, %arg1: memref<128x8xf32, #tpu.memory_space<vmem>>, %arg2: memref<8x32xf32, #tpu.memory_space<vmem>>, %arg3: memref<1x32xf32, #tpu.memory_space<vmem>>, %arg4: memref<128x32xf32, #tpu.memory_space<vmem>>) attributes {dimension_semantics = [#tpu.dimension_semantics<parallel>], iteration_bounds = array<i64: 1>, scalar_prefetch = 0 : i64, scratch_operands = 0 : i64, tpu.core_type = #tpu.core_type<tc>, window_params = [{transform_indices = @transform_0, window_bounds = array<i64: 128, 8>}, {pipeline_mode = #tpu.pipeline_mode<synchronous>, transform_indices = @transform_1, window_bounds = array<i64: 8, 32>}, {pipeline_mode = #tpu.pipeline_mode<synchronous>, transform_indices = @transform_2, window_bounds = array<i64: 1, 32>}, {transform_indices = @transform_3, window_bounds = array<i64: 128, 32>}]} {
    %c0 = arith.constant 0 : index
    %c0_0 = arith.constant 0 : index
    %0 = vector.load %arg1[%c0, %c0_0] : memref<128x8xf32, #tpu.memory_space<vmem>>, vector<128x8xf32>
    %c0_1 = arith.constant 0 : index
    %c0_2 = arith.constant 0 : index
    %1 = vector.load %arg2[%c0_1, %c0_2] : memref<8x32xf32, #tpu.memory_space<vmem>>, vector<8x32xf32>
    %cst = arith.constant dense<0.000000e+00> : vector<128x32xf32>
    %2 = tpu.matmul %0, %1, %cst {dimension_numbers = #tpu.dot_dimension_numbers<[1], [0], [0], [1], [0, 0, 1, 1], [], []>} : vector<128x8xf32>, vector<8x32xf32>, vector<128x32xf32> -> vector<128x32xf32>
    %c0_3 = arith.constant 0 : index
    %c0_4 = arith.constant 0 : index
    %3 = vector.load %arg3[%c0_3, %c0_4] : memref<1x32xf32, #tpu.memory_space<vmem>>, vector<1x32xf32>
    %4 = vector.broadcast %3 : vector<1x32xf32> to vector<128x32xf32>
    %5 = arith.addf %2, %4 : vector<128x32xf32>
    %c0_5 = arith.constant 0 : index
    %c0_6 = arith.constant 0 : index
    %6 = vector.load %arg4[%c0_5, %c0_6] : memref<128x32xf32, #tpu.memory_space<vmem>>, vector<128x32xf32>
    tpu.vector_store %arg4[%c0_5, %c0_6], %5 {strides = array<i32>} : memref<128x32xf32, #tpu.memory_space<vmem>>, vector<128x32xf32>,
    return
  }
  func.func @transform_0(%arg0: i32) -> (i32, i32) {
    %c0_i32 = arith.constant 0 : i32
    %c0_i32_0 = arith.constant 0 : i32
    return %arg0, %c0_i32 : i32, i32
  }
  func.func @transform_1(%arg0: i32) -> (i32, i32) {
    %c0_i32 = arith.constant 0 : i32
    %c0_i32_0 = arith.constant 0 : i32
    %c0_i32_1 = arith.constant 0 : i32
    return %c0_i32, %c0_i32_0 : i32, i32
  }
  func.func @transform_2(%arg0: i32) -> (i32, i32) {
    %c0_i32 = arith.constant 0 : i32
    %c0_i32_0 = arith.constant 0 : i32
    %c0_i32_1 = arith.constant 0 : i32
    return %c0_i32, %c0_i32_0 : i32, i32
  }
  func.func @transform_3(%arg0: i32) -> (i32, i32) {
    %c0_i32 = arith.constant 0 : i32
    %c0_i32_0 = arith.constant 0 : i32
    return %arg0, %c0_i32 : i32, i32
  }
}

module attributes {stable_mosaic.version = 11 : i64} {
  func.func @_linear_kernel(%arg0: i32, %arg1: memref<16x8xf32, #tpu.memory_space<vmem>>, %arg2: memref<8x32xf32, #tpu.memory_space<vmem>>, %arg3: memref<1x32xf32, #tpu.memory_space<vmem>>, %arg4: memref<16x32xf32, #tpu.memory_space<vmem>>) attributes {dimension_semantics = [#tpu.dimension_semantics<parallel>], iteration_bounds = array<i64: 1>, scalar_prefetch = 0 : i64, scratch_operands = 0 : i64, tpu.core_type = #tpu.core_type<tc>, window_params = [{transform_indices = @transform_0, window_bounds = array<i64: 16, 8>}, {pipeline_mode = #tpu.pipeline_mode<synchronous>, transform_indices = @transform_1, window_bounds = array<i64: 8, 32>}, {pipeline_mode = #tpu.pipeline_mode<synchronous>, transform_indices = @transform_2, window_bounds = array<i64: 1, 32>}, {transform_indices = @transform_3, window_bounds = array<i64: 16, 32>}]} {
    %c0 = arith.constant 0 : index
    %c0_0 = arith.constant 0 : index
    %0 = vector.load %arg1[%c0, %c0_0] : memref<16x8xf32, #tpu.memory_space<vmem>>, vector<16x8xf32>
    %c0_1 = arith.constant 0 : index
    %c0_2 = arith.constant 0 : index
    %1 = vector.load %arg2[%c0_1, %c0_2] : memref<8x32xf32, #tpu.memory_space<vmem>>, vector<8x32xf32>
    %cst = arith.constant dense<0.000000e+00> : vector<16x32xf32>
    %2 = tpu.matmul %0, %1, %cst {dimension_numbers = #tpu.dot_dimension_numbers<[1], [0], [0], [1], [0, 0, 1, 1], [], []>} : vector<16x8xf32>, vector<8x32xf32>, vector<16x32xf32> -> vector<16x32xf32>
    %c0_3 = arith.constant 0 : index
    %c0_4 = arith.constant 0 : index
    %3 = vector.load %arg3[%c0_3, %c0_4] : memref<1x32xf32, #tpu.memory_space<vmem>>, vector<1x32xf32>
    %4 = vector.broadcast %3 : vector<1x32xf32> to vector<16x32xf32>
    %5 = arith.addf %2, %4 : vector<16x32xf32>
    %c0_5 = arith.constant 0 : index
    %c0_6 = arith.constant 0 : index
    %6 = vector.load %arg4[%c0_5, %c0_6] : memref<16x32xf32, #tpu.memory_space<vmem>>, vector<16x32xf32>
    tpu.vector_store %arg4[%c0_5, %c0_6], %5 {strides = array<i32>} : memref<16x32xf32, #tpu.memory_space<vmem>>, vector<16x32xf32>,
    return
  }
  func.func @transform_0(%arg0: i32) -> (i32, i32) {
    %c0_i32 = arith.constant 0 : i32
    %c0_i32_0 = arith.constant 0 : i32
    return %arg0, %c0_i32 : i32, i32
  }
  func.func @transform_1(%arg0: i32) -> (i32, i32) {
    %c0_i32 = arith.constant 0 : i32
    %c0_i32_0 = arith.constant 0 : i32
    %c0_i32_1 = arith.constant 0 : i32
    return %c0_i32, %c0_i32_0 : i32, i32
  }
  func.func @transform_2(%arg0: i32) -> (i32, i32) {
    %c0_i32 = arith.constant 0 : i32
    %c0_i32_0 = arith.constant 0 : i32
    %c0_i32_1 = arith.constant 0 : i32
    return %c0_i32, %c0_i32_0 : i32, i32
  }
  func.func @transform_3(%arg0: i32) -> (i32, i32) {
    %c0_i32 = arith.constant 0 : i32
    %c0_i32_0 = arith.constant 0 : i32
    return %arg0, %c0_i32 : i32, i32
  }
}

module attributes {stable_mosaic.version = 11 : i64} {
  func.func @_linear_kernel(%arg0: i32, %arg1: memref<16x32xf32, #tpu.memory_space<vmem>>, %arg2: memref<32x96xf32, #tpu.memory_space<vmem>>, %arg3: memref<1x96xf32, #tpu.memory_space<vmem>>, %arg4: memref<16x96xf32, #tpu.memory_space<vmem>>) attributes {dimension_semantics = [#tpu.dimension_semantics<parallel>], iteration_bounds = array<i64: 1>, scalar_prefetch = 0 : i64, scratch_operands = 0 : i64, tpu.core_type = #tpu.core_type<tc>, window_params = [{transform_indices = @transform_0, window_bounds = array<i64: 16, 32>}, {pipeline_mode = #tpu.pipeline_mode<synchronous>, transform_indices = @transform_1, window_bounds = array<i64: 32, 96>}, {pipeline_mode = #tpu.pipeline_mode<synchronous>, transform_indices = @transform_2, window_bounds = array<i64: 1, 96>}, {transform_indices = @transform_3, window_bounds = array<i64: 16, 96>}]} {
    %c0 = arith.constant 0 : index
    %c0_0 = arith.constant 0 : index
    %0 = vector.load %arg1[%c0, %c0_0] : memref<16x32xf32, #tpu.memory_space<vmem>>, vector<16x32xf32>
    %c0_1 = arith.constant 0 : index
    %c0_2 = arith.constant 0 : index
    %1 = vector.load %arg2[%c0_1, %c0_2] : memref<32x96xf32, #tpu.memory_space<vmem>>, vector<32x96xf32>
    %cst = arith.constant dense<0.000000e+00> : vector<16x96xf32>
    %2 = tpu.matmul %0, %1, %cst {dimension_numbers = #tpu.dot_dimension_numbers<[1], [0], [0], [1], [0, 0, 1, 1], [], []>} : vector<16x32xf32>, vector<32x96xf32>, vector<16x96xf32> -> vector<16x96xf32>
    %c0_3 = arith.constant 0 : index
    %c0_4 = arith.constant 0 : index
    %3 = vector.load %arg3[%c0_3, %c0_4] : memref<1x96xf32, #tpu.memory_space<vmem>>, vector<1x96xf32>
    %4 = vector.broadcast %3 : vector<1x96xf32> to vector<16x96xf32>
    %5 = arith.addf %2, %4 : vector<16x96xf32>
    %c0_5 = arith.constant 0 : index
    %c0_6 = arith.constant 0 : index
    %6 = vector.load %arg4[%c0_5, %c0_6] : memref<16x96xf32, #tpu.memory_space<vmem>>, vector<16x96xf32>
    tpu.vector_store %arg4[%c0_5, %c0_6], %5 {strides = array<i32>} : memref<16x96xf32, #tpu.memory_space<vmem>>, vector<16x96xf32>,
    return
  }
  func.func @transform_0(%arg0: i32) -> (i32, i32) {
    %c0_i32 = arith.constant 0 : i32
    %c0_i32_0 = arith.constant 0 : i32
    return %arg0, %c0_i32 : i32, i32
  }
  func.func @transform_1(%arg0: i32) -> (i32, i32) {
    %c0_i32 = arith.constant 0 : i32
    %c0_i32_0 = arith.constant 0 : i32
    %c0_i32_1 = arith.constant 0 : i32
    return %c0_i32, %c0_i32_0 : i32, i32
  }
  func.func @transform_2(%arg0: i32) -> (i32, i32) {
    %c0_i32 = arith.constant 0 : i32
    %c0_i32_0 = arith.constant 0 : i32
    %c0_i32_1 = arith.constant 0 : i32
    return %c0_i32, %c0_i32_0 : i32, i32
  }
  func.func @transform_3(%arg0: i32) -> (i32, i32) {
    %c0_i32 = arith.constant 0 : i32
    %c0_i32_0 = arith.constant 0 : i32
    return %arg0, %c0_i32 : i32, i32
  }
}

module attributes {stable_mosaic.version = 11 : i64} {
  func.func @_gated_fused_kernel(%arg0: i32, %arg1: memref<2x8x8x32xf32, #tpu.memory_space<vmem>>, %arg2: memref<2x8x96xf32, #tpu.memory_space<vmem>>, %arg3: memref<32x32xf32, #tpu.memory_space<vmem>>, %arg4: memref<1x32xf32, #tpu.memory_space<vmem>>, %arg5: memref<2x8x8x32xf32, #tpu.memory_space<vmem>>, %arg6: memref<2x8x32xf32, #tpu.memory_space<vmem>>, %arg7: memref<1x4x32xf32, #tpu.memory_space<vmem>>) attributes {dimension_semantics = [#tpu.dimension_semantics<parallel>], iteration_bounds = array<i64: 1>, scalar_prefetch = 0 : i64, scratch_operands = 0 : i64, tpu.core_type = #tpu.core_type<tc>, window_params = [{transform_indices = @transform_0, window_bounds = array<i64: 2, 8, 8, 32>}, {transform_indices = @transform_1, window_bounds = array<i64: 2, 8, 96>}, {pipeline_mode = #tpu.pipeline_mode<synchronous>, transform_indices = @transform_2, window_bounds = array<i64: 32, 32>}, {pipeline_mode = #tpu.pipeline_mode<synchronous>, transform_indices = @transform_3, window_bounds = array<i64: 1, 32>}, {transform_indices = @transform_4, window_bounds = array<i64: 2, 8, 8, 32>}, {transform_indices = @transform_5, window_bounds = array<i64: 2, 8, 32>}, {transform_indices = @transform_6, window_bounds = array<i64: 1, 4, 32>}]} {
    %c0 = arith.constant 0 : index
    %c0_0 = arith.constant 0 : index
    %c0_1 = arith.constant 0 : index
    %c0_2 = arith.constant 0 : index
    %0 = vector.load %arg1[%c0, %c0_0, %c0_1, %c0_2] : memref<2x8x8x32xf32, #tpu.memory_space<vmem>>, vector<2x8x8x32xf32>
    %c0_3 = arith.constant 0 : index
    %c0_4 = arith.constant 0 : index
    %c0_5 = arith.constant 0 : index
    %1 = vector.load %arg2[%c0_3, %c0_4, %c0_5] : memref<2x8x96xf32, #tpu.memory_space<vmem>>, vector<2x8x96xf32>
    %2 = vector.extract_strided_slice %1 {offsets = [0, 0, 0], sizes = [2, 8, 32], strides = [1, 1, 1]} : vector<2x8x96xf32> to vector<2x8x32xf32>
    %3 = vector.extract_strided_slice %1 {offsets = [0, 0, 32], sizes = [2, 8, 32], strides = [1, 1, 1]} : vector<2x8x96xf32> to vector<2x8x32xf32>
    %4 = vector.extract_strided_slice %1 {offsets = [0, 0, 64], sizes = [2, 8, 32], strides = [1, 1, 1]} : vector<2x8x96xf32> to vector<2x8x32xf32>
    %5 = vector.shape_cast %0 : vector<2x8x8x32xf32> to vector<128x32xf32>
    %c0_6 = arith.constant 0 : index
    %c0_7 = arith.constant 0 : index
    %6 = vector.load %arg3[%c0_6, %c0_7] : memref<32x32xf32, #tpu.memory_space<vmem>>, vector<32x32xf32>
    %cst = arith.constant dense<0.000000e+00> : vector<128x32xf32>
    %7 = tpu.matmul %5, %6, %cst {dimension_numbers = #tpu.dot_dimension_numbers<[1], [0], [0], [1], [0, 0, 1, 1], [], []>} : vector<128x32xf32>, vector<32x32xf32>, vector<128x32xf32> -> vector<128x32xf32>
    %c0_8 = arith.constant 0 : index
    %c0_9 = arith.constant 0 : index
    %8 = vector.load %arg4[%c0_8, %c0_9] : memref<1x32xf32, #tpu.memory_space<vmem>>, vector<1x32xf32>
    %9 = vector.broadcast %8 : vector<1x32xf32> to vector<128x32xf32>
    %10 = arith.addf %7, %9 : vector<128x32xf32>
    %11 = vector.shape_cast %10 : vector<128x32xf32> to vector<2x8x8x32xf32>
    %12 = vector.shape_cast %2 : vector<2x8x32xf32> to vector<2x8x1x32xf32>
    %13 = vector.broadcast %12 : vector<2x8x1x32xf32> to vector<2x8x8x32xf32>
    %14 = arith.addf %11, %13 : vector<2x8x8x32xf32>
    %15 = vector.shape_cast %2 : vector<2x8x32xf32> to vector<2x1x8x32xf32>
    %16 = vector.broadcast %15 : vector<2x1x8x32xf32> to vector<2x8x8x32xf32>
    %17 = arith.addf %14, %16 : vector<2x8x8x32xf32>
    %18 = arith.negf %17 : vector<2x8x8x32xf32>
    %19 = math.exp %18 : vector<2x8x8x32xf32>
    %cst_10 = arith.constant 1.000000e+00 : f32
    %20 = vector.broadcast %cst_10 : f32 to vector<2x8x8x32xf32>
    %21 = arith.addf %20, %19 : vector<2x8x8x32xf32>
    %22 = arith.divf %20, %21 : vector<2x8x8x32xf32>
    %23 = vector.shape_cast %4 : vector<2x8x32xf32> to vector<2x1x8x32xf32>
    %24 = vector.broadcast %23 : vector<2x1x8x32xf32> to vector<2x8x8x32xf32>
    %25 = arith.mulf %22, %24 : vector<2x8x8x32xf32>
    %cst_11 = arith.constant dense<0.000000e+00> : vector<2x8x32xf32>
    %26 = vector.multi_reduction <add>, %25, %cst_11 [2] : vector<2x8x8x32xf32> to vector<2x8x32xf32>
    %cst_12 = arith.constant dense<0.000000e+00> : vector<2x8x32xf32>
    %27 = vector.multi_reduction <add>, %22, %cst_12 [2] : vector<2x8x8x32xf32> to vector<2x8x32xf32>
    %cst_13 = arith.constant 9.99999968E-21 : f32
    %28 = vector.broadcast %cst_13 : f32 to vector<2x8x32xf32>
    %29 = arith.addf %27, %28 : vector<2x8x32xf32>
    %30 = tpu.reciprocal %29 {approx = true} : vector<2x8x32xf32> -> vector<2x8x32xf32>
    %31 = arith.mulf %26, %30 : vector<2x8x32xf32>
    %32 = arith.addf %3, %31 : vector<2x8x32xf32>
    %c0_14 = arith.constant 0 : index
    %c0_15 = arith.constant 0 : index
    %c0_16 = arith.constant 0 : index
    %c0_17 = arith.constant 0 : index
    %33 = vector.load %arg5[%c0_14, %c0_15, %c0_16, %c0_17] : memref<2x8x8x32xf32, #tpu.memory_space<vmem>>, vector<2x8x8x32xf32>
    tpu.vector_store %arg5[%c0_14, %c0_15, %c0_16, %c0_17], %17 {strides = array<i32>} : memref<2x8x8x32xf32, #tpu.memory_space<vmem>>, vector<2x8x8x32xf32>,
    %c0_18 = arith.constant 0 : index
    %c0_19 = arith.constant 0 : index
    %c0_20 = arith.constant 0 : index
    %34 = vector.load %arg6[%c0_18, %c0_19, %c0_20] : memref<2x8x32xf32, #tpu.memory_space<vmem>>, vector<2x8x32xf32>
    tpu.vector_store %arg6[%c0_18, %c0_19, %c0_20], %32 {strides = array<i32>} : memref<2x8x32xf32, #tpu.memory_space<vmem>>, vector<2x8x32xf32>,
    %35 = vector.shape_cast %17 : vector<2x8x8x32xf32> to vector<128x32xf32>
    %36 = vector.shape_cast %32 : vector<2x8x32xf32> to vector<16x32xf32>
    %cst_21 = arith.constant dense<0.000000e+00> : vector<32xf32>
    %37 = vector.multi_reduction <add>, %35, %cst_21 [0] : vector<128x32xf32> to vector<32xf32>
    %38 = vector.shape_cast %37 : vector<32xf32> to vector<1x32xf32>
    %39 = arith.mulf %35, %35 : vector<128x32xf32>
    %cst_22 = arith.constant dense<0.000000e+00> : vector<32xf32>
    %40 = vector.multi_reduction <add>, %39, %cst_22 [0] : vector<128x32xf32> to vector<32xf32>
    %41 = vector.shape_cast %40 : vector<32xf32> to vector<1x32xf32>
    %cst_23 = arith.constant dense<0.000000e+00> : vector<32xf32>
    %42 = vector.multi_reduction <add>, %36, %cst_23 [0] : vector<16x32xf32> to vector<32xf32>
    %43 = vector.shape_cast %42 : vector<32xf32> to vector<1x32xf32>
    %44 = arith.mulf %36, %36 : vector<16x32xf32>
    %cst_24 = arith.constant dense<0.000000e+00> : vector<32xf32>
    %45 = vector.multi_reduction <add>, %44, %cst_24 [0] : vector<16x32xf32> to vector<32xf32>
    %46 = vector.shape_cast %45 : vector<32xf32> to vector<1x32xf32>
    %47 = tpu.concatenate %38, %41, %43, %46 in 0 : vector<1x32xf32>, vector<1x32xf32>, vector<1x32xf32>, vector<1x32xf32> -> vector<4x32xf32>
    %48 = vector.shape_cast %47 : vector<4x32xf32> to vector<1x4x32xf32>
    %c0_25 = arith.constant 0 : index
    %c0_26 = arith.constant 0 : index
    %c0_27 = arith.constant 0 : index
    %49 = vector.load %arg7[%c0_25, %c0_26, %c0_27] : memref<1x4x32xf32, #tpu.memory_space<vmem>>, vector<1x4x32xf32>
    tpu.vector_store %arg7[%c0_25, %c0_26, %c0_27], %48 {strides = array<i32>} : memref<1x4x32xf32, #tpu.memory_space<vmem>>, vector<1x4x32xf32>,
    return
  }
  func.func @transform_0(%arg0: i32) -> (i32, i32, i32, i32) {
    %c0_i32 = arith.constant 0 : i32
    %c0_i32_0 = arith.constant 0 : i32
    %c0_i32_1 = arith.constant 0 : i32
    %c0_i32_2 = arith.constant 0 : i32
    return %arg0, %c0_i32, %c0_i32_0, %c0_i32_1 : i32, i32, i32, i32
  }
  func.func @transform_1(%arg0: i32) -> (i32, i32, i32) {
    %c0_i32 = arith.constant 0 : i32
    %c0_i32_0 = arith.constant 0 : i32
    %c0_i32_1 = arith.constant 0 : i32
    return %arg0, %c0_i32, %c0_i32_0 : i32, i32, i32
  }
  func.func @transform_2(%arg0: i32) -> (i32, i32) {
    %c0_i32 = arith.constant 0 : i32
    %c0_i32_0 = arith.constant 0 : i32
    %c0_i32_1 = arith.constant 0 : i32
    return %c0_i32, %c0_i32_0 : i32, i32
  }
  func.func @transform_3(%arg0: i32) -> (i32, i32) {
    %c0_i32 = arith.constant 0 : i32
    %c0_i32_0 = arith.constant 0 : i32
    %c0_i32_1 = arith.constant 0 : i32
    return %c0_i32, %c0_i32_0 : i32, i32
  }
  func.func @transform_4(%arg0: i32) -> (i32, i32, i32, i32) {
    %c0_i32 = arith.constant 0 : i32
    %c0_i32_0 = arith.constant 0 : i32
    %c0_i32_1 = arith.constant 0 : i32
    %c0_i32_2 = arith.constant 0 : i32
    return %arg0, %c0_i32, %c0_i32_0, %c0_i32_1 : i32, i32, i32, i32
  }
  func.func @transform_5(%arg0: i32) -> (i32, i32, i32) {
    %c0_i32 = arith.constant 0 : i32
    %c0_i32_0 = arith.constant 0 : i32
    %c0_i32_1 = arith.constant 0 : i32
    return %arg0, %c0_i32, %c0_i32_0 : i32, i32, i32
  }
  func.func @transform_6(%arg0: i32) -> (i32, i32, i32) {
    %c0_i32 = arith.constant 0 : i32
    %c0_i32_0 = arith.constant 0 : i32
    %c0_i32_1 = arith.constant 0 : i32
    return %arg0, %c0_i32, %c0_i32_0 : i32, i32, i32
  }
}

module attributes {stable_mosaic.version = 11 : i64} {
  func.func @_bn_apply_kernel(%arg0: i32, %arg1: memref<32x128xf32, #tpu.memory_space<vmem>>, %arg2: memref<32x128xf32, #tpu.memory_space<vmem>>, %arg3: memref<1x128xf32, #tpu.memory_space<vmem>>, %arg4: memref<1x128xf32, #tpu.memory_space<vmem>>, %arg5: memref<32x128xf32, #tpu.memory_space<vmem>>) attributes {dimension_semantics = [#tpu.dimension_semantics<parallel>], iteration_bounds = array<i64: 1>, scalar_prefetch = 0 : i64, scratch_operands = 0 : i64, tpu.core_type = #tpu.core_type<tc>, window_params = [{transform_indices = @transform_0, window_bounds = array<i64: 32, 128>}, {transform_indices = @transform_1, window_bounds = array<i64: 32, 128>}, {pipeline_mode = #tpu.pipeline_mode<synchronous>, transform_indices = @transform_2, window_bounds = array<i64: 1, 128>}, {pipeline_mode = #tpu.pipeline_mode<synchronous>, transform_indices = @transform_3, window_bounds = array<i64: 1, 128>}, {transform_indices = @transform_4, window_bounds = array<i64: 32, 128>}]} {
    %c0 = arith.constant 0 : index
    %c0_0 = arith.constant 0 : index
    %0 = vector.load %arg2[%c0, %c0_0] : memref<32x128xf32, #tpu.memory_space<vmem>>, vector<32x128xf32>
    %c0_1 = arith.constant 0 : index
    %c0_2 = arith.constant 0 : index
    %1 = vector.load %arg1[%c0_1, %c0_2] : memref<32x128xf32, #tpu.memory_space<vmem>>, vector<32x128xf32>
    %c0_3 = arith.constant 0 : index
    %c0_4 = arith.constant 0 : index
    %2 = vector.load %arg3[%c0_3, %c0_4] : memref<1x128xf32, #tpu.memory_space<vmem>>, vector<1x128xf32>
    %3 = vector.broadcast %2 : vector<1x128xf32> to vector<32x128xf32>
    %4 = arith.mulf %1, %3 : vector<32x128xf32>
    %c0_5 = arith.constant 0 : index
    %c0_6 = arith.constant 0 : index
    %5 = vector.load %arg4[%c0_5, %c0_6] : memref<1x128xf32, #tpu.memory_space<vmem>>, vector<1x128xf32>
    %6 = vector.broadcast %5 : vector<1x128xf32> to vector<32x128xf32>
    %7 = arith.addf %4, %6 : vector<32x128xf32>
    %cst = arith.constant 0.000000e+00 : f32
    %8 = vector.broadcast %cst : f32 to vector<32x128xf32>
    %9 = arith.maximumf %7, %8 : vector<32x128xf32>
    %10 = arith.addf %0, %9 : vector<32x128xf32>
    %c0_7 = arith.constant 0 : index
    %c0_8 = arith.constant 0 : index
    %11 = vector.load %arg5[%c0_7, %c0_8] : memref<32x128xf32, #tpu.memory_space<vmem>>, vector<32x128xf32>
    tpu.vector_store %arg5[%c0_7, %c0_8], %10 {strides = array<i32>} : memref<32x128xf32, #tpu.memory_space<vmem>>, vector<32x128xf32>,
    return
  }
  func.func @transform_0(%arg0: i32) -> (i32, i32) {
    %c0_i32 = arith.constant 0 : i32
    %c0_i32_0 = arith.constant 0 : i32
    return %arg0, %c0_i32 : i32, i32
  }
  func.func @transform_1(%arg0: i32) -> (i32, i32) {
    %c0_i32 = arith.constant 0 : i32
    %c0_i32_0 = arith.constant 0 : i32
    return %arg0, %c0_i32 : i32, i32
  }
  func.func @transform_2(%arg0: i32) -> (i32, i32) {
    %c0_i32 = arith.constant 0 : i32
    %c0_i32_0 = arith.constant 0 : i32
    %c0_i32_1 = arith.constant 0 : i32
    return %c0_i32, %c0_i32_0 : i32, i32
  }
  func.func @transform_3(%arg0: i32) -> (i32, i32) {
    %c0_i32 = arith.constant 0 : i32
    %c0_i32_0 = arith.constant 0 : i32
    %c0_i32_1 = arith.constant 0 : i32
    return %c0_i32, %c0_i32_0 : i32, i32
  }
  func.func @transform_4(%arg0: i32) -> (i32, i32) {
    %c0_i32 = arith.constant 0 : i32
    %c0_i32_0 = arith.constant 0 : i32
    return %arg0, %c0_i32 : i32, i32
  }
}

module attributes {stable_mosaic.version = 11 : i64} {
  func.func @_bn_apply_kernel(%arg0: i32, %arg1: memref<4x128xf32, #tpu.memory_space<vmem>>, %arg2: memref<4x128xf32, #tpu.memory_space<vmem>>, %arg3: memref<1x128xf32, #tpu.memory_space<vmem>>, %arg4: memref<1x128xf32, #tpu.memory_space<vmem>>, %arg5: memref<4x128xf32, #tpu.memory_space<vmem>>) attributes {dimension_semantics = [#tpu.dimension_semantics<parallel>], iteration_bounds = array<i64: 1>, scalar_prefetch = 0 : i64, scratch_operands = 0 : i64, tpu.core_type = #tpu.core_type<tc>, window_params = [{transform_indices = @transform_0, window_bounds = array<i64: 4, 128>}, {transform_indices = @transform_1, window_bounds = array<i64: 4, 128>}, {pipeline_mode = #tpu.pipeline_mode<synchronous>, transform_indices = @transform_2, window_bounds = array<i64: 1, 128>}, {pipeline_mode = #tpu.pipeline_mode<synchronous>, transform_indices = @transform_3, window_bounds = array<i64: 1, 128>}, {transform_indices = @transform_4, window_bounds = array<i64: 4, 128>}]} {
    %c0 = arith.constant 0 : index
    %c0_0 = arith.constant 0 : index
    %0 = vector.load %arg2[%c0, %c0_0] : memref<4x128xf32, #tpu.memory_space<vmem>>, vector<4x128xf32>
    %c0_1 = arith.constant 0 : index
    %c0_2 = arith.constant 0 : index
    %1 = vector.load %arg1[%c0_1, %c0_2] : memref<4x128xf32, #tpu.memory_space<vmem>>, vector<4x128xf32>
    %c0_3 = arith.constant 0 : index
    %c0_4 = arith.constant 0 : index
    %2 = vector.load %arg3[%c0_3, %c0_4] : memref<1x128xf32, #tpu.memory_space<vmem>>, vector<1x128xf32>
    %3 = vector.broadcast %2 : vector<1x128xf32> to vector<4x128xf32>
    %4 = arith.mulf %1, %3 : vector<4x128xf32>
    %c0_5 = arith.constant 0 : index
    %c0_6 = arith.constant 0 : index
    %5 = vector.load %arg4[%c0_5, %c0_6] : memref<1x128xf32, #tpu.memory_space<vmem>>, vector<1x128xf32>
    %6 = vector.broadcast %5 : vector<1x128xf32> to vector<4x128xf32>
    %7 = arith.addf %4, %6 : vector<4x128xf32>
    %cst = arith.constant 0.000000e+00 : f32
    %8 = vector.broadcast %cst : f32 to vector<4x128xf32>
    %9 = arith.maximumf %7, %8 : vector<4x128xf32>
    %10 = arith.addf %0, %9 : vector<4x128xf32>
    %c0_7 = arith.constant 0 : index
    %c0_8 = arith.constant 0 : index
    %11 = vector.load %arg5[%c0_7, %c0_8] : memref<4x128xf32, #tpu.memory_space<vmem>>, vector<4x128xf32>
    tpu.vector_store %arg5[%c0_7, %c0_8], %10 {strides = array<i32>} : memref<4x128xf32, #tpu.memory_space<vmem>>, vector<4x128xf32>,
    return
  }
  func.func @transform_0(%arg0: i32) -> (i32, i32) {
    %c0_i32 = arith.constant 0 : i32
    %c0_i32_0 = arith.constant 0 : i32
    return %arg0, %c0_i32 : i32, i32
  }
  func.func @transform_1(%arg0: i32) -> (i32, i32) {
    %c0_i32 = arith.constant 0 : i32
    %c0_i32_0 = arith.constant 0 : i32
    return %arg0, %c0_i32 : i32, i32
  }
  func.func @transform_2(%arg0: i32) -> (i32, i32) {
    %c0_i32 = arith.constant 0 : i32
    %c0_i32_0 = arith.constant 0 : i32
    %c0_i32_1 = arith.constant 0 : i32
    return %c0_i32, %c0_i32_0 : i32, i32
  }
  func.func @transform_3(%arg0: i32) -> (i32, i32) {
    %c0_i32 = arith.constant 0 : i32
    %c0_i32_0 = arith.constant 0 : i32
    %c0_i32_1 = arith.constant 0 : i32
    return %c0_i32, %c0_i32_0 : i32, i32
  }
  func.func @transform_4(%arg0: i32) -> (i32, i32) {
    %c0_i32 = arith.constant 0 : i32
    %c0_i32_0 = arith.constant 0 : i32
    return %arg0, %c0_i32 : i32, i32
  }
}

module attributes {stable_mosaic.version = 11 : i64} {
  func.func @_gated_fused_kernel(%arg0: i32, %arg1: memref<2x8x8x32xf32, #tpu.memory_space<vmem>>, %arg2: memref<2x8x96xf32, #tpu.memory_space<vmem>>, %arg3: memref<32x32xf32, #tpu.memory_space<vmem>>, %arg4: memref<1x32xf32, #tpu.memory_space<vmem>>, %arg5: memref<2x8x8x32xf32, #tpu.memory_space<vmem>>, %arg6: memref<2x8x32xf32, #tpu.memory_space<vmem>>, %arg7: memref<1x4x32xf32, #tpu.memory_space<vmem>>) attributes {dimension_semantics = [#tpu.dimension_semantics<parallel>], iteration_bounds = array<i64: 1>, scalar_prefetch = 0 : i64, scratch_operands = 0 : i64, tpu.core_type = #tpu.core_type<tc>, window_params = [{transform_indices = @transform_0, window_bounds = array<i64: 2, 8, 8, 32>}, {transform_indices = @transform_1, window_bounds = array<i64: 2, 8, 96>}, {pipeline_mode = #tpu.pipeline_mode<synchronous>, transform_indices = @transform_2, window_bounds = array<i64: 32, 32>}, {pipeline_mode = #tpu.pipeline_mode<synchronous>, transform_indices = @transform_3, window_bounds = array<i64: 1, 32>}, {transform_indices = @transform_4, window_bounds = array<i64: 2, 8, 8, 32>}, {transform_indices = @transform_5, window_bounds = array<i64: 2, 8, 32>}, {transform_indices = @transform_6, window_bounds = array<i64: 1, 4, 32>}]} {
    %c0 = arith.constant 0 : index
    %c0_0 = arith.constant 0 : index
    %c0_1 = arith.constant 0 : index
    %c0_2 = arith.constant 0 : index
    %0 = vector.load %arg1[%c0, %c0_0, %c0_1, %c0_2] : memref<2x8x8x32xf32, #tpu.memory_space<vmem>>, vector<2x8x8x32xf32>
    %c0_3 = arith.constant 0 : index
    %c0_4 = arith.constant 0 : index
    %c0_5 = arith.constant 0 : index
    %1 = vector.load %arg2[%c0_3, %c0_4, %c0_5] : memref<2x8x96xf32, #tpu.memory_space<vmem>>, vector<2x8x96xf32>
    %2 = vector.extract_strided_slice %1 {offsets = [0, 0, 0], sizes = [2, 8, 32], strides = [1, 1, 1]} : vector<2x8x96xf32> to vector<2x8x32xf32>
    %3 = vector.extract_strided_slice %1 {offsets = [0, 0, 32], sizes = [2, 8, 32], strides = [1, 1, 1]} : vector<2x8x96xf32> to vector<2x8x32xf32>
    %4 = vector.extract_strided_slice %1 {offsets = [0, 0, 64], sizes = [2, 8, 32], strides = [1, 1, 1]} : vector<2x8x96xf32> to vector<2x8x32xf32>
    %5 = vector.shape_cast %0 : vector<2x8x8x32xf32> to vector<128x32xf32>
    %c0_6 = arith.constant 0 : index
    %c0_7 = arith.constant 0 : index
    %6 = vector.load %arg3[%c0_6, %c0_7] : memref<32x32xf32, #tpu.memory_space<vmem>>, vector<32x32xf32>
    %cst = arith.constant dense<0.000000e+00> : vector<128x32xf32>
    %7 = tpu.matmul %5, %6, %cst {dimension_numbers = #tpu.dot_dimension_numbers<[1], [0], [0], [1], [0, 0, 1, 1], [], []>} : vector<128x32xf32>, vector<32x32xf32>, vector<128x32xf32> -> vector<128x32xf32>
    %c0_8 = arith.constant 0 : index
    %c0_9 = arith.constant 0 : index
    %8 = vector.load %arg4[%c0_8, %c0_9] : memref<1x32xf32, #tpu.memory_space<vmem>>, vector<1x32xf32>
    %9 = vector.broadcast %8 : vector<1x32xf32> to vector<128x32xf32>
    %10 = arith.addf %7, %9 : vector<128x32xf32>
    %11 = vector.shape_cast %10 : vector<128x32xf32> to vector<2x8x8x32xf32>
    %12 = vector.shape_cast %2 : vector<2x8x32xf32> to vector<2x8x1x32xf32>
    %13 = vector.broadcast %12 : vector<2x8x1x32xf32> to vector<2x8x8x32xf32>
    %14 = arith.addf %11, %13 : vector<2x8x8x32xf32>
    %15 = vector.shape_cast %2 : vector<2x8x32xf32> to vector<2x1x8x32xf32>
    %16 = vector.broadcast %15 : vector<2x1x8x32xf32> to vector<2x8x8x32xf32>
    %17 = arith.addf %14, %16 : vector<2x8x8x32xf32>
    %18 = arith.negf %17 : vector<2x8x8x32xf32>
    %19 = math.exp %18 : vector<2x8x8x32xf32>
    %cst_10 = arith.constant 1.000000e+00 : f32
    %20 = vector.broadcast %cst_10 : f32 to vector<2x8x8x32xf32>
    %21 = arith.addf %20, %19 : vector<2x8x8x32xf32>
    %22 = arith.divf %20, %21 : vector<2x8x8x32xf32>
    %23 = vector.shape_cast %4 : vector<2x8x32xf32> to vector<2x1x8x32xf32>
    %24 = vector.broadcast %23 : vector<2x1x8x32xf32> to vector<2x8x8x32xf32>
    %25 = arith.mulf %22, %24 : vector<2x8x8x32xf32>
    %cst_11 = arith.constant dense<0.000000e+00> : vector<2x8x32xf32>
    %26 = vector.multi_reduction <add>, %25, %cst_11 [2] : vector<2x8x8x32xf32> to vector<2x8x32xf32>
    %cst_12 = arith.constant dense<0.000000e+00> : vector<2x8x32xf32>
    %27 = vector.multi_reduction <add>, %22, %cst_12 [2] : vector<2x8x8x32xf32> to vector<2x8x32xf32>
    %cst_13 = arith.constant 9.99999968E-21 : f32
    %28 = vector.broadcast %cst_13 : f32 to vector<2x8x32xf32>
    %29 = arith.addf %27, %28 : vector<2x8x32xf32>
    %30 = tpu.reciprocal %29 {approx = true} : vector<2x8x32xf32> -> vector<2x8x32xf32>
    %31 = arith.mulf %26, %30 : vector<2x8x32xf32>
    %32 = arith.addf %3, %31 : vector<2x8x32xf32>
    %c0_14 = arith.constant 0 : index
    %c0_15 = arith.constant 0 : index
    %c0_16 = arith.constant 0 : index
    %c0_17 = arith.constant 0 : index
    %33 = vector.load %arg5[%c0_14, %c0_15, %c0_16, %c0_17] : memref<2x8x8x32xf32, #tpu.memory_space<vmem>>, vector<2x8x8x32xf32>
    tpu.vector_store %arg5[%c0_14, %c0_15, %c0_16, %c0_17], %17 {strides = array<i32>} : memref<2x8x8x32xf32, #tpu.memory_space<vmem>>, vector<2x8x8x32xf32>,
    %c0_18 = arith.constant 0 : index
    %c0_19 = arith.constant 0 : index
    %c0_20 = arith.constant 0 : index
    %34 = vector.load %arg6[%c0_18, %c0_19, %c0_20] : memref<2x8x32xf32, #tpu.memory_space<vmem>>, vector<2x8x32xf32>
    tpu.vector_store %arg6[%c0_18, %c0_19, %c0_20], %32 {strides = array<i32>} : memref<2x8x32xf32, #tpu.memory_space<vmem>>, vector<2x8x32xf32>,
    %35 = vector.shape_cast %17 : vector<2x8x8x32xf32> to vector<128x32xf32>
    %36 = vector.shape_cast %32 : vector<2x8x32xf32> to vector<16x32xf32>
    %cst_21 = arith.constant dense<0.000000e+00> : vector<32xf32>
    %37 = vector.multi_reduction <add>, %35, %cst_21 [0] : vector<128x32xf32> to vector<32xf32>
    %38 = vector.shape_cast %37 : vector<32xf32> to vector<1x32xf32>
    %39 = arith.mulf %35, %35 : vector<128x32xf32>
    %cst_22 = arith.constant dense<0.000000e+00> : vector<32xf32>
    %40 = vector.multi_reduction <add>, %39, %cst_22 [0] : vector<128x32xf32> to vector<32xf32>
    %41 = vector.shape_cast %40 : vector<32xf32> to vector<1x32xf32>
    %cst_23 = arith.constant dense<0.000000e+00> : vector<32xf32>
    %42 = vector.multi_reduction <add>, %36, %cst_23 [0] : vector<16x32xf32> to vector<32xf32>
    %43 = vector.shape_cast %42 : vector<32xf32> to vector<1x32xf32>
    %44 = arith.mulf %36, %36 : vector<16x32xf32>
    %cst_24 = arith.constant dense<0.000000e+00> : vector<32xf32>
    %45 = vector.multi_reduction <add>, %44, %cst_24 [0] : vector<16x32xf32> to vector<32xf32>
    %46 = vector.shape_cast %45 : vector<32xf32> to vector<1x32xf32>
    %47 = tpu.concatenate %38, %41, %43, %46 in 0 : vector<1x32xf32>, vector<1x32xf32>, vector<1x32xf32>, vector<1x32xf32> -> vector<4x32xf32>
    %48 = vector.shape_cast %47 : vector<4x32xf32> to vector<1x4x32xf32>
    %c0_25 = arith.constant 0 : index
    %c0_26 = arith.constant 0 : index
    %c0_27 = arith.constant 0 : index
    %49 = vector.load %arg7[%c0_25, %c0_26, %c0_27] : memref<1x4x32xf32, #tpu.memory_space<vmem>>, vector<1x4x32xf32>
    tpu.vector_store %arg7[%c0_25, %c0_26, %c0_27], %48 {strides = array<i32>} : memref<1x4x32xf32, #tpu.memory_space<vmem>>, vector<1x4x32xf32>,
    return
  }
  func.func @transform_0(%arg0: i32) -> (i32, i32, i32, i32) {
    %c0_i32 = arith.constant 0 : i32
    %c0_i32_0 = arith.constant 0 : i32
    %c0_i32_1 = arith.constant 0 : i32
    %c0_i32_2 = arith.constant 0 : i32
    return %arg0, %c0_i32, %c0_i32_0, %c0_i32_1 : i32, i32, i32, i32
  }
  func.func @transform_1(%arg0: i32) -> (i32, i32, i32) {
    %c0_i32 = arith.constant 0 : i32
    %c0_i32_0 = arith.constant 0 : i32
    %c0_i32_1 = arith.constant 0 : i32
    return %arg0, %c0_i32, %c0_i32_0 : i32, i32, i32
  }
  func.func @transform_2(%arg0: i32) -> (i32, i32) {
    %c0_i32 = arith.constant 0 : i32
    %c0_i32_0 = arith.constant 0 : i32
    %c0_i32_1 = arith.constant 0 : i32
    return %c0_i32, %c0_i32_0 : i32, i32
  }
  func.func @transform_3(%arg0: i32) -> (i32, i32) {
    %c0_i32 = arith.constant 0 : i32
    %c0_i32_0 = arith.constant 0 : i32
    %c0_i32_1 = arith.constant 0 : i32
    return %c0_i32, %c0_i32_0 : i32, i32
  }
  func.func @transform_4(%arg0: i32) -> (i32, i32, i32, i32) {
    %c0_i32 = arith.constant 0 : i32
    %c0_i32_0 = arith.constant 0 : i32
    %c0_i32_1 = arith.constant 0 : i32
    %c0_i32_2 = arith.constant 0 : i32
    return %arg0, %c0_i32, %c0_i32_0, %c0_i32_1 : i32, i32, i32, i32
  }
  func.func @transform_5(%arg0: i32) -> (i32, i32, i32) {
    %c0_i32 = arith.constant 0 : i32
    %c0_i32_0 = arith.constant 0 : i32
    %c0_i32_1 = arith.constant 0 : i32
    return %arg0, %c0_i32, %c0_i32_0 : i32, i32, i32
  }
  func.func @transform_6(%arg0: i32) -> (i32, i32, i32) {
    %c0_i32 = arith.constant 0 : i32
    %c0_i32_0 = arith.constant 0 : i32
    %c0_i32_1 = arith.constant 0 : i32
    return %arg0, %c0_i32, %c0_i32_0 : i32, i32, i32
  }
}

module attributes {stable_mosaic.version = 11 : i64} {
  func.func @kern(%arg0: i32, %arg1: memref<128x32xf32, #tpu.memory_space<vmem>>, %arg2: memref<128x32xf32, #tpu.memory_space<vmem>>, %arg3: memref<1x32xf32, #tpu.memory_space<vmem>>, %arg4: memref<1x32xf32, #tpu.memory_space<vmem>>, %arg5: memref<32x32xf32, #tpu.memory_space<vmem>>, %arg6: memref<1x32xf32, #tpu.memory_space<vmem>>, %arg7: memref<32x2xf32, #tpu.memory_space<vmem>>, %arg8: memref<1x2xf32, #tpu.memory_space<vmem>>, %arg9: memref<128x2xf32, #tpu.memory_space<vmem>>) attributes {dimension_semantics = [#tpu.dimension_semantics<parallel>], iteration_bounds = array<i64: 1>, scalar_prefetch = 0 : i64, scratch_operands = 0 : i64, tpu.core_type = #tpu.core_type<tc>, window_params = [{transform_indices = @transform_0, window_bounds = array<i64: 128, 32>}, {transform_indices = @transform_1, window_bounds = array<i64: 128, 32>}, {pipeline_mode = #tpu.pipeline_mode<synchronous>, transform_indices = @transform_2, window_bounds = array<i64: 1, 32>}, {pipeline_mode = #tpu.pipeline_mode<synchronous>, transform_indices = @transform_3, window_bounds = array<i64: 1, 32>}, {pipeline_mode = #tpu.pipeline_mode<synchronous>, transform_indices = @transform_4, window_bounds = array<i64: 32, 32>}, {pipeline_mode = #tpu.pipeline_mode<synchronous>, transform_indices = @transform_5, window_bounds = array<i64: 1, 32>}, {pipeline_mode = #tpu.pipeline_mode<synchronous>, transform_indices = @transform_6, window_bounds = array<i64: 32, 2>}, {pipeline_mode = #tpu.pipeline_mode<synchronous>, transform_indices = @transform_7, window_bounds = array<i64: 1, 2>}, {transform_indices = @transform_8, window_bounds = array<i64: 128, 2>}]} {
    %c0 = arith.constant 0 : index
    %c0_0 = arith.constant 0 : index
    %0 = vector.load %arg2[%c0, %c0_0] : memref<128x32xf32, #tpu.memory_space<vmem>>, vector<128x32xf32>
    %c0_1 = arith.constant 0 : index
    %c0_2 = arith.constant 0 : index
    %1 = vector.load %arg1[%c0_1, %c0_2] : memref<128x32xf32, #tpu.memory_space<vmem>>, vector<128x32xf32>
    %c0_3 = arith.constant 0 : index
    %c0_4 = arith.constant 0 : index
    %2 = vector.load %arg3[%c0_3, %c0_4] : memref<1x32xf32, #tpu.memory_space<vmem>>, vector<1x32xf32>
    %3 = vector.broadcast %2 : vector<1x32xf32> to vector<128x32xf32>
    %4 = arith.mulf %1, %3 : vector<128x32xf32>
    %c0_5 = arith.constant 0 : index
    %c0_6 = arith.constant 0 : index
    %5 = vector.load %arg4[%c0_5, %c0_6] : memref<1x32xf32, #tpu.memory_space<vmem>>, vector<1x32xf32>
    %6 = vector.broadcast %5 : vector<1x32xf32> to vector<128x32xf32>
    %7 = arith.addf %4, %6 : vector<128x32xf32>
    %cst = arith.constant 0.000000e+00 : f32
    %8 = vector.broadcast %cst : f32 to vector<128x32xf32>
    %9 = arith.maximumf %7, %8 : vector<128x32xf32>
    %10 = arith.addf %0, %9 : vector<128x32xf32>
    %c0_7 = arith.constant 0 : index
    %c0_8 = arith.constant 0 : index
    %11 = vector.load %arg5[%c0_7, %c0_8] : memref<32x32xf32, #tpu.memory_space<vmem>>, vector<32x32xf32>
    %c0_9 = arith.constant 0 : index
    %c0_10 = arith.constant 0 : index
    %12 = vector.load %arg6[%c0_9, %c0_10] : memref<1x32xf32, #tpu.memory_space<vmem>>, vector<1x32xf32>
    %cst_11 = arith.constant dense<0.000000e+00> : vector<128x32xf32>
    %13 = tpu.matmul %10, %11, %cst_11 {dimension_numbers = #tpu.dot_dimension_numbers<[1], [0], [0], [1], [0, 0, 1, 1], [], []>} : vector<128x32xf32>, vector<32x32xf32>, vector<128x32xf32> -> vector<128x32xf32>
    %14 = vector.broadcast %12 : vector<1x32xf32> to vector<128x32xf32>
    %15 = arith.addf %13, %14 : vector<128x32xf32>
    %cst_12 = arith.constant 0.000000e+00 : f32
    %16 = vector.broadcast %cst_12 : f32 to vector<128x32xf32>
    %17 = arith.maximumf %15, %16 : vector<128x32xf32>
    %c0_13 = arith.constant 0 : index
    %c0_14 = arith.constant 0 : index
    %18 = vector.load %arg7[%c0_13, %c0_14] : memref<32x2xf32, #tpu.memory_space<vmem>>, vector<32x2xf32>
    %c0_15 = arith.constant 0 : index
    %c0_16 = arith.constant 0 : index
    %19 = vector.load %arg8[%c0_15, %c0_16] : memref<1x2xf32, #tpu.memory_space<vmem>>, vector<1x2xf32>
    %cst_17 = arith.constant dense<0.000000e+00> : vector<128x2xf32>
    %20 = tpu.matmul %17, %18, %cst_17 {dimension_numbers = #tpu.dot_dimension_numbers<[1], [0], [0], [1], [0, 0, 1, 1], [], []>} : vector<128x32xf32>, vector<32x2xf32>, vector<128x2xf32> -> vector<128x2xf32>
    %21 = vector.broadcast %19 : vector<1x2xf32> to vector<128x2xf32>
    %22 = arith.addf %20, %21 : vector<128x2xf32>
    %c0_18 = arith.constant 0 : index
    %c0_19 = arith.constant 0 : index
    %23 = vector.load %arg9[%c0_18, %c0_19] : memref<128x2xf32, #tpu.memory_space<vmem>>, vector<128x2xf32>
    tpu.vector_store %arg9[%c0_18, %c0_19], %22 {strides = array<i32>} : memref<128x2xf32, #tpu.memory_space<vmem>>, vector<128x2xf32>,
    return
  }
  func.func @transform_0(%arg0: i32) -> (i32, i32) {
    %c0_i32 = arith.constant 0 : i32
    %c0_i32_0 = arith.constant 0 : i32
    return %arg0, %c0_i32 : i32, i32
  }
  func.func @transform_1(%arg0: i32) -> (i32, i32) {
    %c0_i32 = arith.constant 0 : i32
    %c0_i32_0 = arith.constant 0 : i32
    return %arg0, %c0_i32 : i32, i32
  }
  func.func @transform_2(%arg0: i32) -> (i32, i32) {
    %c0_i32 = arith.constant 0 : i32
    %c0_i32_0 = arith.constant 0 : i32
    %c0_i32_1 = arith.constant 0 : i32
    return %c0_i32, %c0_i32_0 : i32, i32
  }
  func.func @transform_3(%arg0: i32) -> (i32, i32) {
    %c0_i32 = arith.constant 0 : i32
    %c0_i32_0 = arith.constant 0 : i32
    %c0_i32_1 = arith.constant 0 : i32
    return %c0_i32, %c0_i32_0 : i32, i32
  }
  func.func @transform_4(%arg0: i32) -> (i32, i32) {
    %c0_i32 = arith.constant 0 : i32
    %c0_i32_0 = arith.constant 0 : i32
    %c0_i32_1 = arith.constant 0 : i32
    return %c0_i32, %c0_i32_0 : i32, i32
  }
  func.func @transform_5(%arg0: i32) -> (i32, i32) {
    %c0_i32 = arith.constant 0 : i32
    %c0_i32_0 = arith.constant 0 : i32
    %c0_i32_1 = arith.constant 0 : i32
    return %c0_i32, %c0_i32_0 : i32, i32
  }
  func.func @transform_6(%arg0: i32) -> (i32, i32) {
    %c0_i32 = arith.constant 0 : i32
    %c0_i32_0 = arith.constant 0 : i32
    %c0_i32_1 = arith.constant 0 : i32
    return %c0_i32, %c0_i32_0 : i32, i32
  }
  func.func @transform_7(%arg0: i32) -> (i32, i32) {
    %c0_i32 = arith.constant 0 : i32
    %c0_i32_0 = arith.constant 0 : i32
    %c0_i32_1 = arith.constant 0 : i32
    return %c0_i32, %c0_i32_0 : i32, i32
  }
  func.func @transform_8(%arg0: i32) -> (i32, i32) {
    %c0_i32 = arith.constant 0 : i32
    %c0_i32_0 = arith.constant 0 : i32
    return %arg0, %c0_i32 : i32, i32
  }
}

</mosaic_0001>

<llo_original>
// kernel: eq.1
$region0: #{eq.1}
  %s0 = inlined_call_operand.vmem [shape: s32[2,8,8], index: 0, kind: input, shape index: {}]
  %s1 = inlined_call_operand.vmem [shape: s32[128], index: 1, kind: output, shape index: {}]
  $region1: #{eq.1} parent=0
    #allocation0 [shape = 'u8[4096]{0}', space=vmem, size = 0x1000, scoped, tag = 'scoped mem for output reshape']
    %v2 = vld [vmem:[%s0] sm:$0x1]
    %vm3 = vcmask 64512
    %4 = vst.msk [vmem:[#allocation0] sm:$0x1] %vm3, %v2
    %s5 = scalar_lea.vmem %s0, 15
    %v6 = vld [vmem:[%s5] sm:$0x1]
    %7 = vrot.lane.b32.xlu0 %v6, 120
    %v8 = vpop.permute.xlu0 %7
    %vm9 = vcmask 1048512
    %10 = vst.msk [vmem:[#allocation0] sm:$0x1] %vm9, %v8
    %s11 = scalar_lea.vmem %s0, 14
    %v12 = vld [vmem:[%s11] sm:$0x1]
    %13 = vrot.lane.b32.xlu0 %v12, 112
    %v14 = vpop.permute.xlu0 %13
    %vm15 = vcmask 982912
    %16 = vst.msk [vmem:[#allocation0] sm:$0x1] %vm15, %v14
    %s17 = scalar_lea.vmem %s0, 13
    %v18 = vld [vmem:[%s17] sm:$0x1]
    %19 = vrot.lane.b32.xlu0 %v18, 104
    %v20 = vpop.permute.xlu0 %19
    %vm21 = vcmask 917312
    %22 = vst.msk [vmem:[#allocation0] sm:$0x1] %vm21, %v20
    %s23 = scalar_lea.vmem %s0, 12
    %v24 = vld [vmem:[%s23] sm:$0x1]
    %25 = vrot.lane.b32.xlu0 %v24, 96
    %v26 = vpop.permute.xlu0 %25
    %vm27 = vcmask 851712
    %28 = vst.msk [vmem:[#allocation0] sm:$0x1] %vm27, %v26
    %s29 = scalar_lea.vmem %s0, 11
    %v30 = vld [vmem:[%s29] sm:$0x1]
    %31 = vrot.lane.b32.xlu0 %v30, 88
    %v32 = vpop.permute.xlu0 %31
    %vm33 = vcmask 786112
    %34 = vst.msk [vmem:[#allocation0] sm:$0x1] %vm33, %v32
    %s35 = scalar_lea.vmem %s0, 10
    %v36 = vld [vmem:[%s35] sm:$0x1]
    %37 = vrot.lane.b32.xlu0 %v36, 80
    %v38 = vpop.permute.xlu0 %37
    %vm39 = vcmask 720512
    %40 = vst.msk [vmem:[#allocation0] sm:$0x1] %vm39, %v38
    %s41 = scalar_lea.vmem %s0, 9
    %v42 = vld [vmem:[%s41] sm:$0x1]
    %43 = vrot.lane.b32.xlu0 %v42, 72
    %v44 = vpop.permute.xlu0 %43
    %vm45 = vcmask 654912
    %46 = vst.msk [vmem:[#allocation0] sm:$0x1] %vm45, %v44
    %s47 = scalar_lea.vmem %s0, 8
    %v48 = vld [vmem:[%s47] sm:$0x1]
    %49 = vrot.lane.b32.xlu0 %v48, 64
    %v50 = vpop.permute.xlu0 %49
    %vm51 = vcmask 589312
    %52 = vst.msk [vmem:[#allocation0] sm:$0x1] %vm51, %v50
    %s53 = scalar_lea.vmem %s0, 7
    %v54 = vld [vmem:[%s53] sm:$0x1]
    %55 = vrot.lane.b32.xlu0 %v54, 56
    %v56 = vpop.permute.xlu0 %55
    %vm57 = vcmask 523712
    %58 = vst.msk [vmem:[#allocation0] sm:$0x1] %vm57, %v56
    %s59 = scalar_lea.vmem %s0, 6
    %v60 = vld [vmem:[%s59] sm:$0x1]
    %61 = vrot.lane.b32.xlu0 %v60, 48
    %v62 = vpop.permute.xlu0 %61
    %vm63 = vcmask 458112
    %64 = vst.msk [vmem:[#allocation0] sm:$0x1] %vm63, %v62
    %s65 = scalar_lea.vmem %s0, 5
    %v66 = vld [vmem:[%s65] sm:$0x1]
    %67 = vrot.lane.b32.xlu0 %v66, 40
    %v68 = vpop.permute.xlu0 %67
    %vm69 = vcmask 392512
    %70 = vst.msk [vmem:[#allocation0] sm:$0x1] %vm69, %v68
    %s71 = scalar_lea.vmem %s0, 4
    %v72 = vld [vmem:[%s71] sm:$0x1]
    %73 = vrot.lane.b32.xlu0 %v72, 32
    %v74 = vpop.permute.xlu0 %73
    %vm75 = vcmask 326912
    %76 = vst.msk [vmem:[#allocation0] sm:$0x1] %vm75, %v74
    %s77 = scalar_lea.vmem %s0, 3
    %v78 = vld [vmem:[%s77] sm:$0x1]
    %79 = vrot.lane.b32.xlu0 %v78, 24
    %v80 = vpop.permute.xlu0 %79
    %vm81 = vcmask 261312
    %82 = vst.msk [vmem:[#allocation0] sm:$0x1] %vm81, %v80
    %s83 = scalar_lea.vmem %s0, 2
    %v84 = vld [vmem:[%s83] sm:$0x1]
    %85 = vrot.lane.b32.xlu0 %v84, 16
    %v86 = vpop.permute.xlu0 %85
    %vm87 = vcmask 195712
    %88 = vst.msk [vmem:[#allocation0] sm:$0x1] %vm87, %v86
    %s89 = scalar_lea.vmem %s0, 1
    %v90 = vld [vmem:[%s89] sm:$0x1]
    %91 = vrot.lane.b32.xlu0 %v90, 8
    %v92 = vpop.permute.xlu0 %91
    %vm93 = vcmask 130112
    %94 = vst.msk [vmem:[#allocation0] sm:$0x1] %vm93, %v92
    %s96 = sshllo.u32 0, 1
    %v98 = vld [vmem:[#allocation0] sm:%s96]
    %s99 = sshllo.u32 0, 1
    %100 = vst [vmem:[%s1] sm:%s99] %v98

// kernel: sparse_residual_gated_gcn_forward.10
$region0: #{sparse_residual_gated_gcn_forward.10}
  #allocation0 [shape = 'u32[]', space=smem, size = 0x4, offset = 0x4, fixed_abs, tag = 'smem constant byte address 0x4 - core index']
  #allocation1 [shape = 'u32[144,128]{1,0:T(1,128)}', space=vmem, size = 0x12000, scoped, tag = 'internal scratch']
  %s0 = inlined_call_operand.vmem [shape: f32[128,8], index: 0, kind: input, shape index: {}]
  %s1 = inlined_call_operand.vmem [shape: f32[8,32], index: 1, kind: input, shape index: {}]
  %s2 = inlined_call_operand.vmem [shape: f32[1,32], index: 2, kind: input, shape index: {}]
  %s3 = inlined_call_operand.vmem [shape: f32[128,32], index: 3, kind: output, shape index: {}]
  %s4 = sld [smem:[#allocation0]]
  $region22: #{sparse_residual_gated_gcn_forward.10} parent=0
    _
  %s6 = ssub.s32 1, %s4
  %s7 = scalar_select 0, %s6, %s4
  // Predicated region
  $region2: #{sparse_residual_gated_gcn_forward.10} parent=0 // pred_check
    _
  $region3: #{sparse_residual_gated_gcn_forward.10} parent=0 // pred_check_branch
    %9 = sbr.rel (0) target = $region5
  $region4: #{sparse_residual_gated_gcn_forward.10} parent=0 // pred_region
    _
  $region5: #{sparse_residual_gated_gcn_forward.10} parent=0 // pred_fallthru
    _
  // Predicated region
  $region6: #{sparse_residual_gated_gcn_forward.10} parent=0 // pred_check
    _
  $region7: #{sparse_residual_gated_gcn_forward.10} parent=0 // pred_check_branch
    %11 = sbr.rel (0) target = $region9
  $region8: #{sparse_residual_gated_gcn_forward.10} parent=0 // pred_region
    _
  $region9: #{sparse_residual_gated_gcn_forward.10} parent=0 // pred_fallthru
    _
  // Predicated region
  $region10: #{sparse_residual_gated_gcn_forward.10} parent=0 // pred_check
    _
  $region11: #{sparse_residual_gated_gcn_forward.10} parent=0 // pred_check_branch
    %13 = sbr.rel (0) target = $region13
  $region12: #{sparse_residual_gated_gcn_forward.10} parent=0 // pred_region
    _
  $region13: #{sparse_residual_gated_gcn_forward.10} parent=0 // pred_fallthru
    _
  %v14 = vld [vmem:[%s0] sm:$0xff]
  %v15 = vld [vmem:[%s0 + $0x8] sm:$0xff]
  %v16 = vld [vmem:[%s0 + $0x10] sm:$0xff]
  %v17 = vld [vmem:[%s0 + $0x18] sm:$0xff]
  %v18 = vld [vmem:[%s0 + $0x20] sm:$0xff]
  %v19 = vld [vmem:[%s0 + $0x28] sm:$0xff]
  %v20 = vld [vmem:[%s0 + $0x30] sm:$0xff]
  %v21 = vld [vmem:[%s0 + $0x38] sm:$0xff]
  %v22 = vld [vmem:[%s0 + $0x40] sm:$0xff]
  %v23 = vld [vmem:[%s0 + $0x48] sm:$0xff]
  %v24 = vld [vmem:[%s0 + $0x50] sm:$0xff]
  %v25 = vld [vmem:[%s0 + $0x58] sm:$0xff]
  %v26 = vld [vmem:[%s0 + $0x60] sm:$0xff]
  %v27 = vld [vmem:[%s0 + $0x68] sm:$0xff]
  %v28 = vld [vmem:[%s0 + $0x70] sm:$0xff]
  %v29 = vld [vmem:[%s0 + $0x78] sm:$0xff]
  %v30 = vld [vmem:[%s1] sm:$0xff]
  %v31 = vld [vmem:[%s2] sm:$0x1]
  %v33 = vlaneseq
  %v34 = vshrl.u32 %v33, 7
  %v35 = vsub.s32 0, %v34
  %v36 = vrot.slane %v31, %v35
  %vm38 = vcmask 64512
  %v40 = vsel %vm38, %v14, 0
  %v43 = vsel %vm38, %v15, 0
  %v46 = vsel %vm38, %v16, 0
  %v49 = vsel %vm38, %v17, 0
  %v52 = vsel %vm38, %v18, 0
  %v55 = vsel %vm38, %v19, 0
  %v58 = vsel %vm38, %v20, 0
  %v61 = vsel %vm38, %v21, 0
  %v64 = vsel %vm38, %v22, 0
  %v67 = vsel %vm38, %v23, 0
  %v70 = vsel %vm38, %v24, 0
  %v73 = vsel %vm38, %v25, 0
  %v76 = vsel %vm38, %v26, 0
  %v79 = vsel %vm38, %v27, 0
  %v82 = vsel %vm38, %v28, 0
  %v85 = vsel %vm38, %v29, 0
  %87 = vmatprep.subr.mxu0 0.0
  %88 = vmatpush1.msra.mxu0 %v30
  %89 = vmatprep.subr.mxu0 0.0
  %90 = vmatpush1.msra.mxu0 0.0
  %91 = vmatprep.subr.mxu0 0.0
  %92 = vmatpush1.msra.mxu0 0.0
  %93 = vmatprep.subr.mxu0 0.0
  %94 = vmatpush1.msra.mxu0 0.0
  %95 = vmatprep.subr.mxu0 0.0
  %96 = vmatpush1.msra.mxu0 0.0
  %97 = vmatprep.subr.mxu0 0.0
  %98 = vmatpush1.msra.mxu0 0.0
  %99 = vmatprep.subr.mxu0 0.0
  %100 = vmatpush1.msra.mxu0 0.0
  %101 = vmatprep.subr.mxu0 0.0
  %102 = vmatpush1.msra.mxu0 0.0
  %103 = vmatprep.subr.mxu0 0.0
  %104 = vmatpush1.msra.mxu0 0.0
  %105 = vmatprep.subr.mxu0 0.0
  %106 = vmatpush1.msra.mxu0 0.0
  %107 = vmatprep.subr.mxu0 0.0
  %108 = vmatpush1.msra.mxu0 0.0
  %109 = vmatprep.subr.mxu0 0.0
  %110 = vmatpush1.msra.mxu0 0.0
  %111 = vmatprep.subr.mxu0 0.0
  %112 = vmatpush1.msra.mxu0 0.0
  %113 = vmatprep.subr.mxu0 0.0
  %114 = vmatpush1.msra.mxu0 0.0
  %115 = vmatprep.subr.mxu0 0.0
  %116 = vmatpush1.msra.mxu0 0.0
  %117 = vmatprep.subr.mxu0 0.0
  %118 = vmatpush1.msra.mxu0 0.0
  %119 = vmatprep.subr.mxu0 0.0
  %120 = vmatpush1.msra.mxu0 0.0
  %121 = vmatprep.subr.mxu0 0.0
  %122 = vmatpush1.msra.mxu0 0.0
  %123 = vmatprep.subr.mxu0 0.0
  %124 = vmatpush1.msra.mxu0 0.0
  %125 = vmatprep.subr.mxu0 0.0
  %126 = vmatpush1.msra.mxu0 0.0
  %127 = vmatprep.subr.mxu0 0.0
  %128 = vmatpush1.msra.mxu0 0.0
  %129 = vmatprep.subr.mxu0 0.0
  %130 = vmatpush1.msra.mxu0 0.0
  %131 = vmatprep.subr.mxu0 0.0
  %132 = vmatpush1.msra.mxu0 0.0
  %133 = vmatprep.subr.mxu0 0.0
  %134 = vmatpush1.msra.mxu0 0.0
  %135 = vmatprep.subr.mxu0 0.0
  %136 = vmatpush1.msra.mxu0 0.0
  %137 = vmatprep.subr.mxu0 0.0
  %138 = vmatpush1.msra.mxu0 0.0
  %139 = vmatprep.subr.mxu0 0.0
  %140 = vmatpush1.msra.mxu0 0.0
  %141 = vmatprep.subr.mxu0 0.0
  %142 = vmatpush1.msra.mxu0 0.0
  %143 = vmatprep.subr.mxu0 0.0
  %144 = vmatpush1.msra.mxu0 0.0
  %145 = vmatprep.subr.mxu0 0.0
  %146 = vmatpush1.msra.mxu0 0.0
  %147 = vmatprep.subr.mxu0 0.0
  %148 = vmatpush1.msra.mxu0 0.0
  %149 = vmatprep.subr.mxu0 0.0
  %150 = vmatpush1.msra.mxu0 0.0
  %151 = vmatprep.mubr.f32.mxu0 0.0
  %152 = vmatmul.mubr.f32.gmra.mrb[0].mxu0 %v40
  %v153 = vpop.f32.mrb[0].mxu0
  %v154 = vadd.f32 %v36, %v153
  %v155 = vpop.f32.mrb[0].mxu0
  %156 = vmatprep.mubr.f32.mxu0 0.0
  %157 = vmatmul.mubr.f32.gmra.mrb[0].mxu0 %v43
  %v158 = vpop.f32.mrb[0].mxu0
  %v159 = vadd.f32 %v36, %v158
  %v160 = vpop.f32.mrb[0].mxu0
  %161 = vmatprep.mubr.f32.mxu0 0.0
  %162 = vmatmul.mubr.f32.gmra.mrb[0].mxu0 %v46
  %v163 = vpop.f32.mrb[0].mxu0
  %v164 = vadd.f32 %v36, %v163
  %v165 = vpop.f32.mrb[0].mxu0
  %166 = vmatprep.mubr.f32.mxu0 0.0
  %167 = vmatmul.mubr.f32.gmra.mrb[0].mxu0 %v49
  %v168 = vpop.f32.mrb[0].mxu0
  %v169 = vadd.f32 %v36, %v168
  %v170 = vpop.f32.mrb[0].mxu0
  %171 = vmatprep.mubr.f32.mxu0 0.0
  %172 = vmatmul.mubr.f32.gmra.mrb[0].mxu0 %v52
  %v173 = vpop.f32.mrb[0].mxu0
  %v174 = vadd.f32 %v36, %v173
  %v175 = vpop.f32.mrb[0].mxu0
  %176 = vmatprep.mubr.f32.mxu0 0.0
  %177 = vmatmul.mubr.f32.gmra.mrb[0].mxu0 %v55
  %v178 = vpop.f32.mrb[0].mxu0
  %v179 = vadd.f32 %v36, %v178
  %v180 = vpop.f32.mrb[0].mxu0
  %181 = vmatprep.mubr.f32.mxu0 0.0
  %182 = vmatmul.mubr.f32.gmra.mrb[0].mxu0 %v58
  %v183 = vpop.f32.mrb[0].mxu0
  %v184 = vadd.f32 %v36, %v183
  %v185 = vpop.f32.mrb[0].mxu0
  %186 = vmatprep.mubr.f32.mxu0 0.0
  %187 = vmatmul.mubr.f32.gmra.mrb[0].mxu0 %v61
  %v188 = vpop.f32.mrb[0].mxu0
  %v189 = vadd.f32 %v36, %v188
  %v190 = vpop.f32.mrb[0].mxu0
  %191 = vmatprep.mubr.f32.mxu0 0.0
  %192 = vmatmul.mubr.f32.gmra.mrb[0].mxu0 %v64
  %v193 = vpop.f32.mrb[0].mxu0
  %v194 = vadd.f32 %v36, %v193
  %v195 = vpop.f32.mrb[0].mxu0
  %196 = vmatprep.mubr.f32.mxu0 0.0
  %197 = vmatmul.mubr.f32.gmra.mrb[0].mxu0 %v67
  %v198 = vpop.f32.mrb[0].mxu0
  %v199 = vadd.f32 %v36, %v198
  %v200 = vpop.f32.mrb[0].mxu0
  %201 = vmatprep.mubr.f32.mxu0 0.0
  %202 = vmatmul.mubr.f32.gmra.mrb[0].mxu0 %v70
  %v203 = vpop.f32.mrb[0].mxu0
  %v204 = vadd.f32 %v36, %v203
  %v205 = vpop.f32.mrb[0].mxu0
  %206 = vmatprep.mubr.f32.mxu0 0.0
  %207 = vmatmul.mubr.f32.gmra.mrb[0].mxu0 %v73
  %v208 = vpop.f32.mrb[0].mxu0
  %v209 = vadd.f32 %v36, %v208
  %v210 = vpop.f32.mrb[0].mxu0
  %211 = vmatprep.mubr.f32.mxu0 0.0
  %212 = vmatmul.mubr.f32.gmra.mrb[0].mxu0 %v76
  %v213 = vpop.f32.mrb[0].mxu0
  %v214 = vadd.f32 %v36, %v213
  %v215 = vpop.f32.mrb[0].mxu0
  %216 = vmatprep.mubr.f32.mxu0 0.0
  %217 = vmatmul.mubr.f32.gmra.mrb[0].mxu0 %v79
  %v218 = vpop.f32.mrb[0].mxu0
  %v219 = vadd.f32 %v36, %v218
  %v220 = vpop.f32.mrb[0].mxu0
  %221 = vmatprep.mubr.f32.mxu0 0.0
  %222 = vmatmul.mubr.f32.gmra.mrb[0].mxu0 %v82
  %v223 = vpop.f32.mrb[0].mxu0
  %v224 = vadd.f32 %v36, %v223
  %v225 = vpop.f32.mrb[0].mxu0
  %226 = vmatprep.mubr.f32.mxu0 0.0
  %227 = vmatmul.mubr.f32.gmra.mrb[0].mxu0 %v85
  %v228 = vpop.f32.mrb[0].mxu0
  %v229 = vadd.f32 %v36, %v228
  %v230 = vpop.f32.mrb[0].mxu0
  %231 = vdwg.mxu0
  %vm232 = vcmask 261120
  %233 = vst.msk [vmem:[%s3] sm:$0xff] %vm232, %v154
  %234 = vst.msk [vmem:[%s3 + $0x8] sm:$0xff] %vm232, %v159
  %235 = vst.msk [vmem:[%s3 + $0x10] sm:$0xff] %vm232, %v164
  %236 = vst.msk [vmem:[%s3 + $0x18] sm:$0xff] %vm232, %v169
  %237 = vst.msk [vmem:[%s3 + $0x20] sm:$0xff] %vm232, %v174
  %238 = vst.msk [vmem:[%s3 + $0x28] sm:$0xff] %vm232, %v179
  %239 = vst.msk [vmem:[%s3 + $0x30] sm:$0xff] %vm232, %v184
  %240 = vst.msk [vmem:[%s3 + $0x38] sm:$0xff] %vm232, %v189
  %241 = vst.msk [vmem:[%s3 + $0x40] sm:$0xff] %vm232, %v194
  %242 = vst.msk [vmem:[%s3 + $0x48] sm:$0xff] %vm232, %v199
  %243 = vst.msk [vmem:[%s3 + $0x50] sm:$0xff] %vm232, %v204
  %244 = vst.msk [vmem:[%s3 + $0x58] sm:$0xff] %vm232, %v209
  %245 = vst.msk [vmem:[%s3 + $0x60] sm:$0xff] %vm232, %v214
  %246 = vst.msk [vmem:[%s3 + $0x68] sm:$0xff] %vm232, %v219
  %247 = vst.msk [vmem:[%s3 + $0x70] sm:$0xff] %vm232, %v224
  %248 = vst.msk [vmem:[%s3 + $0x78] sm:$0xff] %vm232, %v229
  // Predicated region
  $region14: #{sparse_residual_gated_gcn_forward.10} parent=0 // pred_check
    _
  $region15: #{sparse_residual_gated_gcn_forward.10} parent=0 // pred_check_branch
    %250 = sbr.rel (0) target = $region17
  $region16: #{sparse_residual_gated_gcn_forward.10} parent=0 // pred_region
    _
  $region17: #{sparse_residual_gated_gcn_forward.10} parent=0 // pred_fallthru
    _
  // Predicated region
  $region18: #{sparse_residual_gated_gcn_forward.10} parent=0 // pred_check
    _
  $region19: #{sparse_residual_gated_gcn_forward.10} parent=0 // pred_check_branch
    %252 = sbr.rel (0) target = $region21
  $region20: #{sparse_residual_gated_gcn_forward.10} parent=0 // pred_region
    _
  $region21: #{sparse_residual_gated_gcn_forward.10} parent=0 // pred_fallthru
    _

// kernel: sparse_residual_gated_gcn_forward.9
$region0: #{sparse_residual_gated_gcn_forward.9}
  #allocation0 [shape = 'u32[]', space=smem, size = 0x4, offset = 0x4, fixed_abs, tag = 'smem constant byte address 0x4 - core index']
  #allocation1 [shape = 'u32[144,128]{1,0:T(1,128)}', space=vmem, size = 0x12000, scoped, tag = 'internal scratch']
  %s0 = inlined_call_operand.vmem [shape: f32[16,8], index: 0, kind: input, shape index: {}]
  %s1 = inlined_call_operand.vmem [shape: f32[8,32], index: 1, kind: input, shape index: {}]
  %s2 = inlined_call_operand.vmem [shape: f32[1,32], index: 2, kind: input, shape index: {}]
  %s3 = inlined_call_operand.vmem [shape: f32[16,32], index: 3, kind: output, shape index: {}]
  %s4 = sld [smem:[#allocation0]]
  $region22: #{sparse_residual_gated_gcn_forward.9} parent=0
    _
  %s6 = ssub.s32 1, %s4
  %s7 = scalar_select 0, %s6, %s4
  // Predicated region
  $region2: #{sparse_residual_gated_gcn_forward.9} parent=0 // pred_check
    _
  $region3: #{sparse_residual_gated_gcn_forward.9} parent=0 // pred_check_branch
    %9 = sbr.rel (0) target = $region5
  $region4: #{sparse_residual_gated_gcn_forward.9} parent=0 // pred_region
    _
  $region5: #{sparse_residual_gated_gcn_forward.9} parent=0 // pred_fallthru
    _
  // Predicated region
  $region6: #{sparse_residual_gated_gcn_forward.9} parent=0 // pred_check
    _
  $region7: #{sparse_residual_gated_gcn_forward.9} parent=0 // pred_check_branch
    %11 = sbr.rel (0) target = $region9
  $region8: #{sparse_residual_gated_gcn_forward.9} parent=0 // pred_region
    _
  $region9: #{sparse_residual_gated_gcn_forward.9} parent=0 // pred_fallthru
    _
  // Predicated region
  $region10: #{sparse_residual_gated_gcn_forward.9} parent=0 // pred_check
    _
  $region11: #{sparse_residual_gated_gcn_forward.9} parent=0 // pred_check_branch
    %13 = sbr.rel (0) target = $region13
  $region12: #{sparse_residual_gated_gcn_forward.9} parent=0 // pred_region
    _
  $region13: #{sparse_residual_gated_gcn_forward.9} parent=0 // pred_fallthru
    _
  %v14 = vld [vmem:[%s0] sm:$0xff]
  %v15 = vld [vmem:[%s0 + $0x8] sm:$0xff]
  %v16 = vld [vmem:[%s1] sm:$0xff]
  %v17 = vld [vmem:[%s2] sm:$0x1]
  %v19 = vlaneseq
  %v20 = vshrl.u32 %v19, 7
  %v21 = vsub.s32 0, %v20
  %v22 = vrot.slane %v17, %v21
  %vm24 = vcmask 64512
  %v26 = vsel %vm24, %v14, 0
  %v29 = vsel %vm24, %v15, 0
  %31 = vmatprep.subr.mxu0 0.0
  %32 = vmatpush1.msra.mxu0 %v16
  %33 = vmatprep.subr.mxu0 0.0
  %34 = vmatpush1.msra.mxu0 0.0
  %35 = vmatprep.subr.mxu0 0.0
  %36 = vmatpush1.msra.mxu0 0.0
  %37 = vmatprep.subr.mxu0 0.0
  %38 = vmatpush1.msra.mxu0 0.0
  %39 = vmatprep.subr.mxu0 0.0
  %40 = vmatpush1.msra.mxu0 0.0
  %41 = vmatprep.subr.mxu0 0.0
  %42 = vmatpush1.msra.mxu0 0.0
  %43 = vmatprep.subr.mxu0 0.0
  %44 = vmatpush1.msra.mxu0 0.0
  %45 = vmatprep.subr.mxu0 0.0
  %46 = vmatpush1.msra.mxu0 0.0
  %47 = vmatprep.subr.mxu0 0.0
  %48 = vmatpush1.msra.mxu0 0.0
  %49 = vmatprep.subr.mxu0 0.0
  %50 = vmatpush1.msra.mxu0 0.0
  %51 = vmatprep.subr.mxu0 0.0
  %52 = vmatpush1.msra.mxu0 0.0
  %53 = vmatprep.subr.mxu0 0.0
  %54 = vmatpush1.msra.mxu0 0.0
  %55 = vmatprep.subr.mxu0 0.0
  %56 = vmatpush1.msra.mxu0 0.0
  %57 = vmatprep.subr.mxu0 0.0
  %58 = vmatpush1.msra.mxu0 0.0
  %59 = vmatprep.subr.mxu0 0.0
  %60 = vmatpush1.msra.mxu0 0.0
  %61 = vmatprep.subr.mxu0 0.0
  %62 = vmatpush1.msra.mxu0 0.0
  %63 = vmatprep.subr.mxu0 0.0
  %64 = vmatpush1.msra.mxu0 0.0
  %65 = vmatprep.subr.mxu0 0.0
  %66 = vmatpush1.msra.mxu0 0.0
  %67 = vmatprep.subr.mxu0 0.0
  %68 = vmatpush1.msra.mxu0 0.0
  %69 = vmatprep.subr.mxu0 0.0
  %70 = vmatpush1.msra.mxu0 0.0
  %71 = vmatprep.subr.mxu0 0.0
  %72 = vmatpush1.msra.mxu0 0.0
  %73 = vmatprep.subr.mxu0 0.0
  %74 = vmatpush1.msra.mxu0 0.0
  %75 = vmatprep.subr.mxu0 0.0
  %76 = vmatpush1.msra.mxu0 0.0
  %77 = vmatprep.subr.mxu0 0.0
  %78 = vmatpush1.msra.mxu0 0.0
  %79 = vmatprep.subr.mxu0 0.0
  %80 = vmatpush1.msra.mxu0 0.0
  %81 = vmatprep.subr.mxu0 0.0
  %82 = vmatpush1.msra.mxu0 0.0
  %83 = vmatprep.subr.mxu0 0.0
  %84 = vmatpush1.msra.mxu0 0.0
  %85 = vmatprep.subr.mxu0 0.0
  %86 = vmatpush1.msra.mxu0 0.0
  %87 = vmatprep.subr.mxu0 0.0
  %88 = vmatpush1.msra.mxu0 0.0
  %89 = vmatprep.subr.mxu0 0.0
  %90 = vmatpush1.msra.mxu0 0.0
  %91 = vmatprep.subr.mxu0 0.0
  %92 = vmatpush1.msra.mxu0 0.0
  %93 = vmatprep.subr.mxu0 0.0
  %94 = vmatpush1.msra.mxu0 0.0
  %95 = vmatprep.mubr.f32.mxu0 0.0
  %96 = vmatmul.mubr.f32.gmra.mrb[0].mxu0 %v26
  %v97 = vpop.f32.mrb[0].mxu0
  %v98 = vadd.f32 %v22, %v97
  %v99 = vpop.f32.mrb[0].mxu0
  %100 = vmatprep.mubr.f32.mxu0 0.0
  %101 = vmatmul.mubr.f32.gmra.mrb[0].mxu0 %v29
  %v102 = vpop.f32.mrb[0].mxu0
  %v103 = vadd.f32 %v22, %v102
  %v104 = vpop.f32.mrb[0].mxu0
  %105 = vdwg.mxu0
  %vm106 = vcmask 261120
  %107 = vst.msk [vmem:[%s3] sm:$0xff] %vm106, %v98
  %108 = vst.msk [vmem:[%s3 + $0x8] sm:$0xff] %vm106, %v103
  // Predicated region
  $region14: #{sparse_residual_gated_gcn_forward.9} parent=0 // pred_check
    _
  $region15: #{sparse_residual_gated_gcn_forward.9} parent=0 // pred_check_branch
    %110 = sbr.rel (0) target = $region17
  $region16: #{sparse_residual_gated_gcn_forward.9} parent=0 // pred_region
    _
  $region17: #{sparse_residual_gated_gcn_forward.9} parent=0 // pred_fallthru
    _
  // Predicated region
  $region18: #{sparse_residual_gated_gcn_forward.9} parent=0 // pred_check
    _
  $region19: #{sparse_residual_gated_gcn_forward.9} parent=0 // pred_check_branch
    %112 = sbr.rel (0) target = $region21
  $region20: #{sparse_residual_gated_gcn_forward.9} parent=0 // pred_region
    _
  $region21: #{sparse_residual_gated_gcn_forward.9} parent=0 // pred_fallthru
    _

// kernel: sparse_residual_gated_gcn_forward.11
$region0: #{sparse_residual_gated_gcn_forward.11}
  #allocation0 [shape = 'u32[]', space=smem, size = 0x4, offset = 0x4, fixed_abs, tag = 'smem constant byte address 0x4 - core index']
  #allocation1 [shape = 'u32[144,128]{1,0:T(1,128)}', space=vmem, size = 0x12000, scoped, tag = 'internal scratch']
  %s0 = inlined_call_operand.vmem [shape: f32[16,32], index: 0, kind: input, shape index: {}]
  %s1 = inlined_call_operand.vmem [shape: f32[32,96], index: 1, kind: input, shape index: {}]
  %s2 = inlined_call_operand.vmem [shape: f32[1,96], index: 2, kind: input, shape index: {}]
  %s3 = inlined_call_operand.vmem [shape: f32[16,96], index: 3, kind: output, shape index: {}]
  %s4 = sld [smem:[#allocation0]]
  $region22: #{sparse_residual_gated_gcn_forward.11} parent=0
    _
  %s6 = ssub.s32 1, %s4
  %s7 = scalar_select 0, %s6, %s4
  // Predicated region
  $region2: #{sparse_residual_gated_gcn_forward.11} parent=0 // pred_check
    _
  $region3: #{sparse_residual_gated_gcn_forward.11} parent=0 // pred_check_branch
    %9 = sbr.rel (0) target = $region5
  $region4: #{sparse_residual_gated_gcn_forward.11} parent=0 // pred_region
    _
  $region5: #{sparse_residual_gated_gcn_forward.11} parent=0 // pred_fallthru
    _
  // Predicated region
  $region6: #{sparse_residual_gated_gcn_forward.11} parent=0 // pred_check
    _
  $region7: #{sparse_residual_gated_gcn_forward.11} parent=0 // pred_check_branch
    %11 = sbr.rel (0) target = $region9
  $region8: #{sparse_residual_gated_gcn_forward.11} parent=0 // pred_region
    _
  $region9: #{sparse_residual_gated_gcn_forward.11} parent=0 // pred_fallthru
    _
  // Predicated region
  $region10: #{sparse_residual_gated_gcn_forward.11} parent=0 // pred_check
    _
  $region11: #{sparse_residual_gated_gcn_forward.11} parent=0 // pred_check_branch
    %13 = sbr.rel (0) target = $region13
  $region12: #{sparse_residual_gated_gcn_forward.11} parent=0 // pred_region
    _
  $region13: #{sparse_residual_gated_gcn_forward.11} parent=0 // pred_fallthru
    _
  %v14 = vld [vmem:[%s0] sm:$0xff]
  %v15 = vld [vmem:[%s0 + $0x8] sm:$0xff]
  %v16 = vld [vmem:[%s1] sm:$0xff]
  %v17 = vld [vmem:[%s1 + $0x8] sm:$0xff]
  %v18 = vld [vmem:[%s1 + $0x10] sm:$0xff]
  %v19 = vld [vmem:[%s1 + $0x18] sm:$0xff]
  %v20 = vld [vmem:[%s2] sm:$0x1]
  %v22 = vlaneseq
  %v23 = vshrl.u32 %v22, 7
  %v24 = vsub.s32 0, %v23
  %v25 = vrot.slane %v20, %v24
  %vm27 = vcmask 261120
  %v29 = vsel %vm27, %v14, 0
  %v32 = vsel %vm27, %v15, 0
  %34 = vmatprep.subr.mxu0 0.0
  %35 = vmatpush1.msra.mxu0 %v16
  %36 = vmatprep.subr.mxu0 0.0
  %37 = vmatpush1.msra.mxu0 %v17
  %38 = vmatprep.subr.mxu0 0.0
  %39 = vmatpush1.msra.mxu0 %v18
  %40 = vmatprep.subr.mxu0 0.0
  %41 = vmatpush1.msra.mxu0 %v19
  %42 = vmatprep.subr.mxu0 0.0
  %43 = vmatpush1.msra.mxu0 0.0
  %44 = vmatprep.subr.mxu0 0.0
  %45 = vmatpush1.msra.mxu0 0.0
  %46 = vmatprep.subr.mxu0 0.0
  %47 = vmatpush1.msra.mxu0 0.0
  %48 = vmatprep.subr.mxu0 0.0
  %49 = vmatpush1.msra.mxu0 0.0
  %50 = vmatprep.subr.mxu0 0.0
  %51 = vmatpush1.msra.mxu0 0.0
  %52 = vmatprep.subr.mxu0 0.0
  %53 = vmatpush1.msra.mxu0 0.0
  %54 = vmatprep.subr.mxu0 0.0
  %55 = vmatpush1.msra.mxu0 0.0
  %56 = vmatprep.subr.mxu0 0.0
  %57 = vmatpush1.msra.mxu0 0.0
  %58 = vmatprep.subr.mxu0 0.0
  %59 = vmatpush1.msra.mxu0 0.0
  %60 = vmatprep.subr.mxu0 0.0
  %61 = vmatpush1.msra.mxu0 0.0
  %62 = vmatprep.subr.mxu0 0.0
  %63 = vmatpush1.msra.mxu0 0.0
  %64 = vmatprep.subr.mxu0 0.0
  %65 = vmatpush1.msra.mxu0 0.0
  %66 = vmatprep.subr.mxu0 0.0
  %67 = vmatpush1.msra.mxu0 0.0
  %68 = vmatprep.subr.mxu0 0.0
  %69 = vmatpush1.msra.mxu0 0.0
  %70 = vmatprep.subr.mxu0 0.0
  %71 = vmatpush1.msra.mxu0 0.0
  %72 = vmatprep.subr.mxu0 0.0
  %73 = vmatpush1.msra.mxu0 0.0
  %74 = vmatprep.subr.mxu0 0.0
  %75 = vmatpush1.msra.mxu0 0.0
  %76 = vmatprep.subr.mxu0 0.0
  %77 = vmatpush1.msra.mxu0 0.0
  %78 = vmatprep.subr.mxu0 0.0
  %79 = vmatpush1.msra.mxu0 0.0
  %80 = vmatprep.subr.mxu0 0.0
  %81 = vmatpush1.msra.mxu0 0.0
  %82 = vmatprep.subr.mxu0 0.0
  %83 = vmatpush1.msra.mxu0 0.0
  %84 = vmatprep.subr.mxu0 0.0
  %85 = vmatpush1.msra.mxu0 0.0
  %86 = vmatprep.subr.mxu0 0.0
  %87 = vmatpush1.msra.mxu0 0.0
  %88 = vmatprep.subr.mxu0 0.0
  %89 = vmatpush1.msra.mxu0 0.0
  %90 = vmatprep.subr.mxu0 0.0
  %91 = vmatpush1.msra.mxu0 0.0
  %92 = vmatprep.subr.mxu0 0.0
  %93 = vmatpush1.msra.mxu0 0.0
  %94 = vmatprep.subr.mxu0 0.0
  %95 = vmatpush1.msra.mxu0 0.0
  %96 = vmatprep.subr.mxu0 0.0
  %97 = vmatpush1.msra.mxu0 0.0
  %98 = vmatprep.mubr.f32.mxu0 0.0
  %99 = vmatmul.mubr.f32.gmra.mrb[0].mxu0 %v29
  %v100 = vpop.f32.mrb[0].mxu0
  %v101 = vadd.f32 %v25, %v100
  %v102 = vpop.f32.mrb[0].mxu0
  %103 = vmatprep.mubr.f32.mxu0 0.0
  %104 = vmatmul.mubr.f32.gmra.mrb[0].mxu0 %v32
  %v105 = vpop.f32.mrb[0].mxu0
  %v106 = vadd.f32 %v25, %v105
  %v107 = vpop.f32.mrb[0].mxu0
  %108 = vdwg.mxu0
  %vm109 = vcmask 785408
  %110 = vst.msk [vmem:[%s3] sm:$0xff] %vm109, %v101
  %111 = vst.msk [vmem:[%s3 + $0x8] sm:$0xff] %vm109, %v106
  // Predicated region
  $region14: #{sparse_residual_gated_gcn_forward.11} parent=0 // pred_check
    _
  $region15: #{sparse_residual_gated_gcn_forward.11} parent=0 // pred_check_branch
    %113 = sbr.rel (0) target = $region17
  $region16: #{sparse_residual_gated_gcn_forward.11} parent=0 // pred_region
    _
  $region17: #{sparse_residual_gated_gcn_forward.11} parent=0 // pred_fallthru
    _
  // Predicated region
  $region18: #{sparse_residual_gated_gcn_forward.11} parent=0 // pred_check
    _
  $region19: #{sparse_residual_gated_gcn_forward.11} parent=0 // pred_check_branch
    %115 = sbr.rel (0) target = $region21
  $region20: #{sparse_residual_gated_gcn_forward.11} parent=0 // pred_region
    _
  $region21: #{sparse_residual_gated_gcn_forward.11} parent=0 // pred_fallthru
    _

// kernel: tile.23
$region0: #{tile.23}
  #allocation0 [shape = 's32[1]{0}', space=sflag, size = 0x4, scoped, tag = 'scoped memory for tile.23']
  %s0 = inlined_call_operand.vmem [shape: f32[32], index: 0, kind: input, shape index: {}]
  %s1 = inlined_call_operand.vmem [shape: f32[4,32], index: 1, kind: output, shape index: {}]
  // Predicated region
  $region2: #{tile.23} parent=0 // pred_check
    _
  $region3: #{tile.23} parent=0 // pred_check_branch
    %3 = sbr.rel (0) target = $region5
  $region4: #{tile.23} parent=0 // pred_region
    _
  $region5: #{tile.23} parent=0 // pred_fallthru
    _
  %v4 = vld [vmem:[%s0] ss:$0 sm:$0xff]
  %5 = vst [vmem:[%s1] sm:$0xf] %v4

// kernel: tile.24
$region0: #{tile.24}
  %s0 = inlined_call_operand.vmem [shape: f32[4,32], index: 0, kind: input, shape index: {}]
  %s1 = inlined_call_operand.vmem [shape: f32[1,128], index: 1, kind: output, shape index: {}]
  $region1: #{tile.24} parent=0
    #allocation0 [shape = 'u8[4096]{0}', space=vmem, size = 0x1000, scoped, tag = 'scoped mem for output reshape']
    #allocation1 [shape = 'u8[4096]{0}', space=vmem, size = 0x1000, scoped, tag = 'scoped mem for input reshape']
    %s3 = sshllo.u32 0, 4
    %v4 = vld [vmem:[%s0] sm:%s3]
    %5 = vst [vmem:[#allocation1] sm:%s3] %v4
    %v6 = vld [vmem:[#allocation1] sm:$0x1]
    %vm7 = vcmask 261120
    %8 = vst.msk [vmem:[#allocation0] sm:$0x1] %vm7, %v6
    %s9 = scalar_lea.vmem [#allocation1], 3
    %v10 = vld [vmem:[%s9] sm:$0x1]
    %11 = vrot.lane.b32.xlu0 %v10, 96
    %v12 = vpop.permute.xlu0 %11
    %vm13 = vcmask 1048320
    %14 = vst.msk [vmem:[#allocation0] sm:$0x1] %vm13, %v12
    %s15 = scalar_lea.vmem [#allocation1], 2
    %v16 = vld [vmem:[%s15] sm:$0x1]
    %17 = vrot.lane.b32.xlu0 %v16, 64
    %v18 = vpop.permute.xlu0 %17
    %vm19 = vcmask 785920
    %20 = vst.msk [vmem:[#allocation0] sm:$0x1] %vm19, %v18
    %s21 = scalar_lea.vmem [#allocation1], 1
    %v22 = vld [vmem:[%s21] sm:$0x1]
    %23 = vrot.lane.b32.xlu0 %v22, 32
    %v24 = vpop.permute.xlu0 %23
    %vm25 = vcmask 523520
    %26 = vst.msk [vmem:[#allocation0] sm:$0x1] %vm25, %v24
    %s28 = sshllo.u32 0, 1
    %v30 = vld [vmem:[#allocation0] sm:%s28]
    %s31 = sshllo.u32 0, 1
    %32 = vst [vmem:[%s1] sm:%s31] %v30

// kernel: sparse_residual_gated_gcn_forward.13
$region0: #{sparse_residual_gated_gcn_forward.13}
  #allocation0 [shape = 'u32[]', space=smem, size = 0x4, offset = 0x4, fixed_abs, tag = 'smem constant byte address 0x4 - core index']
  #allocation1 [shape = 'u32[144,128]{1,0:T(1,128)}', space=vmem, size = 0x12000, scoped, tag = 'internal scratch']
  %s0 = inlined_call_operand.vmem [shape: f32[32,128], index: 0, kind: input, shape index: {}]
  %s1 = inlined_call_operand.vmem [shape: f32[32,128], index: 1, kind: input, shape index: {}]
  %s2 = inlined_call_operand.vmem [shape: f32[1,128], index: 2, kind: input, shape index: {}]
  %s3 = inlined_call_operand.vmem [shape: f32[1,128], index: 3, kind: input, shape index: {}]
  %s4 = inlined_call_operand.vmem [shape: f32[32,128], index: 4, kind: output, shape index: {}]
  %s5 = sld [smem:[#allocation0]]
  $region26: #{sparse_residual_gated_gcn_forward.13} parent=0
    _
  %s7 = ssub.s32 1, %s5
  %s8 = scalar_select 0, %s7, %s5
  // Predicated region
  $region2: #{sparse_residual_gated_gcn_forward.13} parent=0 // pred_check
    _
  $region3: #{sparse_residual_gated_gcn_forward.13} parent=0 // pred_check_branch
    %10 = sbr.rel (0) target = $region5
  $region4: #{sparse_residual_gated_gcn_forward.13} parent=0 // pred_region
    _
  $region5: #{sparse_residual_gated_gcn_forward.13} parent=0 // pred_fallthru
    _
  // Predicated region
  $region6: #{sparse_residual_gated_gcn_forward.13} parent=0 // pred_check
    _
  $region7: #{sparse_residual_gated_gcn_forward.13} parent=0 // pred_check_branch
    %12 = sbr.rel (0) target = $region9
  $region8: #{sparse_residual_gated_gcn_forward.13} parent=0 // pred_region
    _
  $region9: #{sparse_residual_gated_gcn_forward.13} parent=0 // pred_fallthru
    _
  // Predicated region
  $region10: #{sparse_residual_gated_gcn_forward.13} parent=0 // pred_check
    _
  $region11: #{sparse_residual_gated_gcn_forward.13} parent=0 // pred_check_branch
    %14 = sbr.rel (0) target = $region13
  $region12: #{sparse_residual_gated_gcn_forward.13} parent=0 // pred_region
    _
  $region13: #{sparse_residual_gated_gcn_forward.13} parent=0 // pred_fallthru
    _
  // Predicated region
  $region14: #{sparse_residual_gated_gcn_forward.13} parent=0 // pred_check
    _
  $region15: #{sparse_residual_gated_gcn_forward.13} parent=0 // pred_check_branch
    %16 = sbr.rel (0) target = $region17
  $region16: #{sparse_residual_gated_gcn_forward.13} parent=0 // pred_region
    _
  $region17: #{sparse_residual_gated_gcn_forward.13} parent=0 // pred_fallthru
    _
  %v17 = vld [vmem:[%s1] sm:$0xff]
  %v18 = vld [vmem:[%s1 + $0x8] sm:$0xff]
  %v19 = vld [vmem:[%s1 + $0x10] sm:$0xff]
  %v20 = vld [vmem:[%s1 + $0x18] sm:$0xff]
  %v21 = vld [vmem:[%s0] sm:$0xff]
  %v22 = vld [vmem:[%s0 + $0x8] sm:$0xff]
  %v23 = vld [vmem:[%s0 + $0x10] sm:$0xff]
  %v24 = vld [vmem:[%s0 + $0x18] sm:$0xff]
  %v25 = vld [vmem:[%s2] sm:$0x1]
  %v27 = vlaneseq
  %v28 = vshrl.u32 %v27, 7
  %v29 = vsub.s32 0, %v28
  %v30 = vrot.slane %v25, %v29
  %v32 = vmul.f32 %v21, %v30
  %v33 = vmul.f32 %v22, %v30
  %v34 = vmul.f32 %v23, %v30
  %v35 = vmul.f32 %v24, %v30
  %v36 = vld [vmem:[%s3] sm:$0x1]
  %v38 = vlaneseq
  %v39 = vshrl.u32 %v38, 7
  %v40 = vsub.s32 0, %v39
  %v41 = vrot.slane %v36, %v40
  %v43 = vadd.f32 %v32, %v41
  %v44 = vadd.f32 %v33, %v41
  %v45 = vadd.f32 %v34, %v41
  %v46 = vadd.f32 %v35, %v41
  %v47 = vmax.f32 %v43, 0.0
  %v48 = vmax.f32 %v44, 0.0
  %v49 = vmax.f32 %v45, 0.0
  %v50 = vmax.f32 %v46, 0.0
  %v51 = vadd.f32 %v17, %v47
  %v52 = vadd.f32 %v18, %v48
  %v53 = vadd.f32 %v19, %v49
  %v54 = vadd.f32 %v20, %v50
  %55 = vst [vmem:[%s4] sm:$0xff] %v51
  %56 = vst [vmem:[%s4 + $0x8] sm:$0xff] %v52
  %57 = vst [vmem:[%s4 + $0x10] sm:$0xff] %v53
  %58 = vst [vmem:[%s4 + $0x18] sm:$0xff] %v54
  // Predicated region
  $region18: #{sparse_residual_gated_gcn_forward.13} parent=0 // pred_check
    _
  $region19: #{sparse_residual_gated_gcn_forward.13} parent=0 // pred_check_branch
    %60 = sbr.rel (0) target = $region21
  $region20: #{sparse_residual_gated_gcn_forward.13} parent=0 // pred_region
    _
  $region21: #{sparse_residual_gated_gcn_forward.13} parent=0 // pred_fallthru
    _
  // Predicated region
  $region22: #{sparse_residual_gated_gcn_forward.13} parent=0 // pred_check
    _
  $region23: #{sparse_residual_gated_gcn_forward.13} parent=0 // pred_check_branch
    %62 = sbr.rel (0) target = $region25
  $region24: #{sparse_residual_gated_gcn_forward.13} parent=0 // pred_region
    _
  $region25: #{sparse_residual_gated_gcn_forward.13} parent=0 // pred_fallthru
    _

// kernel: sparse_residual_gated_gcn_forward.14
$region0: #{sparse_residual_gated_gcn_forward.14}
  #allocation0 [shape = 'u32[]', space=smem, size = 0x4, offset = 0x4, fixed_abs, tag = 'smem constant byte address 0x4 - core index']
  #allocation1 [shape = 'u32[144,128]{1,0:T(1,128)}', space=vmem, size = 0x12000, scoped, tag = 'internal scratch']
  %s0 = inlined_call_operand.vmem [shape: f32[4,128], index: 0, kind: input, shape index: {}]
  %s1 = inlined_call_operand.vmem [shape: f32[4,128], index: 1, kind: input, shape index: {}]
  %s2 = inlined_call_operand.vmem [shape: f32[1,128], index: 2, kind: input, shape index: {}]
  %s3 = inlined_call_operand.vmem [shape: f32[1,128], index: 3, kind: input, shape index: {}]
  %s4 = inlined_call_operand.vmem [shape: f32[4,128], index: 4, kind: output, shape index: {}]
  %s5 = sld [smem:[#allocation0]]
  $region26: #{sparse_residual_gated_gcn_forward.14} parent=0
    _
  %s7 = ssub.s32 1, %s5
  %s8 = scalar_select 0, %s7, %s5
  // Predicated region
  $region2: #{sparse_residual_gated_gcn_forward.14} parent=0 // pred_check
    _
  $region3: #{sparse_residual_gated_gcn_forward.14} parent=0 // pred_check_branch
    %10 = sbr.rel (0) target = $region5
  $region4: #{sparse_residual_gated_gcn_forward.14} parent=0 // pred_region
    _
  $region5: #{sparse_residual_gated_gcn_forward.14} parent=0 // pred_fallthru
    _
  // Predicated region
  $region6: #{sparse_residual_gated_gcn_forward.14} parent=0 // pred_check
    _
  $region7: #{sparse_residual_gated_gcn_forward.14} parent=0 // pred_check_branch
    %12 = sbr.rel (0) target = $region9
  $region8: #{sparse_residual_gated_gcn_forward.14} parent=0 // pred_region
    _
  $region9: #{sparse_residual_gated_gcn_forward.14} parent=0 // pred_fallthru
    _
  // Predicated region
  $region10: #{sparse_residual_gated_gcn_forward.14} parent=0 // pred_check
    _
  $region11: #{sparse_residual_gated_gcn_forward.14} parent=0 // pred_check_branch
    %14 = sbr.rel (0) target = $region13
  $region12: #{sparse_residual_gated_gcn_forward.14} parent=0 // pred_region
    _
  $region13: #{sparse_residual_gated_gcn_forward.14} parent=0 // pred_fallthru
    _
  // Predicated region
  $region14: #{sparse_residual_gated_gcn_forward.14} parent=0 // pred_check
    _
  $region15: #{sparse_residual_gated_gcn_forward.14} parent=0 // pred_check_branch
    %16 = sbr.rel (0) target = $region17
  $region16: #{sparse_residual_gated_gcn_forward.14} parent=0 // pred_region
    _
  $region17: #{sparse_residual_gated_gcn_forward.14} parent=0 // pred_fallthru
    _
  %v17 = vld [vmem:[%s1] sm:$0xf]
  %v18 = vld [vmem:[%s0] sm:$0xf]
  %v19 = vld [vmem:[%s2] sm:$0x1]
  %v21 = vlaneseq
  %v22 = vshrl.u32 %v21, 7
  %v23 = vsub.s32 0, %v22
  %v24 = vrot.slane %v19, %v23
  %v26 = vmul.f32 %v18, %v24
  %v27 = vld [vmem:[%s3] sm:$0x1]
  %v29 = vlaneseq
  %v30 = vshrl.u32 %v29, 7
  %v31 = vsub.s32 0, %v30
  %v32 = vrot.slane %v27, %v31
  %v34 = vadd.f32 %v26, %v32
  %v35 = vmax.f32 %v34, 0.0
  %v36 = vadd.f32 %v17, %v35
  %37 = vst [vmem:[%s4] sm:$0xf] %v36
  // Predicated region
  $region18: #{sparse_residual_gated_gcn_forward.14} parent=0 // pred_check
    _
  $region19: #{sparse_residual_gated_gcn_forward.14} parent=0 // pred_check_branch
    %39 = sbr.rel (0) target = $region21
  $region20: #{sparse_residual_gated_gcn_forward.14} parent=0 // pred_region
    _
  $region21: #{sparse_residual_gated_gcn_forward.14} parent=0 // pred_fallthru
    _
  // Predicated region
  $region22: #{sparse_residual_gated_gcn_forward.14} parent=0 // pred_check
    _
  $region23: #{sparse_residual_gated_gcn_forward.14} parent=0 // pred_check_branch
    %41 = sbr.rel (0) target = $region25
  $region24: #{sparse_residual_gated_gcn_forward.14} parent=0 // pred_region
    _
  $region25: #{sparse_residual_gated_gcn_forward.14} parent=0 // pred_fallthru
    _

// kernel: sparse_residual_gated_gcn_forward.12
$region0: #{sparse_residual_gated_gcn_forward.12}
  #allocation0 [shape = 'u32[]', space=smem, size = 0x4, offset = 0x4, fixed_abs, tag = 'smem constant byte address 0x4 - core index']
  #allocation1 [shape = 'u32[144,128]{1,0:T(1,128)}', space=vmem, size = 0x12000, scoped, tag = 'internal scratch']
  %s0 = inlined_call_operand.vmem [shape: f32[2,8,8,32], index: 0, kind: input, shape index: {}]
  %s1 = inlined_call_operand.vmem [shape: f32[2,8,96], index: 1, kind: input, shape index: {}]
  %s2 = inlined_call_operand.vmem [shape: f32[32,32], index: 2, kind: input, shape index: {}]
  %s3 = inlined_call_operand.vmem [shape: f32[1,32], index: 3, kind: input, shape index: {}]
  %s4 = inlined_call_operand.vmem [shape: f32[2,8,8,32], index: 4, kind: output, shape index: {0}]
  %s5 = inlined_call_operand.vmem [shape: f32[2,8,32], index: 5, kind: output, shape index: {1}]
  %s6 = inlined_call_operand.vmem [shape: f32[1,4,32], index: 6, kind: output, shape index: {2}]
  %7 = xla_tuple %s4, %s5, %s6
  %s8 = sld [smem:[#allocation0]]
  $region42: #{sparse_residual_gated_gcn_forward.12} parent=0
    _
  %s10 = ssub.s32 1, %s8
  %s11 = scalar_select 0, %s10, %s8
  // Predicated region
  $region2: #{sparse_residual_gated_gcn_forward.12} parent=0 // pred_check
    _
  $region3: #{sparse_residual_gated_gcn_forward.12} parent=0 // pred_check_branch
    %13 = sbr.rel (0) target = $region5
  $region4: #{sparse_residual_gated_gcn_forward.12} parent=0 // pred_region
    _
  $region5: #{sparse_residual_gated_gcn_forward.12} parent=0 // pred_fallthru
    _
  // Predicated region
  $region6: #{sparse_residual_gated_gcn_forward.12} parent=0 // pred_check
    _
  $region7: #{sparse_residual_gated_gcn_forward.12} parent=0 // pred_check_branch
    %15 = sbr.rel (0) target = $region9
  $region8: #{sparse_residual_gated_gcn_forward.12} parent=0 // pred_region
    _
  $region9: #{sparse_residual_gated_gcn_forward.12} parent=0 // pred_fallthru
    _
  // Predicated region
  $region10: #{sparse_residual_gated_gcn_forward.12} parent=0 // pred_check
    _
  $region11: #{sparse_residual_gated_gcn_forward.12} parent=0 // pred_check_branch
    %17 = sbr.rel (0) target = $region13
  $region12: #{sparse_residual_gated_gcn_forward.12} parent=0 // pred_region
    _
  $region13: #{sparse_residual_gated_gcn_forward.12} parent=0 // pred_fallthru
    _
  // Predicated region
  $region14: #{sparse_residual_gated_gcn_forward.12} parent=0 // pred_check
    _
  $region15: #{sparse_residual_gated_gcn_forward.12} parent=0 // pred_check_branch
    %19 = sbr.rel (0) target = $region17
  $region16: #{sparse_residual_gated_gcn_forward.12} parent=0 // pred_region
    _
  $region17: #{sparse_residual_gated_gcn_forward.12} parent=0 // pred_fallthru
    _
  %v20 = vld [vmem:[%s0] sm:$0xff]
  %v21 = vld [vmem:[%s0 + $0x8] sm:$0xff]
  %v22 = vld [vmem:[%s0 + $0x10] sm:$0xff]
  %v23 = vld [vmem:[%s0 + $0x18] sm:$0xff]
  %v24 = vld [vmem:[%s0 + $0x20] sm:$0xff]
  %v25 = vld [vmem:[%s0 + $0x28] sm:$0xff]
  %v26 = vld [vmem:[%s0 + $0x30] sm:$0xff]
  %v27 = vld [vmem:[%s0 + $0x38] sm:$0xff]
  %v28 = vld [vmem:[%s0 + $0x40] sm:$0xff]
  %v29 = vld [vmem:[%s0 + $0x48] sm:$0xff]
  %v30 = vld [vmem:[%s0 + $0x50] sm:$0xff]
  %v31 = vld [vmem:[%s0 + $0x58] sm:$0xff]
  %v32 = vld [vmem:[%s0 + $0x60] sm:$0xff]
  %v33 = vld [vmem:[%s0 + $0x68] sm:$0xff]
  %v34 = vld [vmem:[%s0 + $0x70] sm:$0xff]
  %v35 = vld [vmem:[%s0 + $0x78] sm:$0xff]
  %v36 = vld [vmem:[%s1] sm:$0xff]
  %v37 = vld [vmem:[%s1 + $0x8] sm:$0xff]
  %v38 = vld [vmem:[%s2] sm:$0xff]
  %v39 = vld [vmem:[%s2 + $0x8] sm:$0xff]
  %v40 = vld [vmem:[%s2 + $0x10] sm:$0xff]
  %v41 = vld [vmem:[%s2 + $0x18] sm:$0xff]
  %v42 = vld [vmem:[%s3] sm:$0x1]
  %v44 = vlaneseq
  %v45 = vshrl.u32 %v44, 7
  %v46 = vsub.s32 0, %v45
  %v47 = vrot.slane %v42, %v46
  %vm49 = vcmask 261120
  %v51 = vsel %vm49, %v20, 0
  %v54 = vsel %vm49, %v21, 0
  %v57 = vsel %vm49, %v22, 0
  %v60 = vsel %vm49, %v23, 0
  %v63 = vsel %vm49, %v24, 0
  %v66 = vsel %vm49, %v25, 0
  %v69 = vsel %vm49, %v26, 0
  %v72 = vsel %vm49, %v27, 0
  %v75 = vsel %vm49, %v28, 0
  %v78 = vsel %vm49, %v29, 0
  %v81 = vsel %vm49, %v30, 0
  %v84 = vsel %vm49, %v31, 0
  %v87 = vsel %vm49, %v32, 0
  %v90 = vsel %vm49, %v33, 0
  %v93 = vsel %vm49, %v34, 0
  %v96 = vsel %vm49, %v35, 0
  %98 = vmatprep.subr.mxu0 0.0
  %99 = vmatpush1.msra.mxu0 %v38
  %100 = vmatprep.subr.mxu0 0.0
  %101 = vmatpush1.msra.mxu0 %v39
  %102 = vmatprep.subr.mxu0 0.0
  %103 = vmatpush1.msra.mxu0 %v40
  %104 = vmatprep.subr.mxu0 0.0
  %105 = vmatpush1.msra.mxu0 %v41
  %106 = vmatprep.subr.mxu0 0.0
  %107 = vmatpush1.msra.mxu0 0.0
  %108 = vmatprep.subr.mxu0 0.0
  %109 = vmatpush1.msra.mxu0 0.0
  %110 = vmatprep.subr.mxu0 0.0
  %111 = vmatpush1.msra.mxu0 0.0
  %112 = vmatprep.subr.mxu0 0.0
  %113 = vmatpush1.msra.mxu0 0.0
  %114 = vmatprep.subr.mxu0 0.0
  %115 = vmatpush1.msra.mxu0 0.0
  %116 = vmatprep.subr.mxu0 0.0
  %117 = vmatpush1.msra.mxu0 0.0
  %118 = vmatprep.subr.mxu0 0.0
  %119 = vmatpush1.msra.mxu0 0.0
  %120 = vmatprep.subr.mxu0 0.0
  %121 = vmatpush1.msra.mxu0 0.0
  %122 = vmatprep.subr.mxu0 0.0
  %123 = vmatpush1.msra.mxu0 0.0
  %124 = vmatprep.subr.mxu0 0.0
  %125 = vmatpush1.msra.mxu0 0.0
  %126 = vmatprep.subr.mxu0 0.0
  %127 = vmatpush1.msra.mxu0 0.0
  %128 = vmatprep.subr.mxu0 0.0
  %129 = vmatpush1.msra.mxu0 0.0
  %130 = vmatprep.subr.mxu0 0.0
  %131 = vmatpush1.msra.mxu0 0.0
  %132 = vmatprep.subr.mxu0 0.0
  %133 = vmatpush1.msra.mxu0 0.0
  %134 = vmatprep.subr.mxu0 0.0
  %135 = vmatpush1.msra.mxu0 0.0
  %136 = vmatprep.subr.mxu0 0.0
  %137 = vmatpush1.msra.mxu0 0.0
  %138 = vmatprep.subr.mxu0 0.0
  %139 = vmatpush1.msra.mxu0 0.0
  %140 = vmatprep.subr.mxu0 0.0
  %141 = vmatpush1.msra.mxu0 0.0
  %142 = vmatprep.subr.mxu0 0.0
  %143 = vmatpush1.msra.mxu0 0.0
  %144 = vmatprep.subr.mxu0 0.0
  %145 = vmatpush1.msra.mxu0 0.0
  %146 = vmatprep.subr.mxu0 0.0
  %147 = vmatpush1.msra.mxu0 0.0
  %148 = vmatprep.subr.mxu0 0.0
  %149 = vmatpush1.msra.mxu0 0.0
  %150 = vmatprep.subr.mxu0 0.0
  %151 = vmatpush1.msra.mxu0 0.0
  %152 = vmatprep.subr.mxu0 0.0
  %153 = vmatpush1.msra.mxu0 0.0
  %154 = vmatprep.subr.mxu0 0.0
  %155 = vmatpush1.msra.mxu0 0.0
  %156 = vmatprep.subr.mxu0 0.0
  %157 = vmatpush1.msra.mxu0 0.0
  %158 = vmatprep.subr.mxu0 0.0
  %159 = vmatpush1.msra.mxu0 0.0
  %160 = vmatprep.subr.mxu0 0.0
  %161 = vmatpush1.msra.mxu0 0.0
  %162 = vmatprep.mubr.f32.mxu0 0.0
  %163 = vmatmul.mubr.f32.gmra.mrb[0].mxu0 %v51
  %v164 = vpop.f32.mrb[0].mxu0
  %v165 = vadd.f32 %v47, %v164
  %v166 = vpop.f32.mrb[0].mxu0
  %167 = vmatprep.mubr.f32.mxu0 0.0
  %168 = vmatmul.mubr.f32.gmra.mrb[0].mxu0 %v54
  %v169 = vpop.f32.mrb[0].mxu0
  %v170 = vadd.f32 %v47, %v169
  %v171 = vpop.f32.mrb[0].mxu0
  %172 = vmatprep.mubr.f32.mxu0 0.0
  %173 = vmatmul.mubr.f32.gmra.mrb[0].mxu0 %v57
  %v174 = vpop.f32.mrb[0].mxu0
  %v175 = vadd.f32 %v47, %v174
  %v176 = vpop.f32.mrb[0].mxu0
  %177 = vmatprep.mubr.f32.mxu0 0.0
  %178 = vmatmul.mubr.f32.gmra.mrb[0].mxu0 %v60
  %v179 = vpop.f32.mrb[0].mxu0
  %v180 = vadd.f32 %v47, %v179
  %v181 = vpop.f32.mrb[0].mxu0
  %182 = vmatprep.mubr.f32.mxu0 0.0
  %183 = vmatmul.mubr.f32.gmra.mrb[0].mxu0 %v63
  %v184 = vpop.f32.mrb[0].mxu0
  %v185 = vadd.f32 %v47, %v184
  %v186 = vpop.f32.mrb[0].mxu0
  %187 = vmatprep.mubr.f32.mxu0 0.0
  %188 = vmatmul.mubr.f32.gmra.mrb[0].mxu0 %v66
  %v189 = vpop.f32.mrb[0].mxu0
  %v190 = vadd.f32 %v47, %v189
  %v191 = vpop.f32.mrb[0].mxu0
  %192 = vmatprep.mubr.f32.mxu0 0.0
  %193 = vmatmul.mubr.f32.gmra.mrb[0].mxu0 %v69
  %v194 = vpop.f32.mrb[0].mxu0
  %v195 = vadd.f32 %v47, %v194
  %v196 = vpop.f32.mrb[0].mxu0
  %197 = vmatprep.mubr.f32.mxu0 0.0
  %198 = vmatmul.mubr.f32.gmra.mrb[0].mxu0 %v72
  %v199 = vpop.f32.mrb[0].mxu0
  %v200 = vadd.f32 %v47, %v199
  %v201 = vpop.f32.mrb[0].mxu0
  %202 = vmatprep.mubr.f32.mxu0 0.0
  %203 = vmatmul.mubr.f32.gmra.mrb[0].mxu0 %v75
  %v204 = vpop.f32.mrb[0].mxu0
  %v205 = vadd.f32 %v47, %v204
  %v206 = vpop.f32.mrb[0].mxu0
  %207 = vmatprep.mubr.f32.mxu0 0.0
  %208 = vmatmul.mubr.f32.gmra.mrb[0].mxu0 %v78
  %v209 = vpop.f32.mrb[0].mxu0
  %v210 = vadd.f32 %v47, %v209
  %v211 = vpop.f32.mrb[0].mxu0
  %212 = vmatprep.mubr.f32.mxu0 0.0
  %213 = vmatmul.mubr.f32.gmra.mrb[0].mxu0 %v81
  %v214 = vpop.f32.mrb[0].mxu0
  %v215 = vadd.f32 %v47, %v214
  %v216 = vpop.f32.mrb[0].mxu0
  %217 = vmatprep.mubr.f32.mxu0 0.0
  %218 = vmatmul.mubr.f32.gmra.mrb[0].mxu0 %v84
  %v219 = vpop.f32.mrb[0].mxu0
  %v220 = vadd.f32 %v47, %v219
  %v221 = vpop.f32.mrb[0].mxu0
  %222 = vmatprep.mubr.f32.mxu0 0.0
  %223 = vmatmul.mubr.f32.gmra.mrb[0].mxu0 %v87
  %v224 = vpop.f32.mrb[0].mxu0
  %v225 = vadd.f32 %v47, %v224
  %v226 = vpop.f32.mrb[0].mxu0
  %227 = vmatprep.mubr.f32.mxu0 0.0
  %228 = vmatmul.mubr.f32.gmra.mrb[0].mxu0 %v90
  %v229 = vpop.f32.mrb[0].mxu0
  %v230 = vadd.f32 %v47, %v229
  %v231 = vpop.f32.mrb[0].mxu0
  %232 = vmatprep.mubr.f32.mxu0 0.0
  %233 = vmatmul.mubr.f32.gmra.mrb[0].mxu0 %v93
  %v234 = vpop.f32.mrb[0].mxu0
  %v235 = vadd.f32 %v47, %v234
  %v236 = vpop.f32.mrb[0].mxu0
  %237 = vmatprep.mubr.f32.mxu0 0.0
  %238 = vmatmul.mubr.f32.gmra.mrb[0].mxu0 %v96
  %v239 = vpop.f32.mrb[0].mxu0
  %v240 = vadd.f32 %v47, %v239
  %v241 = vpop.f32.mrb[0].mxu0
  %242 = vdwg.mxu0
  %v245 = vcombine.high %v36, %v36
  %v247 = vunpack.c.l.s4 1966171168
  %v248 = vunpack.c.0.s8 %v247
  %v249 = vlaneseq
  %v250 = vshrl.u32 %v249, 7
  %v251 = vsub.s32 %v248, %v250
  %v252 = vrot.slane %v36, %v251
  %v254 = vunpack.c.l.s4 1966171168
  %v255 = vunpack.c.0.s8 %v254
  %v256 = vlaneseq
  %v257 = vshrl.u32 %v256, 7
  %v258 = vsub.s32 %v255, %v257
  %v259 = vrot.slane %v245, %v258
  %v260 = vcombine.high %v252, %v252
  %v261 = vcombine.high %v259, %v259
  %v263 = vunpack.c.l.s4 1966171168
  %v264 = vunpack.c.0.s8 %v263
  %v265 = vlaneseq
  %v266 = vshrl.u32 %v265, 7
  %v267 = vsub.s32 %v264, %v266
  %v268 = vrot.slane %v252, %v267
  %v270 = vunpack.c.l.s4 1966171168
  %v271 = vunpack.c.0.s8 %v270
  %v272 = vlaneseq
  %v273 = vshrl.u32 %v272, 7
  %v274 = vsub.s32 %v271, %v273
  %v275 = vrot.slane %v259, %v274
  %v277 = vunpack.c.l.s4 1966171168
  %v278 = vunpack.c.0.s8 %v277
  %v279 = vlaneseq
  %v280 = vshrl.u32 %v279, 7
  %v281 = vsub.s32 %v278, %v280
  %v282 = vrot.slane %v260, %v281
  %v284 = vunpack.c.l.s4 1966171168
  %v285 = vunpack.c.0.s8 %v284
  %v286 = vlaneseq
  %v287 = vshrl.u32 %v286, 7
  %v288 = vsub.s32 %v285, %v287
  %v289 = vrot.slane %v261, %v288
  %v290 = vcombine.high %v268, %v268
  %v291 = vcombine.high %v275, %v275
  %v292 = vcombine.high %v282, %v282
  %v293 = vcombine.high %v289, %v289
  %v294 = vcombine.high %v37, %v37
  %v296 = vunpack.c.l.s4 1966171168
  %v297 = vunpack.c.0.s8 %v296
  %v298 = vlaneseq
  %v299 = vshrl.u32 %v298, 7
  %v300 = vsub.s32 %v297, %v299
  %v301 = vrot.slane %v37, %v300
  %v303 = vunpack.c.l.s4 1966171168
  %v304 = vunpack.c.0.s8 %v303
  %v305 = vlaneseq
  %v306 = vshrl.u32 %v305, 7
  %v307 = vsub.s32 %v304, %v306
  %v308 = vrot.slane %v294, %v307
  %v309 = vcombine.high %v301, %v301
  %v310 = vcombine.high %v308, %v308
  %v312 = vunpack.c.l.s4 1966171168
  %v313 = vunpack.c.0.s8 %v312
  %v314 = vlaneseq
  %v315 = vshrl.u32 %v314, 7
  %v316 = vsub.s32 %v313, %v315
  %v317 = vrot.slane %v301, %v316
  %v319 = vunpack.c.l.s4 1966171168
  %v320 = vunpack.c.0.s8 %v319
  %v321 = vlaneseq
  %v322 = vshrl.u32 %v321, 7
  %v323 = vsub.s32 %v320, %v322
  %v324 = vrot.slane %v308, %v323
  %v326 = vunpack.c.l.s4 1966171168
  %v327 = vunpack.c.0.s8 %v326
  %v328 = vlaneseq
  %v329 = vshrl.u32 %v328, 7
  %v330 = vsub.s32 %v327, %v329
  %v331 = vrot.slane %v309, %v330
  %v333 = vunpack.c.l.s4 1966171168
  %v334 = vunpack.c.0.s8 %v333
  %v335 = vlaneseq
  %v336 = vshrl.u32 %v335, 7
  %v337 = vsub.s32 %v334, %v336
  %v338 = vrot.slane %v310, %v337
  %v339 = vcombine.high %v317, %v317
  %v340 = vcombine.high %v324, %v324
  %v341 = vcombine.high %v331, %v331
  %v342 = vcombine.high %v338, %v338
  %v343 = vlaneseq
  %v344 = vshrl.u32 %v343, 7
  %v345 = vsub.s32 0, %v344
  %v346 = vrot.slane %v268, %v345
  %v347 = vlaneseq
  %v348 = vshrl.u32 %v347, 7
  %v349 = vsub.s32 0, %v348
  %v350 = vrot.slane %v282, %v349
  %v351 = vlaneseq
  %v352 = vshrl.u32 %v351, 7
  %v353 = vsub.s32 0, %v352
  %v354 = vrot.slane %v290, %v353
  %v355 = vlaneseq
  %v356 = vshrl.u32 %v355, 7
  %v357 = vsub.s32 0, %v356
  %v358 = vrot.slane %v292, %v357
  %v359 = vlaneseq
  %v360 = vshrl.u32 %v359, 7
  %v361 = vsub.s32 0, %v360
  %v362 = vrot.slane %v275, %v361
  %v363 = vlaneseq
  %v364 = vshrl.u32 %v363, 7
  %v365 = vsub.s32 0, %v364
  %v366 = vrot.slane %v289, %v365
  %v367 = vlaneseq
  %v368 = vshrl.u32 %v367, 7
  %v369 = vsub.s32 0, %v368
  %v370 = vrot.slane %v291, %v369
  %v371 = vlaneseq
  %v372 = vshrl.u32 %v371, 7
  %v373 = vsub.s32 0, %v372
  %v374 = vrot.slane %v293, %v373
  %v375 = vlaneseq
  %v376 = vshrl.u32 %v375, 7
  %v377 = vsub.s32 0, %v376
  %v378 = vrot.slane %v317, %v377
  %v379 = vlaneseq
  %v380 = vshrl.u32 %v379, 7
  %v381 = vsub.s32 0, %v380
  %v382 = vrot.slane %v331, %v381
  %v383 = vlaneseq
  %v384 = vshrl.u32 %v383, 7
  %v385 = vsub.s32 0, %v384
  %v386 = vrot.slane %v339, %v385
  %v387 = vlaneseq
  %v388 = vshrl.u32 %v387, 7
  %v389 = vsub.s32 0, %v388
  %v390 = vrot.slane %v341, %v389
  %v391 = vlaneseq
  %v392 = vshrl.u32 %v391, 7
  %v393 = vsub.s32 0, %v392
  %v394 = vrot.slane %v324, %v393
  %v395 = vlaneseq
  %v396 = vshrl.u32 %v395, 7
  %v397 = vsub.s32 0, %v396
  %v398 = vrot.slane %v338, %v397
  %v399 = vlaneseq
  %v400 = vshrl.u32 %v399, 7
  %v401 = vsub.s32 0, %v400
  %v402 = vrot.slane %v340, %v401
  %v403 = vlaneseq
  %v404 = vshrl.u32 %v403, 7
  %v405 = vsub.s32 0, %v404
  %v406 = vrot.slane %v342, %v405
  %v423 = vadd.f32 %v165, %v346
  %v424 = vadd.f32 %v170, %v350
  %v425 = vadd.f32 %v175, %v354
  %v426 = vadd.f32 %v180, %v358
  %v427 = vadd.f32 %v185, %v362
  %v428 = vadd.f32 %v190, %v366
  %v429 = vadd.f32 %v195, %v370
  %v430 = vadd.f32 %v200, %v374
  %v431 = vadd.f32 %v205, %v378
  %v432 = vadd.f32 %v210, %v382
  %v433 = vadd.f32 %v215, %v386
  %v434 = vadd.f32 %v220, %v390
  %v435 = vadd.f32 %v225, %v394
  %v436 = vadd.f32 %v230, %v398
  %v437 = vadd.f32 %v235, %v402
  %v438 = vadd.f32 %v240, %v406
  %v439 = vadd.f32 %v423, %v36
  %v440 = vadd.f32 %v424, %v36
  %v441 = vadd.f32 %v425, %v36
  %v442 = vadd.f32 %v426, %v36
  %v443 = vadd.f32 %v427, %v36
  %v444 = vadd.f32 %v428, %v36
  %v445 = vadd.f32 %v429, %v36
  %v446 = vadd.f32 %v430, %v36
  %v447 = vadd.f32 %v431, %v37
  %v448 = vadd.f32 %v432, %v37
  %v449 = vadd.f32 %v433, %v37
  %v450 = vadd.f32 %v434, %v37
  %v451 = vadd.f32 %v435, %v37
  %v452 = vadd.f32 %v436, %v37
  %v453 = vadd.f32 %v437, %v37
  %v454 = vadd.f32 %v438, %v37
  %v455 = vxor.u32 %v439, 2147483648
  %v456 = vxor.u32 %v440, 2147483648
  %v457 = vxor.u32 %v441, 2147483648
  %v458 = vxor.u32 %v442, 2147483648
  %v459 = vxor.u32 %v443, 2147483648
  %v460 = vxor.u32 %v444, 2147483648
  %v461 = vxor.u32 %v445, 2147483648
  %v462 = vxor.u32 %v446, 2147483648
  %v463 = vxor.u32 %v447, 2147483648
  %v464 = vxor.u32 %v448, 2147483648
  %v465 = vxor.u32 %v449, 2147483648
  %v466 = vxor.u32 %v450, 2147483648
  %v467 = vxor.u32 %v451, 2147483648
  %v468 = vxor.u32 %v452, 2147483648
  %v469 = vxor.u32 %v453, 2147483648
  %v470 = vxor.u32 %v454, 2147483648
  %v471 = vmul.f32 %v455, 1.442695
  %v472 = vpow.pop %v471
  %v473 = vmul.f32 %v456, 1.442695
  %v474 = vpow.pop %v473
  %v475 = vmul.f32 %v457, 1.442695
  %v476 = vpow.pop %v475
  %v477 = vmul.f32 %v458, 1.442695
  %v478 = vpow.pop %v477
  %v479 = vmul.f32 %v459, 1.442695
  %v480 = vpow.pop %v479
  %v481 = vmul.f32 %v460, 1.442695
  %v482 = vpow.pop %v481
  %v483 = vmul.f32 %v461, 1.442695
  %v484 = vpow.pop %v483
  %v485 = vmul.f32 %v462, 1.442695
  %v486 = vpow.pop %v485
  %v487 = vmul.f32 %v463, 1.442695
  %v488 = vpow.pop %v487
  %v489 = vmul.f32 %v464, 1.442695
  %v490 = vpow.pop %v489
  %v491 = vmul.f32 %v465, 1.442695
  %v492 = vpow.pop %v491
  %v493 = vmul.f32 %v466, 1.442695
  %v494 = vpow.pop %v493
  %v495 = vmul.f32 %v467, 1.442695
  %v496 = vpow.pop %v495
  %v497 = vmul.f32 %v468, 1.442695
  %v498 = vpow.pop %v497
  %v499 = vmul.f32 %v469, 1.442695
  %v500 = vpow.pop %v499
  %v501 = vmul.f32 %v470, 1.442695
  %v502 = vpow.pop %v501
  %v503 = vadd.f32 %v472, 1.0
  %v504 = vadd.f32 %v474, 1.0
  %v505 = vadd.f32 %v476, 1.0
  %v506 = vadd.f32 %v478, 1.0
  %v507 = vadd.f32 %v480, 1.0
  %v508 = vadd.f32 %v482, 1.0
  %v509 = vadd.f32 %v484, 1.0
  %v510 = vadd.f32 %v486, 1.0
  %v511 = vadd.f32 %v488, 1.0
  %v512 = vadd.f32 %v490, 1.0
  %v513 = vadd.f32 %v492, 1.0
  %v514 = vadd.f32 %v494, 1.0
  %v515 = vadd.f32 %v496, 1.0
  %v516 = vadd.f32 %v498, 1.0
  %v517 = vadd.f32 %v500, 1.0
  %v518 = vadd.f32 %v502, 1.0
  %v519 = vrcp.pop %v503
  %v520 = vmul.f32 1.0, %v519
  %v521 = vrcp.pop %v504
  %v522 = vmul.f32 1.0, %v521
  %v523 = vrcp.pop %v505
  %v524 = vmul.f32 1.0, %v523
  %v525 = vrcp.pop %v506
  %v526 = vmul.f32 1.0, %v525
  %v527 = vrcp.pop %v507
  %v528 = vmul.f32 1.0, %v527
  %v529 = vrcp.pop %v508
  %v530 = vmul.f32 1.0, %v529
  %v531 = vrcp.pop %v509
  %v532 = vmul.f32 1.0, %v531
  %v533 = vrcp.pop %v510
  %v534 = vmul.f32 1.0, %v533
  %v535 = vrcp.pop %v511
  %v536 = vmul.f32 1.0, %v535
  %v537 = vrcp.pop %v512
  %v538 = vmul.f32 1.0, %v537
  %v539 = vrcp.pop %v513
  %v540 = vmul.f32 1.0, %v539
  %v541 = vrcp.pop %v514
  %v542 = vmul.f32 1.0, %v541
  %v543 = vrcp.pop %v515
  %v544 = vmul.f32 1.0, %v543
  %v545 = vrcp.pop %v516
  %v546 = vmul.f32 1.0, %v545
  %v547 = vrcp.pop %v517
  %v548 = vmul.f32 1.0, %v547
  %v549 = vrcp.pop %v518
  %v550 = vmul.f32 1.0, %v549
  %551 = vrot.lane.b32.xlu0 %v36, 64
  %v552 = vpop.permute.xlu0 %551
  %553 = vrot.lane.b32.xlu0 %v37, 64
  %v554 = vpop.permute.xlu0 %553
  %v557 = vmul.f32 %v520, %v552
  %v558 = vmul.f32 %v522, %v552
  %v559 = vmul.f32 %v524, %v552
  %v560 = vmul.f32 %v526, %v552
  %v561 = vmul.f32 %v528, %v552
  %v562 = vmul.f32 %v530, %v552
  %v563 = vmul.f32 %v532, %v552
  %v564 = vmul.f32 %v534, %v552
  %v565 = vmul.f32 %v536, %v554
  %v566 = vmul.f32 %v538, %v554
  %v567 = vmul.f32 %v540, %v554
  %v568 = vmul.f32 %v542, %v554
  %v569 = vmul.f32 %v544, %v554
  %v570 = vmul.f32 %v546, %v554
  %v571 = vmul.f32 %v548, %v554
  %v572 = vmul.f32 %v550, %v554
  %v573 = vsel %vm49, %v557, 0.0
  %v574 = vrot.slane %v573, 4
  %v575 = vadd.f32 %v573, %v574
  %v576 = vrot.slane %v575, 2
  %v577 = vadd.f32 %v575, %v576
  %v578 = vrot.slane %v577, 1
  %v579 = vadd.f32 %v577, %v578
  %v580 = vsel %vm49, %v558, 0.0
  %v581 = vrot.slane %v580, 4
  %v582 = vadd.f32 %v580, %v581
  %v583 = vrot.slane %v582, 2
  %v584 = vadd.f32 %v582, %v583
  %v585 = vrot.slane %v584, 1
  %v586 = vadd.f32 %v584, %v585
  %v587 = vsel %vm49, %v559, 0.0
  %v588 = vrot.slane %v587, 4
  %v589 = vadd.f32 %v587, %v588
  %v590 = vrot.slane %v589, 2
  %v591 = vadd.f32 %v589, %v590
  %v592 = vrot.slane %v591, 1
  %v593 = vadd.f32 %v591, %v592
  %v594 = vsel %vm49, %v560, 0.0
  %v595 = vrot.slane %v594, 4
  %v596 = vadd.f32 %v594, %v595
  %v597 = vrot.slane %v596, 2
  %v598 = vadd.f32 %v596, %v597
  %v599 = vrot.slane %v598, 1
  %v600 = vadd.f32 %v598, %v599
  %v601 = vsel %vm49, %v561, 0.0
  %v602 = vrot.slane %v601, 4
  %v603 = vadd.f32 %v601, %v602
  %v604 = vrot.slane %v603, 2
  %v605 = vadd.f32 %v603, %v604
  %v606 = vrot.slane %v605, 1
  %v607 = vadd.f32 %v605, %v606
  %v608 = vsel %vm49, %v562, 0.0
  %v609 = vrot.slane %v608, 4
  %v610 = vadd.f32 %v608, %v609
  %v611 = vrot.slane %v610, 2
  %v612 = vadd.f32 %v610, %v611
  %v613 = vrot.slane %v612, 1
  %v614 = vadd.f32 %v612, %v613
  %v615 = vsel %vm49, %v563, 0.0
  %v616 = vrot.slane %v615, 4
  %v617 = vadd.f32 %v615, %v616
  %v618 = vrot.slane %v617, 2
  %v619 = vadd.f32 %v617, %v618
  %v620 = vrot.slane %v619, 1
  %v621 = vadd.f32 %v619, %v620
  %v622 = vsel %vm49, %v564, 0.0
  %v623 = vrot.slane %v622, 4
  %v624 = vadd.f32 %v622, %v623
  %v625 = vrot.slane %v624, 2
  %v626 = vadd.f32 %v624, %v625
  %v627 = vrot.slane %v626, 1
  %v628 = vadd.f32 %v626, %v627
  %v629 = vsel %vm49, %v565, 0.0
  %v630 = vrot.slane %v629, 4
  %v631 = vadd.f32 %v629, %v630
  %v632 = vrot.slane %v631, 2
  %v633 = vadd.f32 %v631, %v632
  %v634 = vrot.slane %v633, 1
  %v635 = vadd.f32 %v633, %v634
  %v636 = vsel %vm49, %v566, 0.0
  %v637 = vrot.slane %v636, 4
  %v638 = vadd.f32 %v636, %v637
  %v639 = vrot.slane %v638, 2
  %v640 = vadd.f32 %v638, %v639
  %v641 = vrot.slane %v640, 1
  %v642 = vadd.f32 %v640, %v641
  %v643 = vsel %vm49, %v567, 0.0
  %v644 = vrot.slane %v643, 4
  %v645 = vadd.f32 %v643, %v644
  %v646 = vrot.slane %v645, 2
  %v647 = vadd.f32 %v645, %v646
  %v648 = vrot.slane %v647, 1
  %v649 = vadd.f32 %v647, %v648
  %v650 = vsel %vm49, %v568, 0.0
  %v651 = vrot.slane %v650, 4
  %v652 = vadd.f32 %v650, %v651
  %v653 = vrot.slane %v652, 2
  %v654 = vadd.f32 %v652, %v653
  %v655 = vrot.slane %v654, 1
  %v656 = vadd.f32 %v654, %v655
  %v657 = vsel %vm49, %v569, 0.0
  %v658 = vrot.slane %v657, 4
  %v659 = vadd.f32 %v657, %v658
  %v660 = vrot.slane %v659, 2
  %v661 = vadd.f32 %v659, %v660
  %v662 = vrot.slane %v661, 1
  %v663 = vadd.f32 %v661, %v662
  %v664 = vsel %vm49, %v570, 0.0
  %v665 = vrot.slane %v664, 4
  %v666 = vadd.f32 %v664, %v665
  %v667 = vrot.slane %v666, 2
  %v668 = vadd.f32 %v666, %v667
  %v669 = vrot.slane %v668, 1
  %v670 = vadd.f32 %v668, %v669
  %v671 = vsel %vm49, %v571, 0.0
  %v672 = vrot.slane %v671, 4
  %v673 = vadd.f32 %v671, %v672
  %v674 = vrot.slane %v673, 2
  %v675 = vadd.f32 %v673, %v674
  %v676 = vrot.slane %v675, 1
  %v677 = vadd.f32 %v675, %v676
  %v678 = vsel %vm49, %v572, 0.0
  %v679 = vrot.slane %v678, 4
  %v680 = vadd.f32 %v678, %v679
  %v681 = vrot.slane %v680, 2
  %v682 = vadd.f32 %v680, %v681
  %v683 = vrot.slane %v682, 1
  %v684 = vadd.f32 %v682, %v683
  %v685 = vsel %vm49, %v520, 0.0
  %v686 = vrot.slane %v685, 4
  %v687 = vadd.f32 %v685, %v686
  %v688 = vrot.slane %v687, 2
  %v689 = vadd.f32 %v687, %v688
  %v690 = vrot.slane %v689, 1
  %v691 = vadd.f32 %v689, %v690
  %v692 = vsel %vm49, %v522, 0.0
  %v693 = vrot.slane %v692, 4
  %v694 = vadd.f32 %v692, %v693
  %v695 = vrot.slane %v694, 2
  %v696 = vadd.f32 %v694, %v695
  %v697 = vrot.slane %v696, 1
  %v698 = vadd.f32 %v696, %v697
  %v699 = vsel %vm49, %v524, 0.0
  %v700 = vrot.slane %v699, 4
  %v701 = vadd.f32 %v699, %v700
  %v702 = vrot.slane %v701, 2
  %v703 = vadd.f32 %v701, %v702
  %v704 = vrot.slane %v703, 1
  %v705 = vadd.f32 %v703, %v704
  %v706 = vsel %vm49, %v526, 0.0
  %v707 = vrot.slane %v706, 4
  %v708 = vadd.f32 %v706, %v707
  %v709 = vrot.slane %v708, 2
  %v710 = vadd.f32 %v708, %v709
  %v711 = vrot.slane %v710, 1
  %v712 = vadd.f32 %v710, %v711
  %v713 = vsel %vm49, %v528, 0.0
  %v714 = vrot.slane %v713, 4
  %v715 = vadd.f32 %v713, %v714
  %v716 = vrot.slane %v715, 2
  %v717 = vadd.f32 %v715, %v716
  %v718 = vrot.slane %v717, 1
  %v719 = vadd.f32 %v717, %v718
  %v720 = vsel %vm49, %v530, 0.0
  %v721 = vrot.slane %v720, 4
  %v722 = vadd.f32 %v720, %v721
  %v723 = vrot.slane %v722, 2
  %v724 = vadd.f32 %v722, %v723
  %v725 = vrot.slane %v724, 1
  %v726 = vadd.f32 %v724, %v725
  %v727 = vsel %vm49, %v532, 0.0
  %v728 = vrot.slane %v727, 4
  %v729 = vadd.f32 %v727, %v728
  %v730 = vrot.slane %v729, 2
  %v731 = vadd.f32 %v729, %v730
  %v732 = vrot.slane %v731, 1
  %v733 = vadd.f32 %v731, %v732
  %v734 = vsel %vm49, %v534, 0.0
  %v735 = vrot.slane %v734, 4
  %v736 = vadd.f32 %v734, %v735
  %v737 = vrot.slane %v736, 2
  %v738 = vadd.f32 %v736, %v737
  %v739 = vrot.slane %v738, 1
  %v740 = vadd.f32 %v738, %v739
  %v741 = vsel %vm49, %v536, 0.0
  %v742 = vrot.slane %v741, 4
  %v743 = vadd.f32 %v741, %v742
  %v744 = vrot.slane %v743, 2
  %v745 = vadd.f32 %v743, %v744
  %v746 = vrot.slane %v745, 1
  %v747 = vadd.f32 %v745, %v746
  %v748 = vsel %vm49, %v538, 0.0
  %v749 = vrot.slane %v748, 4
  %v750 = vadd.f32 %v748, %v749
  %v751 = vrot.slane %v750, 2
  %v752 = vadd.f32 %v750, %v751
  %v753 = vrot.slane %v752, 1
  %v754 = vadd.f32 %v752, %v753
  %v755 = vsel %vm49, %v540, 0.0
  %v756 = vrot.slane %v755, 4
  %v757 = vadd.f32 %v755, %v756
  %v758 = vrot.slane %v757, 2
  %v759 = vadd.f32 %v757, %v758
  %v760 = vrot.slane %v759, 1
  %v761 = vadd.f32 %v759, %v760
  %v762 = vsel %vm49, %v542, 0.0
  %v763 = vrot.slane %v762, 4
  %v764 = vadd.f32 %v762, %v763
  %v765 = vrot.slane %v764, 2
  %v766 = vadd.f32 %v764, %v765
  %v767 = vrot.slane %v766, 1
  %v768 = vadd.f32 %v766, %v767
  %v769 = vsel %vm49, %v544, 0.0
  %v770 = vrot.slane %v769, 4
  %v771 = vadd.f32 %v769, %v770
  %v772 = vrot.slane %v771, 2
  %v773 = vadd.f32 %v771, %v772
  %v774 = vrot.slane %v773, 1
  %v775 = vadd.f32 %v773, %v774
  %v776 = vsel %vm49, %v546, 0.0
  %v777 = vrot.slane %v776, 4
  %v778 = vadd.f32 %v776, %v777
  %v779 = vrot.slane %v778, 2
  %v780 = vadd.f32 %v778, %v779
  %v781 = vrot.slane %v780, 1
  %v782 = vadd.f32 %v780, %v781
  %v783 = vsel %vm49, %v548, 0.0
  %v784 = vrot.slane %v783, 4
  %v785 = vadd.f32 %v783, %v784
  %v786 = vrot.slane %v785, 2
  %v787 = vadd.f32 %v785, %v786
  %v788 = vrot.slane %v787, 1
  %v789 = vadd.f32 %v787, %v788
  %v790 = vsel %vm49, %v550, 0.0
  %v791 = vrot.slane %v790, 4
  %v792 = vadd.f32 %v790, %v791
  %v793 = vrot.slane %v792, 2
  %v794 = vadd.f32 %v792, %v793
  %v795 = vrot.slane %v794, 1
  %v796 = vadd.f32 %v794, %v795
  %v797 = vadd.f32 %v691, 1e-20
  %v798 = vadd.f32 %v698, 1e-20
  %v799 = vadd.f32 %v705, 1e-20
  %v800 = vadd.f32 %v712, 1e-20
  %v801 = vadd.f32 %v719, 1e-20
  %v802 = vadd.f32 %v726, 1e-20
  %v803 = vadd.f32 %v733, 1e-20
  %v804 = vadd.f32 %v740, 1e-20
  %v805 = vadd.f32 %v747, 1e-20
  %v806 = vadd.f32 %v754, 1e-20
  %v807 = vadd.f32 %v761, 1e-20
  %v808 = vadd.f32 %v768, 1e-20
  %v809 = vadd.f32 %v775, 1e-20
  %v810 = vadd.f32 %v782, 1e-20
  %v811 = vadd.f32 %v789, 1e-20
  %v812 = vadd.f32 %v796, 1e-20
  %v813 = vrcp.pop %v797
  %v814 = vrcp.pop %v798
  %v815 = vrcp.pop %v799
  %v816 = vrcp.pop %v800
  %v817 = vrcp.pop %v801
  %v818 = vrcp.pop %v802
  %v819 = vrcp.pop %v803
  %v820 = vrcp.pop %v804
  %v821 = vrcp.pop %v805
  %v822 = vrcp.pop %v806
  %v823 = vrcp.pop %v807
  %v824 = vrcp.pop %v808
  %v825 = vrcp.pop %v809
  %v826 = vrcp.pop %v810
  %v827 = vrcp.pop %v811
  %v828 = vrcp.pop %v812
  %v829 = vmul.f32 %v579, %v813
  %v830 = vmul.f32 %v586, %v814
  %v831 = vmul.f32 %v593, %v815
  %v832 = vmul.f32 %v600, %v816
  %v833 = vmul.f32 %v607, %v817
  %v834 = vmul.f32 %v614, %v818
  %v835 = vmul.f32 %v621, %v819
  %v836 = vmul.f32 %v628, %v820
  %v837 = vmul.f32 %v635, %v821
  %v838 = vmul.f32 %v642, %v822
  %v839 = vmul.f32 %v649, %v823
  %v840 = vmul.f32 %v656, %v824
  %v841 = vmul.f32 %v663, %v825
  %v842 = vmul.f32 %v670, %v826
  %v843 = vmul.f32 %v677, %v827
  %v844 = vmul.f32 %v684, %v828
  %vm861 = vcmask 1041409
  %v862 = vsel %vm861, %v830, %v829
  %vm863 = vcmask 1042434
  %v864 = vsel %vm863, %v831, %v862
  %vm865 = vcmask 1043459
  %v866 = vsel %vm865, %v832, %v864
  %vm867 = vcmask 1044484
  %v868 = vsel %vm867, %v833, %v866
  %vm869 = vcmask 1045509
  %v870 = vsel %vm869, %v834, %v868
  %vm871 = vcmask 1046534
  %v872 = vsel %vm871, %v835, %v870
  %vm873 = vcmask 1047559
  %v874 = vsel %vm873, %v836, %v872
  %v875 = vsel %vm861, %v838, %v837
  %v876 = vsel %vm863, %v839, %v875
  %v877 = vsel %vm865, %v840, %v876
  %v878 = vsel %vm867, %v841, %v877
  %v879 = vsel %vm869, %v842, %v878
  %v880 = vsel %vm871, %v843, %v879
  %v881 = vsel %vm873, %v844, %v880
  %882 = vrot.lane.b32.xlu0 %v874, 32
  %v883 = vpop.permute.xlu0 %882
  %884 = vrot.lane.b32.xlu0 %v881, 32
  %v885 = vpop.permute.xlu0 %884
  %v888 = vadd.f32 %v36, %v883
  %v889 = vadd.f32 %v37, %v885
  %890 = vst.msk [vmem:[%s4] sm:$0xff] %vm49, %v439
  %891 = vst.msk [vmem:[%s4 + $0x8] sm:$0xff] %vm49, %v440
  %892 = vst.msk [vmem:[%s4 + $0x10] sm:$0xff] %vm49, %v441
  %893 = vst.msk [vmem:[%s4 + $0x18] sm:$0xff] %vm49, %v442
  %894 = vst.msk [vmem:[%s4 + $0x20] sm:$0xff] %vm49, %v443
  %895 = vst.msk [vmem:[%s4 + $0x28] sm:$0xff] %vm49, %v444
  %896 = vst.msk [vmem:[%s4 + $0x30] sm:$0xff] %vm49, %v445
  %897 = vst.msk [vmem:[%s4 + $0x38] sm:$0xff] %vm49, %v446
  %898 = vst.msk [vmem:[%s4 + $0x40] sm:$0xff] %vm49, %v447
  %899 = vst.msk [vmem:[%s4 + $0x48] sm:$0xff] %vm49, %v448
  %900 = vst.msk [vmem:[%s4 + $0x50] sm:$0xff] %vm49, %v449
  %901 = vst.msk [vmem:[%s4 + $0x58] sm:$0xff] %vm49, %v450
  %902 = vst.msk [vmem:[%s4 + $0x60] sm:$0xff] %vm49, %v451
  %903 = vst.msk [vmem:[%s4 + $0x68] sm:$0xff] %vm49, %v452
  %904 = vst.msk [vmem:[%s4 + $0x70] sm:$0xff] %vm49, %v453
  %905 = vst.msk [vmem:[%s4 + $0x78] sm:$0xff] %vm49, %v454
  %908 = vrot.lane.b32.xlu0 %v888, 96
  %v909 = vpop.permute.xlu0 %908
  %910 = vrot.lane.b32.xlu0 %v889, 96
  %v911 = vpop.permute.xlu0 %910
  %914 = vst.msk [vmem:[%s5] sm:$0xff] %vm49, %v909
  %915 = vst.msk [vmem:[%s5 + $0x8] sm:$0xff] %vm49, %v911
  %v916 = vsel %vm49, %v439, 0.0
  %v917 = vsel %vm49, %v440, 0.0
  %v918 = vadd.f32 %v916, %v917
  %v919 = vsel %vm49, %v441, 0.0
  %v920 = vadd.f32 %v918, %v919
  %v921 = vsel %vm49, %v442, 0.0
  %v922 = vadd.f32 %v920, %v921
  %v923 = vsel %vm49, %v443, 0.0
  %v924 = vadd.f32 %v922, %v923
  %v925 = vsel %vm49, %v444, 0.0
  %v926 = vadd.f32 %v924, %v925
  %v927 = vsel %vm49, %v445, 0.0
  %v928 = vadd.f32 %v926, %v927
  %v929 = vsel %vm49, %v446, 0.0
  %v930 = vadd.f32 %v928, %v929
  %v931 = vsel %vm49, %v447, 0.0
  %v932 = vadd.f32 %v930, %v931
  %v933 = vsel %vm49, %v448, 0.0
  %v934 = vadd.f32 %v932, %v933
  %v935 = vsel %vm49, %v449, 0.0
  %v936 = vadd.f32 %v934, %v935
  %v937 = vsel %vm49, %v450, 0.0
  %v938 = vadd.f32 %v936, %v937
  %v939 = vsel %vm49, %v451, 0.0
  %v940 = vadd.f32 %v938, %v939
  %v941 = vsel %vm49, %v452, 0.0
  %v942 = vadd.f32 %v940, %v941
  %v943 = vsel %vm49, %v453, 0.0
  %v944 = vadd.f32 %v942, %v943
  %v945 = vsel %vm49, %v454, 0.0
  %v946 = vadd.f32 %v944, %v945
  %v947 = vrot.slane %v946, 4
  %v948 = vadd.f32 %v946, %v947
  %v949 = vrot.slane %v948, 2
  %v950 = vadd.f32 %v948, %v949
  %v951 = vrot.slane %v950, 1
  %v952 = vadd.f32 %v950, %v951
  %v953 = vmul.f32 %v439, %v439
  %v954 = vmul.f32 %v440, %v440
  %v955 = vmul.f32 %v441, %v441
  %v956 = vmul.f32 %v442, %v442
  %v957 = vmul.f32 %v443, %v443
  %v958 = vmul.f32 %v444, %v444
  %v959 = vmul.f32 %v445, %v445
  %v960 = vmul.f32 %v446, %v446
  %v961 = vmul.f32 %v447, %v447
  %v962 = vmul.f32 %v448, %v448
  %v963 = vmul.f32 %v449, %v449
  %v964 = vmul.f32 %v450, %v450
  %v965 = vmul.f32 %v451, %v451
  %v966 = vmul.f32 %v452, %v452
  %v967 = vmul.f32 %v453, %v453
  %v968 = vmul.f32 %v454, %v454
  %v969 = vsel %vm49, %v953, 0.0
  %v970 = vsel %vm49, %v954, 0.0
  %v971 = vadd.f32 %v969, %v970
  %v972 = vsel %vm49, %v955, 0.0
  %v973 = vadd.f32 %v971, %v972
  %v974 = vsel %vm49, %v956, 0.0
  %v975 = vadd.f32 %v973, %v974
  %v976 = vsel %vm49, %v957, 0.0
  %v977 = vadd.f32 %v975, %v976
  %v978 = vsel %vm49, %v958, 0.0
  %v979 = vadd.f32 %v977, %v978
  %v980 = vsel %vm49, %v959, 0.0
  %v981 = vadd.f32 %v979, %v980
  %v982 = vsel %vm49, %v960, 0.0
  %v983 = vadd.f32 %v981, %v982
  %v984 = vsel %vm49, %v961, 0.0
  %v985 = vadd.f32 %v983, %v984
  %v986 = vsel %vm49, %v962, 0.0
  %v987 = vadd.f32 %v985, %v986
  %v988 = vsel %vm49, %v963, 0.0
  %v989 = vadd.f32 %v987, %v988
  %v990 = vsel %vm49, %v964, 0.0
  %v991 = vadd.f32 %v989, %v990
  %v992 = vsel %vm49, %v965, 0.0
  %v993 = vadd.f32 %v991, %v992
  %v994 = vsel %vm49, %v966, 0.0
  %v995 = vadd.f32 %v993, %v994
  %v996 = vsel %vm49, %v967, 0.0
  %v997 = vadd.f32 %v995, %v996
  %v998 = vsel %vm49, %v968, 0.0
  %v999 = vadd.f32 %v997, %v998
  %v1000 = vrot.slane %v999, 4
  %v1001 = vadd.f32 %v999, %v1000
  %v1002 = vrot.slane %v1001, 2
  %v1003 = vadd.f32 %v1001, %v1002
  %v1004 = vrot.slane %v1003, 1
  %v1005 = vadd.f32 %v1003, %v1004
  %vm1006 = vcmask 523520
  %v1007 = vsel %vm1006, %v888, 0.0
  %v1008 = vsel %vm1006, %v889, 0.0
  %v1009 = vadd.f32 %v1007, %v1008
  %v1010 = vrot.slane %v1009, 4
  %v1011 = vadd.f32 %v1009, %v1010
  %v1012 = vrot.slane %v1011, 2
  %v1013 = vadd.f32 %v1011, %v1012
  %v1014 = vrot.slane %v1013, 1
  %v1015 = vadd.f32 %v1013, %v1014
  %v1016 = vmul.f32 %v888, %v888
  %v1017 = vmul.f32 %v889, %v889
  %v1018 = vsel %vm1006, %v1016, 0.0
  %v1019 = vsel %vm1006, %v1017, 0.0
  %v1020 = vadd.f32 %v1018, %v1019
  %v1021 = vrot.slane %v1020, 4
  %v1022 = vadd.f32 %v1020, %v1021
  %v1023 = vrot.slane %v1022, 2
  %v1024 = vadd.f32 %v1022, %v1023
  %v1025 = vrot.slane %v1024, 1
  %v1026 = vadd.f32 %v1024, %v1025
  %1028 = vrot.lane.b32.xlu0 %v1015, 96
  %v1029 = vpop.permute.xlu0 %1028
  %1032 = vrot.lane.b32.xlu0 %v1026, 96
  %v1033 = vpop.permute.xlu0 %1032
  %vm1035 = vcmask 1040384
  %v1036 = vsel %vm1035, %v952, %v1005
  %vm1037 = vcmask 1041408
  %v1038 = vsel %vm1037, %v1036, %v1029
  %vm1039 = vcmask 1042432
  %v1040 = vsel %vm1039, %v1038, %v1033
  %vm1041 = vcmask 257024
  %1042 = vst.msk [vmem:[%s6] sm:$0xf] %vm1041, %v1040
  // Predicated region
  $region18: #{sparse_residual_gated_gcn_forward.12} parent=0 // pred_check
    _
  $region19: #{sparse_residual_gated_gcn_forward.12} parent=0 // pred_check_branch
    %1044 = sbr.rel (0) target = $region21
  $region20: #{sparse_residual_gated_gcn_forward.12} parent=0 // pred_region
    _
  $region21: #{sparse_residual_gated_gcn_forward.12} parent=0 // pred_fallthru
    _
  // Predicated region
  $region22: #{sparse_residual_gated_gcn_forward.12} parent=0 // pred_check
    _
  $region23: #{sparse_residual_gated_gcn_forward.12} parent=0 // pred_check_branch
    %1046 = sbr.rel (0) target = $region25
  $region24: #{sparse_residual_gated_gcn_forward.12} parent=0 // pred_region
    _
  $region25: #{sparse_residual_gated_gcn_forward.12} parent=0 // pred_fallthru
    _
  // Predicated region
  $region26: #{sparse_residual_gated_gcn_forward.12} parent=0 // pred_check
    _
  $region27: #{sparse_residual_gated_gcn_forward.12} parent=0 // pred_check_branch
    %1048 = sbr.rel (0) target = $region29
  $region28: #{sparse_residual_gated_gcn_forward.12} parent=0 // pred_region
    _
  $region29: #{sparse_residual_gated_gcn_forward.12} parent=0 // pred_fallthru
    _
  // Predicated region
  $region30: #{sparse_residual_gated_gcn_forward.12} parent=0 // pred_check
    _
  $region31: #{sparse_residual_gated_gcn_forward.12} parent=0 // pred_check_branch
    %1050 = sbr.rel (0) target = $region33
  $region32: #{sparse_residual_gated_gcn_forward.12} parent=0 // pred_region
    _
  $region33: #{sparse_residual_gated_gcn_forward.12} parent=0 // pred_fallthru
    _
  // Predicated region
  $region34: #{sparse_residual_gated_gcn_forward.12} parent=0 // pred_check
    _
  $region35: #{sparse_residual_gated_gcn_forward.12} parent=0 // pred_check_branch
    %1052 = sbr.rel (0) target = $region37
  $region36: #{sparse_residual_gated_gcn_forward.12} parent=0 // pred_region
    _
  $region37: #{sparse_residual_gated_gcn_forward.12} parent=0 // pred_fallthru
    _
  // Predicated region
  $region38: #{sparse_residual_gated_gcn_forward.12} parent=0 // pred_check
    _
  $region39: #{sparse_residual_gated_gcn_forward.12} parent=0 // pred_check_branch
    %1054 = sbr.rel (0) target = $region41
  $region40: #{sparse_residual_gated_gcn_forward.12} parent=0 // pred_region
    _
  $region41: #{sparse_residual_gated_gcn_forward.12} parent=0 // pred_fallthru
    _

// kernel: sparse_residual_gated_gcn_forward.16
$region0: #{sparse_residual_gated_gcn_forward.16}
  #allocation0 [shape = 'u32[]', space=smem, size = 0x4, offset = 0x4, fixed_abs, tag = 'smem constant byte address 0x4 - core index']
  #allocation1 [shape = 'u32[144,128]{1,0:T(1,128)}', space=vmem, size = 0x12000, scoped, tag = 'internal scratch']
  %s0 = inlined_call_operand.vmem [shape: f32[2,8,8,32], index: 0, kind: input, shape index: {}]
  %s1 = inlined_call_operand.vmem [shape: f32[2,8,96], index: 1, kind: input, shape index: {}]
  %s2 = inlined_call_operand.vmem [shape: f32[32,32], index: 2, kind: input, shape index: {}]
  %s3 = inlined_call_operand.vmem [shape: f32[1,32], index: 3, kind: input, shape index: {}]
  %s4 = inlined_call_operand.vmem [shape: f32[2,8,8,32], index: 4, kind: output, shape index: {0}]
  %s5 = inlined_call_operand.hbm [shape: f32[2,8,32], index: 5, kind: output, shape index: {1}]
  %s6 = inlined_call_operand.vmem [shape: f32[1,4,32], index: 6, kind: output, shape index: {2}]
  %7 = xla_tuple %s4, %s5, %s6
  %s8 = sld [smem:[#allocation0]]
  $region42: #{sparse_residual_gated_gcn_forward.16} parent=0
    _
  %s10 = ssub.s32 1, %s8
  %s11 = scalar_select 0, %s10, %s8
  $region1: #{sparse_residual_gated_gcn_forward.16} parent=0
    #allocation2 [shape = 'u8[8192]{0}', space=vmem, size = 0x2000, scoped, tag = 'output window, operand 1, single buffered']
    #allocation3 [shape = 's32[1]{0}', space=sflag, size = 0x4, scoped, tag = 'scoped memory for sparse_residual_gated_gcn_forward.16']
    %12 = vsyncpa [#allocation3], 0
    // Predicated region
    $region2: #{sparse_residual_gated_gcn_forward.16} parent=1 // pred_check
      _
    $region3: #{sparse_residual_gated_gcn_forward.16} parent=1 // pred_check_branch
      %14 = sbr.rel (0) target = $region5
    $region4: #{sparse_residual_gated_gcn_forward.16} parent=1 // pred_region
      _
    $region5: #{sparse_residual_gated_gcn_forward.16} parent=1 // pred_fallthru
      _
    // Predicated region
    $region6: #{sparse_residual_gated_gcn_forward.16} parent=1 // pred_check
      _
    $region7: #{sparse_residual_gated_gcn_forward.16} parent=1 // pred_check_branch
      %16 = sbr.rel (0) target = $region9
    $region8: #{sparse_residual_gated_gcn_forward.16} parent=1 // pred_region
      _
    $region9: #{sparse_residual_gated_gcn_forward.16} parent=1 // pred_fallthru
      _
    // Predicated region
    $region10: #{sparse_residual_gated_gcn_forward.16} parent=1 // pred_check
      _
    $region11: #{sparse_residual_gated_gcn_forward.16} parent=1 // pred_check_branch
      %18 = sbr.rel (0) target = $region13
    $region12: #{sparse_residual_gated_gcn_forward.16} parent=1 // pred_region
      _
    $region13: #{sparse_residual_gated_gcn_forward.16} parent=1 // pred_fallthru
      _
    // Predicated region
    $region14: #{sparse_residual_gated_gcn_forward.16} parent=1 // pred_check
      _
    $region15: #{sparse_residual_gated_gcn_forward.16} parent=1 // pred_check_branch
      %20 = sbr.rel (0) target = $region17
    $region16: #{sparse_residual_gated_gcn_forward.16} parent=1 // pred_region
      _
    $region17: #{sparse_residual_gated_gcn_forward.16} parent=1 // pred_fallthru
      _
    %v21 = vld [vmem:[%s0] sm:$0xff]
    %v22 = vld [vmem:[%s0 + $0x8] sm:$0xff]
    %v23 = vld [vmem:[%s0 + $0x10] sm:$0xff]
    %v24 = vld [vmem:[%s0 + $0x18] sm:$0xff]
    %v25 = vld [vmem:[%s0 + $0x20] sm:$0xff]
    %v26 = vld [vmem:[%s0 + $0x28] sm:$0xff]
    %v27 = vld [vmem:[%s0 + $0x30] sm:$0xff]
    %v28 = vld [vmem:[%s0 + $0x38] sm:$0xff]
    %v29 = vld [vmem:[%s0 + $0x40] sm:$0xff]
    %v30 = vld [vmem:[%s0 + $0x48] sm:$0xff]
    %v31 = vld [vmem:[%s0 + $0x50] sm:$0xff]
    %v32 = vld [vmem:[%s0 + $0x58] sm:$0xff]
    %v33 = vld [vmem:[%s0 + $0x60] sm:$0xff]
    %v34 = vld [vmem:[%s0 + $0x68] sm:$0xff]
    %v35 = vld [vmem:[%s0 + $0x70] sm:$0xff]
    %v36 = vld [vmem:[%s0 + $0x78] sm:$0xff]
    %v37 = vld [vmem:[%s1] sm:$0xff]
    %v38 = vld [vmem:[%s1 + $0x8] sm:$0xff]
    %v39 = vld [vmem:[%s2] sm:$0xff]
    %v40 = vld [vmem:[%s2 + $0x8] sm:$0xff]
    %v41 = vld [vmem:[%s2 + $0x10] sm:$0xff]
    %v42 = vld [vmem:[%s2 + $0x18] sm:$0xff]
    %v43 = vld [vmem:[%s3] sm:$0x1]
    %v45 = vlaneseq
    %v46 = vshrl.u32 %v45, 7
    %v47 = vsub.s32 0, %v46
    %v48 = vrot.slane %v43, %v47
    %vm50 = vcmask 261120
    %v52 = vsel %vm50, %v21, 0
    %v55 = vsel %vm50, %v22, 0
    %v58 = vsel %vm50, %v23, 0
    %v61 = vsel %vm50, %v24, 0
    %v64 = vsel %vm50, %v25, 0
    %v67 = vsel %vm50, %v26, 0
    %v70 = vsel %vm50, %v27, 0
    %v73 = vsel %vm50, %v28, 0
    %v76 = vsel %vm50, %v29, 0
    %v79 = vsel %vm50, %v30, 0
    %v82 = vsel %vm50, %v31, 0
    %v85 = vsel %vm50, %v32, 0
    %v88 = vsel %vm50, %v33, 0
    %v91 = vsel %vm50, %v34, 0
    %v94 = vsel %vm50, %v35, 0
    %v97 = vsel %vm50, %v36, 0
    %99 = vmatprep.subr.mxu0 0.0
    %100 = vmatpush1.msra.mxu0 %v39
    %101 = vmatprep.subr.mxu0 0.0
    %102 = vmatpush1.msra.mxu0 %v40
    %103 = vmatprep.subr.mxu0 0.0
    %104 = vmatpush1.msra.mxu0 %v41
    %105 = vmatprep.subr.mxu0 0.0
    %106 = vmatpush1.msra.mxu0 %v42
    %107 = vmatprep.subr.mxu0 0.0
    %108 = vmatpush1.msra.mxu0 0.0
    %109 = vmatprep.subr.mxu0 0.0
    %110 = vmatpush1.msra.mxu0 0.0
    %111 = vmatprep.subr.mxu0 0.0
    %112 = vmatpush1.msra.mxu0 0.0
    %113 = vmatprep.subr.mxu0 0.0
    %114 = vmatpush1.msra.mxu0 0.0
    %115 = vmatprep.subr.mxu0 0.0
    %116 = vmatpush1.msra.mxu0 0.0
    %117 = vmatprep.subr.mxu0 0.0
    %118 = vmatpush1.msra.mxu0 0.0
    %119 = vmatprep.subr.mxu0 0.0
    %120 = vmatpush1.msra.mxu0 0.0
    %121 = vmatprep.subr.mxu0 0.0
    %122 = vmatpush1.msra.mxu0 0.0
    %123 = vmatprep.subr.mxu0 0.0
    %124 = vmatpush1.msra.mxu0 0.0
    %125 = vmatprep.subr.mxu0 0.0
    %126 = vmatpush1.msra.mxu0 0.0
    %127 = vmatprep.subr.mxu0 0.0
    %128 = vmatpush1.msra.mxu0 0.0
    %129 = vmatprep.subr.mxu0 0.0
    %130 = vmatpush1.msra.mxu0 0.0
    %131 = vmatprep.subr.mxu0 0.0
    %132 = vmatpush1.msra.mxu0 0.0
    %133 = vmatprep.subr.mxu0 0.0
    %134 = vmatpush1.msra.mxu0 0.0
    %135 = vmatprep.subr.mxu0 0.0
    %136 = vmatpush1.msra.mxu0 0.0
    %137 = vmatprep.subr.mxu0 0.0
    %138 = vmatpush1.msra.mxu0 0.0
    %139 = vmatprep.subr.mxu0 0.0
    %140 = vmatpush1.msra.mxu0 0.0
    %141 = vmatprep.subr.mxu0 0.0
    %142 = vmatpush1.msra.mxu0 0.0
    %143 = vmatprep.subr.mxu0 0.0
    %144 = vmatpush1.msra.mxu0 0.0
    %145 = vmatprep.subr.mxu0 0.0
    %146 = vmatpush1.msra.mxu0 0.0
    %147 = vmatprep.subr.mxu0 0.0
    %148 = vmatpush1.msra.mxu0 0.0
    %149 = vmatprep.subr.mxu0 0.0
    %150 = vmatpush1.msra.mxu0 0.0
    %151 = vmatprep.subr.mxu0 0.0
    %152 = vmatpush1.msra.mxu0 0.0
    %153 = vmatprep.subr.mxu0 0.0
    %154 = vmatpush1.msra.mxu0 0.0
    %155 = vmatprep.subr.mxu0 0.0
    %156 = vmatpush1.msra.mxu0 0.0
    %157 = vmatprep.subr.mxu0 0.0
    %158 = vmatpush1.msra.mxu0 0.0
    %159 = vmatprep.subr.mxu0 0.0
    %160 = vmatpush1.msra.mxu0 0.0
    %161 = vmatprep.subr.mxu0 0.0
    %162 = vmatpush1.msra.mxu0 0.0
    %163 = vmatprep.mubr.f32.mxu0 0.0
    %164 = vmatmul.mubr.f32.gmra.mrb[0].mxu0 %v52
    %v165 = vpop.f32.mrb[0].mxu0
    %v166 = vadd.f32 %v48, %v165
    %v167 = vpop.f32.mrb[0].mxu0
    %168 = vmatprep.mubr.f32.mxu0 0.0
    %169 = vmatmul.mubr.f32.gmra.mrb[0].mxu0 %v55
    %v170 = vpop.f32.mrb[0].mxu0
    %v171 = vadd.f32 %v48, %v170
    %v172 = vpop.f32.mrb[0].mxu0
    %173 = vmatprep.mubr.f32.mxu0 0.0
    %174 = vmatmul.mubr.f32.gmra.mrb[0].mxu0 %v58
    %v175 = vpop.f32.mrb[0].mxu0
    %v176 = vadd.f32 %v48, %v175
    %v177 = vpop.f32.mrb[0].mxu0
    %178 = vmatprep.mubr.f32.mxu0 0.0
    %179 = vmatmul.mubr.f32.gmra.mrb[0].mxu0 %v61
    %v180 = vpop.f32.mrb[0].mxu0
    %v181 = vadd.f32 %v48, %v180
    %v182 = vpop.f32.mrb[0].mxu0
    %183 = vmatprep.mubr.f32.mxu0 0.0
    %184 = vmatmul.mubr.f32.gmra.mrb[0].mxu0 %v64
    %v185 = vpop.f32.mrb[0].mxu0
    %v186 = vadd.f32 %v48, %v185
    %v187 = vpop.f32.mrb[0].mxu0
    %188 = vmatprep.mubr.f32.mxu0 0.0
    %189 = vmatmul.mubr.f32.gmra.mrb[0].mxu0 %v67
    %v190 = vpop.f32.mrb[0].mxu0
    %v191 = vadd.f32 %v48, %v190
    %v192 = vpop.f32.mrb[0].mxu0
    %193 = vmatprep.mubr.f32.mxu0 0.0
    %194 = vmatmul.mubr.f32.gmra.mrb[0].mxu0 %v70
    %v195 = vpop.f32.mrb[0].mxu0
    %v196 = vadd.f32 %v48, %v195
    %v197 = vpop.f32.mrb[0].mxu0
    %198 = vmatprep.mubr.f32.mxu0 0.0
    %199 = vmatmul.mubr.f32.gmra.mrb[0].mxu0 %v73
    %v200 = vpop.f32.mrb[0].mxu0
    %v201 = vadd.f32 %v48, %v200
    %v202 = vpop.f32.mrb[0].mxu0
    %203 = vmatprep.mubr.f32.mxu0 0.0
    %204 = vmatmul.mubr.f32.gmra.mrb[0].mxu0 %v76
    %v205 = vpop.f32.mrb[0].mxu0
    %v206 = vadd.f32 %v48, %v205
    %v207 = vpop.f32.mrb[0].mxu0
    %208 = vmatprep.mubr.f32.mxu0 0.0
    %209 = vmatmul.mubr.f32.gmra.mrb[0].mxu0 %v79
    %v210 = vpop.f32.mrb[0].mxu0
    %v211 = vadd.f32 %v48, %v210
    %v212 = vpop.f32.mrb[0].mxu0
    %213 = vmatprep.mubr.f32.mxu0 0.0
    %214 = vmatmul.mubr.f32.gmra.mrb[0].mxu0 %v82
    %v215 = vpop.f32.mrb[0].mxu0
    %v216 = vadd.f32 %v48, %v215
    %v217 = vpop.f32.mrb[0].mxu0
    %218 = vmatprep.mubr.f32.mxu0 0.0
    %219 = vmatmul.mubr.f32.gmra.mrb[0].mxu0 %v85
    %v220 = vpop.f32.mrb[0].mxu0
    %v221 = vadd.f32 %v48, %v220
    %v222 = vpop.f32.mrb[0].mxu0
    %223 = vmatprep.mubr.f32.mxu0 0.0
    %224 = vmatmul.mubr.f32.gmra.mrb[0].mxu0 %v88
    %v225 = vpop.f32.mrb[0].mxu0
    %v226 = vadd.f32 %v48, %v225
    %v227 = vpop.f32.mrb[0].mxu0
    %228 = vmatprep.mubr.f32.mxu0 0.0
    %229 = vmatmul.mubr.f32.gmra.mrb[0].mxu0 %v91
    %v230 = vpop.f32.mrb[0].mxu0
    %v231 = vadd.f32 %v48, %v230
    %v232 = vpop.f32.mrb[0].mxu0
    %233 = vmatprep.mubr.f32.mxu0 0.0
    %234 = vmatmul.mubr.f32.gmra.mrb[0].mxu0 %v94
    %v235 = vpop.f32.mrb[0].mxu0
    %v236 = vadd.f32 %v48, %v235
    %v237 = vpop.f32.mrb[0].mxu0
    %238 = vmatprep.mubr.f32.mxu0 0.0
    %239 = vmatmul.mubr.f32.gmra.mrb[0].mxu0 %v97
    %v240 = vpop.f32.mrb[0].mxu0
    %v241 = vadd.f32 %v48, %v240
    %v242 = vpop.f32.mrb[0].mxu0
    %243 = vdwg.mxu0
    %v246 = vcombine.high %v37, %v37
    %v248 = vunpack.c.l.s4 1966171168
    %v249 = vunpack.c.0.s8 %v248
    %v250 = vlaneseq
    %v251 = vshrl.u32 %v250, 7
    %v252 = vsub.s32 %v249, %v251
    %v253 = vrot.slane %v37, %v252
    %v255 = vunpack.c.l.s4 1966171168
    %v256 = vunpack.c.0.s8 %v255
    %v257 = vlaneseq
    %v258 = vshrl.u32 %v257, 7
    %v259 = vsub.s32 %v256, %v258
    %v260 = vrot.slane %v246, %v259
    %v261 = vcombine.high %v253, %v253
    %v262 = vcombine.high %v260, %v260
    %v264 = vunpack.c.l.s4 1966171168
    %v265 = vunpack.c.0.s8 %v264
    %v266 = vlaneseq
    %v267 = vshrl.u32 %v266, 7
    %v268 = vsub.s32 %v265, %v267
    %v269 = vrot.slane %v253, %v268
    %v271 = vunpack.c.l.s4 1966171168
    %v272 = vunpack.c.0.s8 %v271
    %v273 = vlaneseq
    %v274 = vshrl.u32 %v273, 7
    %v275 = vsub.s32 %v272, %v274
    %v276 = vrot.slane %v260, %v275
    %v278 = vunpack.c.l.s4 1966171168
    %v279 = vunpack.c.0.s8 %v278
    %v280 = vlaneseq
    %v281 = vshrl.u32 %v280, 7
    %v282 = vsub.s32 %v279, %v281
    %v283 = vrot.slane %v261, %v282
    %v285 = vunpack.c.l.s4 1966171168
    %v286 = vunpack.c.0.s8 %v285
    %v287 = vlaneseq
    %v288 = vshrl.u32 %v287, 7
    %v289 = vsub.s32 %v286, %v288
    %v290 = vrot.slane %v262, %v289
    %v291 = vcombine.high %v269, %v269
    %v292 = vcombine.high %v276, %v276
    %v293 = vcombine.high %v283, %v283
    %v294 = vcombine.high %v290, %v290
    %v295 = vcombine.high %v38, %v38
    %v297 = vunpack.c.l.s4 1966171168
    %v298 = vunpack.c.0.s8 %v297
    %v299 = vlaneseq
    %v300 = vshrl.u32 %v299, 7
    %v301 = vsub.s32 %v298, %v300
    %v302 = vrot.slane %v38, %v301
    %v304 = vunpack.c.l.s4 1966171168
    %v305 = vunpack.c.0.s8 %v304
    %v306 = vlaneseq
    %v307 = vshrl.u32 %v306, 7
    %v308 = vsub.s32 %v305, %v307
    %v309 = vrot.slane %v295, %v308
    %v310 = vcombine.high %v302, %v302
    %v311 = vcombine.high %v309, %v309
    %v313 = vunpack.c.l.s4 1966171168
    %v314 = vunpack.c.0.s8 %v313
    %v315 = vlaneseq
    %v316 = vshrl.u32 %v315, 7
    %v317 = vsub.s32 %v314, %v316
    %v318 = vrot.slane %v302, %v317
    %v320 = vunpack.c.l.s4 1966171168
    %v321 = vunpack.c.0.s8 %v320
    %v322 = vlaneseq
    %v323 = vshrl.u32 %v322, 7
    %v324 = vsub.s32 %v321, %v323
    %v325 = vrot.slane %v309, %v324
    %v327 = vunpack.c.l.s4 1966171168
    %v328 = vunpack.c.0.s8 %v327
    %v329 = vlaneseq
    %v330 = vshrl.u32 %v329, 7
    %v331 = vsub.s32 %v328, %v330
    %v332 = vrot.slane %v310, %v331
    %v334 = vunpack.c.l.s4 1966171168
    %v335 = vunpack.c.0.s8 %v334
    %v336 = vlaneseq
    %v337 = vshrl.u32 %v336, 7
    %v338 = vsub.s32 %v335, %v337
    %v339 = vrot.slane %v311, %v338
    %v340 = vcombine.high %v318, %v318
    %v341 = vcombine.high %v325, %v325
    %v342 = vcombine.high %v332, %v332
    %v343 = vcombine.high %v339, %v339
    %v344 = vlaneseq
    %v345 = vshrl.u32 %v344, 7
    %v346 = vsub.s32 0, %v345
    %v347 = vrot.slane %v269, %v346
    %v348 = vlaneseq
    %v349 = vshrl.u32 %v348, 7
    %v350 = vsub.s32 0, %v349
    %v351 = vrot.slane %v283, %v350
    %v352 = vlaneseq
    %v353 = vshrl.u32 %v352, 7
    %v354 = vsub.s32 0, %v353
    %v355 = vrot.slane %v291, %v354
    %v356 = vlaneseq
    %v357 = vshrl.u32 %v356, 7
    %v358 = vsub.s32 0, %v357
    %v359 = vrot.slane %v293, %v358
    %v360 = vlaneseq
    %v361 = vshrl.u32 %v360, 7
    %v362 = vsub.s32 0, %v361
    %v363 = vrot.slane %v276, %v362
    %v364 = vlaneseq
    %v365 = vshrl.u32 %v364, 7
    %v366 = vsub.s32 0, %v365
    %v367 = vrot.slane %v290, %v366
    %v368 = vlaneseq
    %v369 = vshrl.u32 %v368, 7
    %v370 = vsub.s32 0, %v369
    %v371 = vrot.slane %v292, %v370
    %v372 = vlaneseq
    %v373 = vshrl.u32 %v372, 7
    %v374 = vsub.s32 0, %v373
    %v375 = vrot.slane %v294, %v374
    %v376 = vlaneseq
    %v377 = vshrl.u32 %v376, 7
    %v378 = vsub.s32 0, %v377
    %v379 = vrot.slane %v318, %v378
    %v380 = vlaneseq
    %v381 = vshrl.u32 %v380, 7
    %v382 = vsub.s32 0, %v381
    %v383 = vrot.slane %v332, %v382
    %v384 = vlaneseq
    %v385 = vshrl.u32 %v384, 7
    %v386 = vsub.s32 0, %v385
    %v387 = vrot.slane %v340, %v386
    %v388 = vlaneseq
    %v389 = vshrl.u32 %v388, 7
    %v390 = vsub.s32 0, %v389
    %v391 = vrot.slane %v342, %v390
    %v392 = vlaneseq
    %v393 = vshrl.u32 %v392, 7
    %v394 = vsub.s32 0, %v393
    %v395 = vrot.slane %v325, %v394
    %v396 = vlaneseq
    %v397 = vshrl.u32 %v396, 7
    %v398 = vsub.s32 0, %v397
    %v399 = vrot.slane %v339, %v398
    %v400 = vlaneseq
    %v401 = vshrl.u32 %v400, 7
    %v402 = vsub.s32 0, %v401
    %v403 = vrot.slane %v341, %v402
    %v404 = vlaneseq
    %v405 = vshrl.u32 %v404, 7
    %v406 = vsub.s32 0, %v405
    %v407 = vrot.slane %v343, %v406
    %v424 = vadd.f32 %v166, %v347
    %v425 = vadd.f32 %v171, %v351
    %v426 = vadd.f32 %v176, %v355
    %v427 = vadd.f32 %v181, %v359
    %v428 = vadd.f32 %v186, %v363
    %v429 = vadd.f32 %v191, %v367
    %v430 = vadd.f32 %v196, %v371
    %v431 = vadd.f32 %v201, %v375
    %v432 = vadd.f32 %v206, %v379
    %v433 = vadd.f32 %v211, %v383
    %v434 = vadd.f32 %v216, %v387
    %v435 = vadd.f32 %v221, %v391
    %v436 = vadd.f32 %v226, %v395
    %v437 = vadd.f32 %v231, %v399
    %v438 = vadd.f32 %v236, %v403
    %v439 = vadd.f32 %v241, %v407
    %v440 = vadd.f32 %v424, %v37
    %v441 = vadd.f32 %v425, %v37
    %v442 = vadd.f32 %v426, %v37
    %v443 = vadd.f32 %v427, %v37
    %v444 = vadd.f32 %v428, %v37
    %v445 = vadd.f32 %v429, %v37
    %v446 = vadd.f32 %v430, %v37
    %v447 = vadd.f32 %v431, %v37
    %v448 = vadd.f32 %v432, %v38
    %v449 = vadd.f32 %v433, %v38
    %v450 = vadd.f32 %v434, %v38
    %v451 = vadd.f32 %v435, %v38
    %v452 = vadd.f32 %v436, %v38
    %v453 = vadd.f32 %v437, %v38
    %v454 = vadd.f32 %v438, %v38
    %v455 = vadd.f32 %v439, %v38
    %v456 = vxor.u32 %v440, 2147483648
    %v457 = vxor.u32 %v441, 2147483648
    %v458 = vxor.u32 %v442, 2147483648
    %v459 = vxor.u32 %v443, 2147483648
    %v460 = vxor.u32 %v444, 2147483648
    %v461 = vxor.u32 %v445, 2147483648
    %v462 = vxor.u32 %v446, 2147483648
    %v463 = vxor.u32 %v447, 2147483648
    %v464 = vxor.u32 %v448, 2147483648
    %v465 = vxor.u32 %v449, 2147483648
    %v466 = vxor.u32 %v450, 2147483648
    %v467 = vxor.u32 %v451, 2147483648
    %v468 = vxor.u32 %v452, 2147483648
    %v469 = vxor.u32 %v453, 2147483648
    %v470 = vxor.u32 %v454, 2147483648
    %v471 = vxor.u32 %v455, 2147483648
    %v472 = vmul.f32 %v456, 1.442695
    %v473 = vpow.pop %v472
    %v474 = vmul.f32 %v457, 1.442695
    %v475 = vpow.pop %v474
    %v476 = vmul.f32 %v458, 1.442695
    %v477 = vpow.pop %v476
    %v478 = vmul.f32 %v459, 1.442695
    %v479 = vpow.pop %v478
    %v480 = vmul.f32 %v460, 1.442695
    %v481 = vpow.pop %v480
    %v482 = vmul.f32 %v461, 1.442695
    %v483 = vpow.pop %v482
    %v484 = vmul.f32 %v462, 1.442695
    %v485 = vpow.pop %v484
    %v486 = vmul.f32 %v463, 1.442695
    %v487 = vpow.pop %v486
    %v488 = vmul.f32 %v464, 1.442695
    %v489 = vpow.pop %v488
    %v490 = vmul.f32 %v465, 1.442695
    %v491 = vpow.pop %v490
    %v492 = vmul.f32 %v466, 1.442695
    %v493 = vpow.pop %v492
    %v494 = vmul.f32 %v467, 1.442695
    %v495 = vpow.pop %v494
    %v496 = vmul.f32 %v468, 1.442695
    %v497 = vpow.pop %v496
    %v498 = vmul.f32 %v469, 1.442695
    %v499 = vpow.pop %v498
    %v500 = vmul.f32 %v470, 1.442695
    %v501 = vpow.pop %v500
    %v502 = vmul.f32 %v471, 1.442695
    %v503 = vpow.pop %v502
    %v504 = vadd.f32 %v473, 1.0
    %v505 = vadd.f32 %v475, 1.0
    %v506 = vadd.f32 %v477, 1.0
    %v507 = vadd.f32 %v479, 1.0
    %v508 = vadd.f32 %v481, 1.0
    %v509 = vadd.f32 %v483, 1.0
    %v510 = vadd.f32 %v485, 1.0
    %v511 = vadd.f32 %v487, 1.0
    %v512 = vadd.f32 %v489, 1.0
    %v513 = vadd.f32 %v491, 1.0
    %v514 = vadd.f32 %v493, 1.0
    %v515 = vadd.f32 %v495, 1.0
    %v516 = vadd.f32 %v497, 1.0
    %v517 = vadd.f32 %v499, 1.0
    %v518 = vadd.f32 %v501, 1.0
    %v519 = vadd.f32 %v503, 1.0
    %v520 = vrcp.pop %v504
    %v521 = vmul.f32 1.0, %v520
    %v522 = vrcp.pop %v505
    %v523 = vmul.f32 1.0, %v522
    %v524 = vrcp.pop %v506
    %v525 = vmul.f32 1.0, %v524
    %v526 = vrcp.pop %v507
    %v527 = vmul.f32 1.0, %v526
    %v528 = vrcp.pop %v508
    %v529 = vmul.f32 1.0, %v528
    %v530 = vrcp.pop %v509
    %v531 = vmul.f32 1.0, %v530
    %v532 = vrcp.pop %v510
    %v533 = vmul.f32 1.0, %v532
    %v534 = vrcp.pop %v511
    %v535 = vmul.f32 1.0, %v534
    %v536 = vrcp.pop %v512
    %v537 = vmul.f32 1.0, %v536
    %v538 = vrcp.pop %v513
    %v539 = vmul.f32 1.0, %v538
    %v540 = vrcp.pop %v514
    %v541 = vmul.f32 1.0, %v540
    %v542 = vrcp.pop %v515
    %v543 = vmul.f32 1.0, %v542
    %v544 = vrcp.pop %v516
    %v545 = vmul.f32 1.0, %v544
    %v546 = vrcp.pop %v517
    %v547 = vmul.f32 1.0, %v546
    %v548 = vrcp.pop %v518
    %v549 = vmul.f32 1.0, %v548
    %v550 = vrcp.pop %v519
    %v551 = vmul.f32 1.0, %v550
    %552 = vrot.lane.b32.xlu0 %v37, 64
    %v553 = vpop.permute.xlu0 %552
    %554 = vrot.lane.b32.xlu0 %v38, 64
    %v555 = vpop.permute.xlu0 %554
    %v558 = vmul.f32 %v521, %v553
    %v559 = vmul.f32 %v523, %v553
    %v560 = vmul.f32 %v525, %v553
    %v561 = vmul.f32 %v527, %v553
    %v562 = vmul.f32 %v529, %v553
    %v563 = vmul.f32 %v531, %v553
    %v564 = vmul.f32 %v533, %v553
    %v565 = vmul.f32 %v535, %v553
    %v566 = vmul.f32 %v537, %v555
    %v567 = vmul.f32 %v539, %v555
    %v568 = vmul.f32 %v541, %v555
    %v569 = vmul.f32 %v543, %v555
    %v570 = vmul.f32 %v545, %v555
    %v571 = vmul.f32 %v547, %v555
    %v572 = vmul.f32 %v549, %v555
    %v573 = vmul.f32 %v551, %v555
    %v574 = vsel %vm50, %v558, 0.0
    %v575 = vrot.slane %v574, 4
    %v576 = vadd.f32 %v574, %v575
    %v577 = vrot.slane %v576, 2
    %v578 = vadd.f32 %v576, %v577
    %v579 = vrot.slane %v578, 1
    %v580 = vadd.f32 %v578, %v579
    %v581 = vsel %vm50, %v559, 0.0
    %v582 = vrot.slane %v581, 4
    %v583 = vadd.f32 %v581, %v582
    %v584 = vrot.slane %v583, 2
    %v585 = vadd.f32 %v583, %v584
    %v586 = vrot.slane %v585, 1
    %v587 = vadd.f32 %v585, %v586
    %v588 = vsel %vm50, %v560, 0.0
    %v589 = vrot.slane %v588, 4
    %v590 = vadd.f32 %v588, %v589
    %v591 = vrot.slane %v590, 2
    %v592 = vadd.f32 %v590, %v591
    %v593 = vrot.slane %v592, 1
    %v594 = vadd.f32 %v592, %v593
    %v595 = vsel %vm50, %v561, 0.0
    %v596 = vrot.slane %v595, 4
    %v597 = vadd.f32 %v595, %v596
    %v598 = vrot.slane %v597, 2
    %v599 = vadd.f32 %v597, %v598
    %v600 = vrot.slane %v599, 1
    %v601 = vadd.f32 %v599, %v600
    %v602 = vsel %vm50, %v562, 0.0
    %v603 = vrot.slane %v602, 4
    %v604 = vadd.f32 %v602, %v603
    %v605 = vrot.slane %v604, 2
    %v606 = vadd.f32 %v604, %v605
    %v607 = vrot.slane %v606, 1
    %v608 = vadd.f32 %v606, %v607
    %v609 = vsel %vm50, %v563, 0.0
    %v610 = vrot.slane %v609, 4
    %v611 = vadd.f32 %v609, %v610
    %v612 = vrot.slane %v611, 2
    %v613 = vadd.f32 %v611, %v612
    %v614 = vrot.slane %v613, 1
    %v615 = vadd.f32 %v613, %v614
    %v616 = vsel %vm50, %v564, 0.0
    %v617 = vrot.slane %v616, 4
    %v618 = vadd.f32 %v616, %v617
    %v619 = vrot.slane %v618, 2
    %v620 = vadd.f32 %v618, %v619
    %v621 = vrot.slane %v620, 1
    %v622 = vadd.f32 %v620, %v621
    %v623 = vsel %vm50, %v565, 0.0
    %v624 = vrot.slane %v623, 4
    %v625 = vadd.f32 %v623, %v624
    %v626 = vrot.slane %v625, 2
    %v627 = vadd.f32 %v625, %v626
    %v628 = vrot.slane %v627, 1
    %v629 = vadd.f32 %v627, %v628
    %v630 = vsel %vm50, %v566, 0.0
    %v631 = vrot.slane %v630, 4
    %v632 = vadd.f32 %v630, %v631
    %v633 = vrot.slane %v632, 2
    %v634 = vadd.f32 %v632, %v633
    %v635 = vrot.slane %v634, 1
    %v636 = vadd.f32 %v634, %v635
    %v637 = vsel %vm50, %v567, 0.0
    %v638 = vrot.slane %v637, 4
    %v639 = vadd.f32 %v637, %v638
    %v640 = vrot.slane %v639, 2
    %v641 = vadd.f32 %v639, %v640
    %v642 = vrot.slane %v641, 1
    %v643 = vadd.f32 %v641, %v642
    %v644 = vsel %vm50, %v568, 0.0
    %v645 = vrot.slane %v644, 4
    %v646 = vadd.f32 %v644, %v645
    %v647 = vrot.slane %v646, 2
    %v648 = vadd.f32 %v646, %v647
    %v649 = vrot.slane %v648, 1
    %v650 = vadd.f32 %v648, %v649
    %v651 = vsel %vm50, %v569, 0.0
    %v652 = vrot.slane %v651, 4
    %v653 = vadd.f32 %v651, %v652
    %v654 = vrot.slane %v653, 2
    %v655 = vadd.f32 %v653, %v654
    %v656 = vrot.slane %v655, 1
    %v657 = vadd.f32 %v655, %v656
    %v658 = vsel %vm50, %v570, 0.0
    %v659 = vrot.slane %v658, 4
    %v660 = vadd.f32 %v658, %v659
    %v661 = vrot.slane %v660, 2
    %v662 = vadd.f32 %v660, %v661
    %v663 = vrot.slane %v662, 1
    %v664 = vadd.f32 %v662, %v663
    %v665 = vsel %vm50, %v571, 0.0
    %v666 = vrot.slane %v665, 4
    %v667 = vadd.f32 %v665, %v666
    %v668 = vrot.slane %v667, 2
    %v669 = vadd.f32 %v667, %v668
    %v670 = vrot.slane %v669, 1
    %v671 = vadd.f32 %v669, %v670
    %v672 = vsel %vm50, %v572, 0.0
    %v673 = vrot.slane %v672, 4
    %v674 = vadd.f32 %v672, %v673
    %v675 = vrot.slane %v674, 2
    %v676 = vadd.f32 %v674, %v675
    %v677 = vrot.slane %v676, 1
    %v678 = vadd.f32 %v676, %v677
    %v679 = vsel %vm50, %v573, 0.0
    %v680 = vrot.slane %v679, 4
    %v681 = vadd.f32 %v679, %v680
    %v682 = vrot.slane %v681, 2
    %v683 = vadd.f32 %v681, %v682
    %v684 = vrot.slane %v683, 1
    %v685 = vadd.f32 %v683, %v684
    %v686 = vsel %vm50, %v521, 0.0
    %v687 = vrot.slane %v686, 4
    %v688 = vadd.f32 %v686, %v687
    %v689 = vrot.slane %v688, 2
    %v690 = vadd.f32 %v688, %v689
    %v691 = vrot.slane %v690, 1
    %v692 = vadd.f32 %v690, %v691
    %v693 = vsel %vm50, %v523, 0.0
    %v694 = vrot.slane %v693, 4
    %v695 = vadd.f32 %v693, %v694
    %v696 = vrot.slane %v695, 2
    %v697 = vadd.f32 %v695, %v696
    %v698 = vrot.slane %v697, 1
    %v699 = vadd.f32 %v697, %v698
    %v700 = vsel %vm50, %v525, 0.0
    %v701 = vrot.slane %v700, 4
    %v702 = vadd.f32 %v700, %v701
    %v703 = vrot.slane %v702, 2
    %v704 = vadd.f32 %v702, %v703
    %v705 = vrot.slane %v704, 1
    %v706 = vadd.f32 %v704, %v705
    %v707 = vsel %vm50, %v527, 0.0
    %v708 = vrot.slane %v707, 4
    %v709 = vadd.f32 %v707, %v708
    %v710 = vrot.slane %v709, 2
    %v711 = vadd.f32 %v709, %v710
    %v712 = vrot.slane %v711, 1
    %v713 = vadd.f32 %v711, %v712
    %v714 = vsel %vm50, %v529, 0.0
    %v715 = vrot.slane %v714, 4
    %v716 = vadd.f32 %v714, %v715
    %v717 = vrot.slane %v716, 2
    %v718 = vadd.f32 %v716, %v717
    %v719 = vrot.slane %v718, 1
    %v720 = vadd.f32 %v718, %v719
    %v721 = vsel %vm50, %v531, 0.0
    %v722 = vrot.slane %v721, 4
    %v723 = vadd.f32 %v721, %v722
    %v724 = vrot.slane %v723, 2
    %v725 = vadd.f32 %v723, %v724
    %v726 = vrot.slane %v725, 1
    %v727 = vadd.f32 %v725, %v726
    %v728 = vsel %vm50, %v533, 0.0
    %v729 = vrot.slane %v728, 4
    %v730 = vadd.f32 %v728, %v729
    %v731 = vrot.slane %v730, 2
    %v732 = vadd.f32 %v730, %v731
    %v733 = vrot.slane %v732, 1
    %v734 = vadd.f32 %v732, %v733
    %v735 = vsel %vm50, %v535, 0.0
    %v736 = vrot.slane %v735, 4
    %v737 = vadd.f32 %v735, %v736
    %v738 = vrot.slane %v737, 2
    %v739 = vadd.f32 %v737, %v738
    %v740 = vrot.slane %v739, 1
    %v741 = vadd.f32 %v739, %v740
    %v742 = vsel %vm50, %v537, 0.0
    %v743 = vrot.slane %v742, 4
    %v744 = vadd.f32 %v742, %v743
    %v745 = vrot.slane %v744, 2
    %v746 = vadd.f32 %v744, %v745
    %v747 = vrot.slane %v746, 1
    %v748 = vadd.f32 %v746, %v747
    %v749 = vsel %vm50, %v539, 0.0
    %v750 = vrot.slane %v749, 4
    %v751 = vadd.f32 %v749, %v750
    %v752 = vrot.slane %v751, 2
    %v753 = vadd.f32 %v751, %v752
    %v754 = vrot.slane %v753, 1
    %v755 = vadd.f32 %v753, %v754
    %v756 = vsel %vm50, %v541, 0.0
    %v757 = vrot.slane %v756, 4
    %v758 = vadd.f32 %v756, %v757
    %v759 = vrot.slane %v758, 2
    %v760 = vadd.f32 %v758, %v759
    %v761 = vrot.slane %v760, 1
    %v762 = vadd.f32 %v760, %v761
    %v763 = vsel %vm50, %v543, 0.0
    %v764 = vrot.slane %v763, 4
    %v765 = vadd.f32 %v763, %v764
    %v766 = vrot.slane %v765, 2
    %v767 = vadd.f32 %v765, %v766
    %v768 = vrot.slane %v767, 1
    %v769 = vadd.f32 %v767, %v768
    %v770 = vsel %vm50, %v545, 0.0
    %v771 = vrot.slane %v770, 4
    %v772 = vadd.f32 %v770, %v771
    %v773 = vrot.slane %v772, 2
    %v774 = vadd.f32 %v772, %v773
    %v775 = vrot.slane %v774, 1
    %v776 = vadd.f32 %v774, %v775
    %v777 = vsel %vm50, %v547, 0.0
    %v778 = vrot.slane %v777, 4
    %v779 = vadd.f32 %v777, %v778
    %v780 = vrot.slane %v779, 2
    %v781 = vadd.f32 %v779, %v780
    %v782 = vrot.slane %v781, 1
    %v783 = vadd.f32 %v781, %v782
    %v784 = vsel %vm50, %v549, 0.0
    %v785 = vrot.slane %v784, 4
    %v786 = vadd.f32 %v784, %v785
    %v787 = vrot.slane %v786, 2
    %v788 = vadd.f32 %v786, %v787
    %v789 = vrot.slane %v788, 1
    %v790 = vadd.f32 %v788, %v789
    %v791 = vsel %vm50, %v551, 0.0
    %v792 = vrot.slane %v791, 4
    %v793 = vadd.f32 %v791, %v792
    %v794 = vrot.slane %v793, 2
    %v795 = vadd.f32 %v793, %v794
    %v796 = vrot.slane %v795, 1
    %v797 = vadd.f32 %v795, %v796
    %v798 = vadd.f32 %v692, 1e-20
    %v799 = vadd.f32 %v699, 1e-20
    %v800 = vadd.f32 %v706, 1e-20
    %v801 = vadd.f32 %v713, 1e-20
    %v802 = vadd.f32 %v720, 1e-20
    %v803 = vadd.f32 %v727, 1e-20
    %v804 = vadd.f32 %v734, 1e-20
    %v805 = vadd.f32 %v741, 1e-20
    %v806 = vadd.f32 %v748, 1e-20
    %v807 = vadd.f32 %v755, 1e-20
    %v808 = vadd.f32 %v762, 1e-20
    %v809 = vadd.f32 %v769, 1e-20
    %v810 = vadd.f32 %v776, 1e-20
    %v811 = vadd.f32 %v783, 1e-20
    %v812 = vadd.f32 %v790, 1e-20
    %v813 = vadd.f32 %v797, 1e-20
    %v814 = vrcp.pop %v798
    %v815 = vrcp.pop %v799
    %v816 = vrcp.pop %v800
    %v817 = vrcp.pop %v801
    %v818 = vrcp.pop %v802
    %v819 = vrcp.pop %v803
    %v820 = vrcp.pop %v804
    %v821 = vrcp.pop %v805
    %v822 = vrcp.pop %v806
    %v823 = vrcp.pop %v807
    %v824 = vrcp.pop %v808
    %v825 = vrcp.pop %v809
    %v826 = vrcp.pop %v810
    %v827 = vrcp.pop %v811
    %v828 = vrcp.pop %v812
    %v829 = vrcp.pop %v813
    %v830 = vmul.f32 %v580, %v814
    %v831 = vmul.f32 %v587, %v815
    %v832 = vmul.f32 %v594, %v816
    %v833 = vmul.f32 %v601, %v817
    %v834 = vmul.f32 %v608, %v818
    %v835 = vmul.f32 %v615, %v819
    %v836 = vmul.f32 %v622, %v820
    %v837 = vmul.f32 %v629, %v821
    %v838 = vmul.f32 %v636, %v822
    %v839 = vmul.f32 %v643, %v823
    %v840 = vmul.f32 %v650, %v824
    %v841 = vmul.f32 %v657, %v825
    %v842 = vmul.f32 %v664, %v826
    %v843 = vmul.f32 %v671, %v827
    %v844 = vmul.f32 %v678, %v828
    %v845 = vmul.f32 %v685, %v829
    %vm862 = vcmask 1041409
    %v863 = vsel %vm862, %v831, %v830
    %vm864 = vcmask 1042434
    %v865 = vsel %vm864, %v832, %v863
    %vm866 = vcmask 1043459
    %v867 = vsel %vm866, %v833, %v865
    %vm868 = vcmask 1044484
    %v869 = vsel %vm868, %v834, %v867
    %vm870 = vcmask 1045509
    %v871 = vsel %vm870, %v835, %v869
    %vm872 = vcmask 1046534
    %v873 = vsel %vm872, %v836, %v871
    %vm874 = vcmask 1047559
    %v875 = vsel %vm874, %v837, %v873
    %v876 = vsel %vm862, %v839, %v838
    %v877 = vsel %vm864, %v840, %v876
    %v878 = vsel %vm866, %v841, %v877
    %v879 = vsel %vm868, %v842, %v878
    %v880 = vsel %vm870, %v843, %v879
    %v881 = vsel %vm872, %v844, %v880
    %v882 = vsel %vm874, %v845, %v881
    %883 = vrot.lane.b32.xlu0 %v875, 32
    %v884 = vpop.permute.xlu0 %883
    %885 = vrot.lane.b32.xlu0 %v882, 32
    %v886 = vpop.permute.xlu0 %885
    %v889 = vadd.f32 %v37, %v884
    %v890 = vadd.f32 %v38, %v886
    %891 = vst.msk [vmem:[%s4] sm:$0xff] %vm50, %v440
    %892 = vst.msk [vmem:[%s4 + $0x8] sm:$0xff] %vm50, %v441
    %893 = vst.msk [vmem:[%s4 + $0x10] sm:$0xff] %vm50, %v442
    %894 = vst.msk [vmem:[%s4 + $0x18] sm:$0xff] %vm50, %v443
    %895 = vst.msk [vmem:[%s4 + $0x20] sm:$0xff] %vm50, %v444
    %896 = vst.msk [vmem:[%s4 + $0x28] sm:$0xff] %vm50, %v445
    %897 = vst.msk [vmem:[%s4 + $0x30] sm:$0xff] %vm50, %v446
    %898 = vst.msk [vmem:[%s4 + $0x38] sm:$0xff] %vm50, %v447
    %899 = vst.msk [vmem:[%s4 + $0x40] sm:$0xff] %vm50, %v448
    %900 = vst.msk [vmem:[%s4 + $0x48] sm:$0xff] %vm50, %v449
    %901 = vst.msk [vmem:[%s4 + $0x50] sm:$0xff] %vm50, %v450
    %902 = vst.msk [vmem:[%s4 + $0x58] sm:$0xff] %vm50, %v451
    %903 = vst.msk [vmem:[%s4 + $0x60] sm:$0xff] %vm50, %v452
    %904 = vst.msk [vmem:[%s4 + $0x68] sm:$0xff] %vm50, %v453
    %905 = vst.msk [vmem:[%s4 + $0x70] sm:$0xff] %vm50, %v454
    %906 = vst.msk [vmem:[%s4 + $0x78] sm:$0xff] %vm50, %v455
    %909 = vrot.lane.b32.xlu0 %v889, 96
    %v910 = vpop.permute.xlu0 %909
    %911 = vrot.lane.b32.xlu0 %v890, 96
    %v912 = vpop.permute.xlu0 %911
    %915 = vst.msk [vmem:[#allocation2] sm:$0xff] %vm50, %v910
    %916 = vst.msk [vmem:[#allocation2 + $0x8] sm:$0xff] %vm50, %v912
    %v917 = vsel %vm50, %v440, 0.0
    %v918 = vsel %vm50, %v441, 0.0
    %v919 = vadd.f32 %v917, %v918
    %v920 = vsel %vm50, %v442, 0.0
    %v921 = vadd.f32 %v919, %v920
    %v922 = vsel %vm50, %v443, 0.0
    %v923 = vadd.f32 %v921, %v922
    %v924 = vsel %vm50, %v444, 0.0
    %v925 = vadd.f32 %v923, %v924
    %v926 = vsel %vm50, %v445, 0.0
    %v927 = vadd.f32 %v925, %v926
    %v928 = vsel %vm50, %v446, 0.0
    %v929 = vadd.f32 %v927, %v928
    %v930 = vsel %vm50, %v447, 0.0
    %v931 = vadd.f32 %v929, %v930
    %v932 = vsel %vm50, %v448, 0.0
    %v933 = vadd.f32 %v931, %v932
    %v934 = vsel %vm50, %v449, 0.0
    %v935 = vadd.f32 %v933, %v934
    %v936 = vsel %vm50, %v450, 0.0
    %v937 = vadd.f32 %v935, %v936
    %v938 = vsel %vm50, %v451, 0.0
    %v939 = vadd.f32 %v937, %v938
    %v940 = vsel %vm50, %v452, 0.0
    %v941 = vadd.f32 %v939, %v940
    %v942 = vsel %vm50, %v453, 0.0
    %v943 = vadd.f32 %v941, %v942
    %v944 = vsel %vm50, %v454, 0.0
    %v945 = vadd.f32 %v943, %v944
    %v946 = vsel %vm50, %v455, 0.0
    %v947 = vadd.f32 %v945, %v946
    %v948 = vrot.slane %v947, 4
    %v949 = vadd.f32 %v947, %v948
    %v950 = vrot.slane %v949, 2
    %v951 = vadd.f32 %v949, %v950
    %v952 = vrot.slane %v951, 1
    %v953 = vadd.f32 %v951, %v952
    %v954 = vmul.f32 %v440, %v440
    %v955 = vmul.f32 %v441, %v441
    %v956 = vmul.f32 %v442, %v442
    %v957 = vmul.f32 %v443, %v443
    %v958 = vmul.f32 %v444, %v444
    %v959 = vmul.f32 %v445, %v445
    %v960 = vmul.f32 %v446, %v446
    %v961 = vmul.f32 %v447, %v447
    %v962 = vmul.f32 %v448, %v448
    %v963 = vmul.f32 %v449, %v449
    %v964 = vmul.f32 %v450, %v450
    %v965 = vmul.f32 %v451, %v451
    %v966 = vmul.f32 %v452, %v452
    %v967 = vmul.f32 %v453, %v453
    %v968 = vmul.f32 %v454, %v454
    %v969 = vmul.f32 %v455, %v455
    %v970 = vsel %vm50, %v954, 0.0
    %v971 = vsel %vm50, %v955, 0.0
    %v972 = vadd.f32 %v970, %v971
    %v973 = vsel %vm50, %v956, 0.0
    %v974 = vadd.f32 %v972, %v973
    %v975 = vsel %vm50, %v957, 0.0
    %v976 = vadd.f32 %v974, %v975
    %v977 = vsel %vm50, %v958, 0.0
    %v978 = vadd.f32 %v976, %v977
    %v979 = vsel %vm50, %v959, 0.0
    %v980 = vadd.f32 %v978, %v979
    %v981 = vsel %vm50, %v960, 0.0
    %v982 = vadd.f32 %v980, %v981
    %v983 = vsel %vm50, %v961, 0.0
    %v984 = vadd.f32 %v982, %v983
    %v985 = vsel %vm50, %v962, 0.0
    %v986 = vadd.f32 %v984, %v985
    %v987 = vsel %vm50, %v963, 0.0
    %v988 = vadd.f32 %v986, %v987
    %v989 = vsel %vm50, %v964, 0.0
    %v990 = vadd.f32 %v988, %v989
    %v991 = vsel %vm50, %v965, 0.0
    %v992 = vadd.f32 %v990, %v991
    %v993 = vsel %vm50, %v966, 0.0
    %v994 = vadd.f32 %v992, %v993
    %v995 = vsel %vm50, %v967, 0.0
    %v996 = vadd.f32 %v994, %v995
    %v997 = vsel %vm50, %v968, 0.0
    %v998 = vadd.f32 %v996, %v997
    %v999 = vsel %vm50, %v969, 0.0
    %v1000 = vadd.f32 %v998, %v999
    %v1001 = vrot.slane %v1000, 4
    %v1002 = vadd.f32 %v1000, %v1001
    %v1003 = vrot.slane %v1002, 2
    %v1004 = vadd.f32 %v1002, %v1003
    %v1005 = vrot.slane %v1004, 1
    %v1006 = vadd.f32 %v1004, %v1005
    %vm1007 = vcmask 523520
    %v1008 = vsel %vm1007, %v889, 0.0
    %v1009 = vsel %vm1007, %v890, 0.0
    %v1010 = vadd.f32 %v1008, %v1009
    %v1011 = vrot.slane %v1010, 4
    %v1012 = vadd.f32 %v1010, %v1011
    %v1013 = vrot.slane %v1012, 2
    %v1014 = vadd.f32 %v1012, %v1013
    %v1015 = vrot.slane %v1014, 1
    %v1016 = vadd.f32 %v1014, %v1015
    %v1017 = vmul.f32 %v889, %v889
    %v1018 = vmul.f32 %v890, %v890
    %v1019 = vsel %vm1007, %v1017, 0.0
    %v1020 = vsel %vm1007, %v1018, 0.0
    %v1021 = vadd.f32 %v1019, %v1020
    %v1022 = vrot.slane %v1021, 4
    %v1023 = vadd.f32 %v1021, %v1022
    %v1024 = vrot.slane %v1023, 2
    %v1025 = vadd.f32 %v1023, %v1024
    %v1026 = vrot.slane %v1025, 1
    %v1027 = vadd.f32 %v1025, %v1026
    %1029 = vrot.lane.b32.xlu0 %v1016, 96
    %v1030 = vpop.permute.xlu0 %1029
    %1033 = vrot.lane.b32.xlu0 %v1027, 96
    %v1034 = vpop.permute.xlu0 %1033
    %vm1036 = vcmask 1040384
    %v1037 = vsel %vm1036, %v953, %v1006
    %vm1038 = vcmask 1041408
    %v1039 = vsel %vm1038, %v1037, %v1030
    %vm1040 = vcmask 1042432
    %v1041 = vsel %vm1040, %v1039, %v1034
    %vm1042 = vcmask 257024
    %1043 = vst.msk [vmem:[%s6] sm:$0xf] %vm1042, %v1041
    // Predicated region
    $region18: #{sparse_residual_gated_gcn_forward.16} parent=1 // pred_check
      _
    $region19: #{sparse_residual_gated_gcn_forward.16} parent=1 // pred_check_branch
      %1045 = sbr.rel (0) target = $region21
    $region20: #{sparse_residual_gated_gcn_forward.16} parent=1 // pred_region
      _
    $region21: #{sparse_residual_gated_gcn_forward.16} parent=1 // pred_fallthru
      _
    // Predicated region
    $region22: #{sparse_residual_gated_gcn_forward.16} parent=1 // pred_check
      _
    $region23: #{sparse_residual_gated_gcn_forward.16} parent=1 // pred_check_branch
      %1047 = sbr.rel (0) target = $region25
    $region24: #{sparse_residual_gated_gcn_forward.16} parent=1 // pred_region
      %s1049 = ssub.s32 256, 256
      %1050 = vsyncadd [#allocation3], %s1049
      %s1051 = sshll.u32 [#allocation2], 4
      %s1052 = int_to_ptr.vmem [resolvable:$true] %s1051
      %1057 = dma.vmem_to_hbm [thread:$0]  %s1052, 256, %s5, [#allocation3], 128, 128, 8
    $region25: #{sparse_residual_gated_gcn_forward.16} parent=1 // pred_fallthru
      _
    // Predicated region
    $region26: #{sparse_residual_gated_gcn_forward.16} parent=1 // pred_check
      _
    $region27: #{sparse_residual_gated_gcn_forward.16} parent=1 // pred_check_branch
      %1059 = sbr.rel (0) target = $region29
    $region28: #{sparse_residual_gated_gcn_forward.16} parent=1 // pred_region
      _
    $region29: #{sparse_residual_gated_gcn_forward.16} parent=1 // pred_fallthru
      _
    // Predicated region
    $region30: #{sparse_residual_gated_gcn_forward.16} parent=1 // pred_check
      _
    $region31: #{sparse_residual_gated_gcn_forward.16} parent=1 // pred_check_branch
      %1061 = sbr.rel (0) target = $region33
    $region32: #{sparse_residual_gated_gcn_forward.16} parent=1 // pred_region
      _
    $region33: #{sparse_residual_gated_gcn_forward.16} parent=1 // pred_fallthru
      _
    // Predicated region
    $region34: #{sparse_residual_gated_gcn_forward.16} parent=1 // pred_check
      _
    $region35: #{sparse_residual_gated_gcn_forward.16} parent=1 // pred_check_branch
      %1063 = sbr.rel (0) target = $region37
    $region36: #{sparse_residual_gated_gcn_forward.16} parent=1 // pred_region
      %1064 = dma.done [#allocation3], 256
    $region37: #{sparse_residual_gated_gcn_forward.16} parent=1 // pred_fallthru
      _
    // Predicated region
    $region38: #{sparse_residual_gated_gcn_forward.16} parent=1 // pred_check
      _
    $region39: #{sparse_residual_gated_gcn_forward.16} parent=1 // pred_check_branch
      %1066 = sbr.rel (0) target = $region41
    $region40: #{sparse_residual_gated_gcn_forward.16} parent=1 // pred_region
      _
    $region41: #{sparse_residual_gated_gcn_forward.16} parent=1 // pred_fallthru
      _
    %1067 = vsyncpa [#allocation3], 1

// kernel: sparse_residual_gated_gcn_forward.17
$region0: #{sparse_residual_gated_gcn_forward.17}
  #allocation0 [shape = 'u32[]', space=smem, size = 0x4, offset = 0x4, fixed_abs, tag = 'smem constant byte address 0x4 - core index']
  #allocation1 [shape = 'u32[144,128]{1,0:T(1,128)}', space=vmem, size = 0x12000, scoped, tag = 'internal scratch']
  %s0 = inlined_call_operand.vmem [shape: f32[128,32], index: 0, kind: input, shape index: {}]
  %s1 = inlined_call_operand.vmem [shape: f32[128,32], index: 1, kind: input, shape index: {}]
  %s2 = inlined_call_operand.vmem [shape: f32[1,32], index: 2, kind: input, shape index: {}]
  %s3 = inlined_call_operand.vmem [shape: f32[1,32], index: 3, kind: input, shape index: {}]
  %s4 = inlined_call_operand.vmem [shape: f32[32,32], index: 4, kind: input, shape index: {}]
  %s5 = inlined_call_operand.vmem [shape: f32[1,32], index: 5, kind: input, shape index: {}]
  %s6 = inlined_call_operand.vmem [shape: f32[32,2], index: 6, kind: input, shape index: {}]
  %s7 = inlined_call_operand.vmem [shape: f32[1,2], index: 7, kind: input, shape index: {}]
  %s8 = inlined_call_operand.vmem [shape: f32[128,2], index: 8, kind: output, shape index: {}]
  %s9 = sld [smem:[#allocation0]]
  $region42: #{sparse_residual_gated_gcn_forward.17} parent=0
    _
  %s11 = ssub.s32 1, %s9
  %s12 = scalar_select 0, %s11, %s9
  // Predicated region
  $region2: #{sparse_residual_gated_gcn_forward.17} parent=0 // pred_check
    _
  $region3: #{sparse_residual_gated_gcn_forward.17} parent=0 // pred_check_branch
    %14 = sbr.rel (0) target = $region5
  $region4: #{sparse_residual_gated_gcn_forward.17} parent=0 // pred_region
    _
  $region5: #{sparse_residual_gated_gcn_forward.17} parent=0 // pred_fallthru
    _
  // Predicated region
  $region6: #{sparse_residual_gated_gcn_forward.17} parent=0 // pred_check
    _
  $region7: #{sparse_residual_gated_gcn_forward.17} parent=0 // pred_check_branch
    %16 = sbr.rel (0) target = $region9
  $region8: #{sparse_residual_gated_gcn_forward.17} parent=0 // pred_region
    _
  $region9: #{sparse_residual_gated_gcn_forward.17} parent=0 // pred_fallthru
    _
  // Predicated region
  $region10: #{sparse_residual_gated_gcn_forward.17} parent=0 // pred_check
    _
  $region11: #{sparse_residual_gated_gcn_forward.17} parent=0 // pred_check_branch
    %18 = sbr.rel (0) target = $region13
  $region12: #{sparse_residual_gated_gcn_forward.17} parent=0 // pred_region
    _
  $region13: #{sparse_residual_gated_gcn_forward.17} parent=0 // pred_fallthru
    _
  // Predicated region
  $region14: #{sparse_residual_gated_gcn_forward.17} parent=0 // pred_check
    _
  $region15: #{sparse_residual_gated_gcn_forward.17} parent=0 // pred_check_branch
    %20 = sbr.rel (0) target = $region17
  $region16: #{sparse_residual_gated_gcn_forward.17} parent=0 // pred_region
    _
  $region17: #{sparse_residual_gated_gcn_forward.17} parent=0 // pred_fallthru
    _
  // Predicated region
  $region18: #{sparse_residual_gated_gcn_forward.17} parent=0 // pred_check
    _
  $region19: #{sparse_residual_gated_gcn_forward.17} parent=0 // pred_check_branch
    %22 = sbr.rel (0) target = $region21
  $region20: #{sparse_residual_gated_gcn_forward.17} parent=0 // pred_region
    _
  $region21: #{sparse_residual_gated_gcn_forward.17} parent=0 // pred_fallthru
    _
  // Predicated region
  $region22: #{sparse_residual_gated_gcn_forward.17} parent=0 // pred_check
    _
  $region23: #{sparse_residual_gated_gcn_forward.17} parent=0 // pred_check_branch
    %24 = sbr.rel (0) target = $region25
  $region24: #{sparse_residual_gated_gcn_forward.17} parent=0 // pred_region
    _
  $region25: #{sparse_residual_gated_gcn_forward.17} parent=0 // pred_fallthru
    _
  // Predicated region
  $region26: #{sparse_residual_gated_gcn_forward.17} parent=0 // pred_check
    _
  $region27: #{sparse_residual_gated_gcn_forward.17} parent=0 // pred_check_branch
    %26 = sbr.rel (0) target = $region29
  $region28: #{sparse_residual_gated_gcn_forward.17} parent=0 // pred_region
    _
  $region29: #{sparse_residual_gated_gcn_forward.17} parent=0 // pred_fallthru
    _
  // Predicated region
  $region30: #{sparse_residual_gated_gcn_forward.17} parent=0 // pred_check
    _
  $region31: #{sparse_residual_gated_gcn_forward.17} parent=0 // pred_check_branch
    %28 = sbr.rel (0) target = $region33
  $region32: #{sparse_residual_gated_gcn_forward.17} parent=0 // pred_region
    _
  $region33: #{sparse_residual_gated_gcn_forward.17} parent=0 // pred_fallthru
    _
  %v29 = vld [vmem:[%s1] sm:$0xff]
  %v30 = vld [vmem:[%s1 + $0x8] sm:$0xff]
  %v31 = vld [vmem:[%s1 + $0x10] sm:$0xff]
  %v32 = vld [vmem:[%s1 + $0x18] sm:$0xff]
  %v33 = vld [vmem:[%s1 + $0x20] sm:$0xff]
  %v34 = vld [vmem:[%s1 + $0x28] sm:$0xff]
  %v35 = vld [vmem:[%s1 + $0x30] sm:$0xff]
  %v36 = vld [vmem:[%s1 + $0x38] sm:$0xff]
  %v37 = vld [vmem:[%s1 + $0x40] sm:$0xff]
  %v38 = vld [vmem:[%s1 + $0x48] sm:$0xff]
  %v39 = vld [vmem:[%s1 + $0x50] sm:$0xff]
  %v40 = vld [vmem:[%s1 + $0x58] sm:$0xff]
  %v41 = vld [vmem:[%s1 + $0x60] sm:$0xff]
  %v42 = vld [vmem:[%s1 + $0x68] sm:$0xff]
  %v43 = vld [vmem:[%s1 + $0x70] sm:$0xff]
  %v44 = vld [vmem:[%s1 + $0x78] sm:$0xff]
  %v45 = vld [vmem:[%s0] sm:$0xff]
  %v46 = vld [vmem:[%s0 + $0x8] sm:$0xff]
  %v47 = vld [vmem:[%s0 + $0x10] sm:$0xff]
  %v48 = vld [vmem:[%s0 + $0x18] sm:$0xff]
  %v49 = vld [vmem:[%s0 + $0x20] sm:$0xff]
  %v50 = vld [vmem:[%s0 + $0x28] sm:$0xff]
  %v51 = vld [vmem:[%s0 + $0x30] sm:$0xff]
  %v52 = vld [vmem:[%s0 + $0x38] sm:$0xff]
  %v53 = vld [vmem:[%s0 + $0x40] sm:$0xff]
  %v54 = vld [vmem:[%s0 + $0x48] sm:$0xff]
  %v55 = vld [vmem:[%s0 + $0x50] sm:$0xff]
  %v56 = vld [vmem:[%s0 + $0x58] sm:$0xff]
  %v57 = vld [vmem:[%s0 + $0x60] sm:$0xff]
  %v58 = vld [vmem:[%s0 + $0x68] sm:$0xff]
  %v59 = vld [vmem:[%s0 + $0x70] sm:$0xff]
  %v60 = vld [vmem:[%s0 + $0x78] sm:$0xff]
  %v61 = vld [vmem:[%s2] sm:$0x1]
  %v63 = vlaneseq
  %v64 = vshrl.u32 %v63, 7
  %v65 = vsub.s32 0, %v64
  %v66 = vrot.slane %v61, %v65
  %v68 = vmul.f32 %v45, %v66
  %v69 = vmul.f32 %v46, %v66
  %v70 = vmul.f32 %v47, %v66
  %v71 = vmul.f32 %v48, %v66
  %v72 = vmul.f32 %v49, %v66
  %v73 = vmul.f32 %v50, %v66
  %v74 = vmul.f32 %v51, %v66
  %v75 = vmul.f32 %v52, %v66
  %v76 = vmul.f32 %v53, %v66
  %v77 = vmul.f32 %v54, %v66
  %v78 = vmul.f32 %v55, %v66
  %v79 = vmul.f32 %v56, %v66
  %v80 = vmul.f32 %v57, %v66
  %v81 = vmul.f32 %v58, %v66
  %v82 = vmul.f32 %v59, %v66
  %v83 = vmul.f32 %v60, %v66
  %v84 = vld [vmem:[%s3] sm:$0x1]
  %v86 = vlaneseq
  %v87 = vshrl.u32 %v86, 7
  %v88 = vsub.s32 0, %v87
  %v89 = vrot.slane %v84, %v88
  %v91 = vadd.f32 %v68, %v89
  %v92 = vadd.f32 %v69, %v89
  %v93 = vadd.f32 %v70, %v89
  %v94 = vadd.f32 %v71, %v89
  %v95 = vadd.f32 %v72, %v89
  %v96 = vadd.f32 %v73, %v89
  %v97 = vadd.f32 %v74, %v89
  %v98 = vadd.f32 %v75, %v89
  %v99 = vadd.f32 %v76, %v89
  %v100 = vadd.f32 %v77, %v89
  %v101 = vadd.f32 %v78, %v89
  %v102 = vadd.f32 %v79, %v89
  %v103 = vadd.f32 %v80, %v89
  %v104 = vadd.f32 %v81, %v89
  %v105 = vadd.f32 %v82, %v89
  %v106 = vadd.f32 %v83, %v89
  %v107 = vmax.f32 %v91, 0.0
  %v108 = vmax.f32 %v92, 0.0
  %v109 = vmax.f32 %v93, 0.0
  %v110 = vmax.f32 %v94, 0.0
  %v111 = vmax.f32 %v95, 0.0
  %v112 = vmax.f32 %v96, 0.0
  %v113 = vmax.f32 %v97, 0.0
  %v114 = vmax.f32 %v98, 0.0
  %v115 = vmax.f32 %v99, 0.0
  %v116 = vmax.f32 %v100, 0.0
  %v117 = vmax.f32 %v101, 0.0
  %v118 = vmax.f32 %v102, 0.0
  %v119 = vmax.f32 %v103, 0.0
  %v120 = vmax.f32 %v104, 0.0
  %v121 = vmax.f32 %v105, 0.0
  %v122 = vmax.f32 %v106, 0.0
  %v123 = vadd.f32 %v29, %v107
  %v124 = vadd.f32 %v30, %v108
  %v125 = vadd.f32 %v31, %v109
  %v126 = vadd.f32 %v32, %v110
  %v127 = vadd.f32 %v33, %v111
  %v128 = vadd.f32 %v34, %v112
  %v129 = vadd.f32 %v35, %v113
  %v130 = vadd.f32 %v36, %v114
  %v131 = vadd.f32 %v37, %v115
  %v132 = vadd.f32 %v38, %v116
  %v133 = vadd.f32 %v39, %v117
  %v134 = vadd.f32 %v40, %v118
  %v135 = vadd.f32 %v41, %v119
  %v136 = vadd.f32 %v42, %v120
  %v137 = vadd.f32 %v43, %v121
  %v138 = vadd.f32 %v44, %v122
  %v139 = vld [vmem:[%s4] sm:$0xff]
  %v140 = vld [vmem:[%s4 + $0x8] sm:$0xff]
  %v141 = vld [vmem:[%s4 + $0x10] sm:$0xff]
  %v142 = vld [vmem:[%s4 + $0x18] sm:$0xff]
  %v143 = vld [vmem:[%s5] sm:$0x1]
  %v145 = vlaneseq
  %v146 = vshrl.u32 %v145, 7
  %v147 = vsub.s32 0, %v146
  %v148 = vrot.slane %v143, %v147
  %vm150 = vcmask 261120
  %v152 = vsel %vm150, %v123, 0
  %v155 = vsel %vm150, %v124, 0
  %v158 = vsel %vm150, %v125, 0
  %v161 = vsel %vm150, %v126, 0
  %v164 = vsel %vm150, %v127, 0
  %v167 = vsel %vm150, %v128, 0
  %v170 = vsel %vm150, %v129, 0
  %v173 = vsel %vm150, %v130, 0
  %v176 = vsel %vm150, %v131, 0
  %v179 = vsel %vm150, %v132, 0
  %v182 = vsel %vm150, %v133, 0
  %v185 = vsel %vm150, %v134, 0
  %v188 = vsel %vm150, %v135, 0
  %v191 = vsel %vm150, %v136, 0
  %v194 = vsel %vm150, %v137, 0
  %v197 = vsel %vm150, %v138, 0
  %199 = vmatprep.subr.mxu0 0.0
  %200 = vmatpush1.msra.mxu0 %v139
  %201 = vmatprep.subr.mxu0 0.0
  %202 = vmatpush1.msra.mxu0 %v140
  %203 = vmatprep.subr.mxu0 0.0
  %204 = vmatpush1.msra.mxu0 %v141
  %205 = vmatprep.subr.mxu0 0.0
  %206 = vmatpush1.msra.mxu0 %v142
  %207 = vmatprep.subr.mxu0 0.0
  %208 = vmatpush1.msra.mxu0 0.0
  %209 = vmatprep.subr.mxu0 0.0
  %210 = vmatpush1.msra.mxu0 0.0
  %211 = vmatprep.subr.mxu0 0.0
  %212 = vmatpush1.msra.mxu0 0.0
  %213 = vmatprep.subr.mxu0 0.0
  %214 = vmatpush1.msra.mxu0 0.0
  %215 = vmatprep.subr.mxu0 0.0
  %216 = vmatpush1.msra.mxu0 0.0
  %217 = vmatprep.subr.mxu0 0.0
  %218 = vmatpush1.msra.mxu0 0.0
  %219 = vmatprep.subr.mxu0 0.0
  %220 = vmatpush1.msra.mxu0 0.0
  %221 = vmatprep.subr.mxu0 0.0
  %222 = vmatpush1.msra.mxu0 0.0
  %223 = vmatprep.subr.mxu0 0.0
  %224 = vmatpush1.msra.mxu0 0.0
  %225 = vmatprep.subr.mxu0 0.0
  %226 = vmatpush1.msra.mxu0 0.0
  %227 = vmatprep.subr.mxu0 0.0
  %228 = vmatpush1.msra.mxu0 0.0
  %229 = vmatprep.subr.mxu0 0.0
  %230 = vmatpush1.msra.mxu0 0.0
  %231 = vmatprep.subr.mxu0 0.0
  %232 = vmatpush1.msra.mxu0 0.0
  %233 = vmatprep.subr.mxu0 0.0
  %234 = vmatpush1.msra.mxu0 0.0
  %235 = vmatprep.subr.mxu0 0.0
  %236 = vmatpush1.msra.mxu0 0.0
  %237 = vmatprep.subr.mxu0 0.0
  %238 = vmatpush1.msra.mxu0 0.0
  %239 = vmatprep.subr.mxu0 0.0
  %240 = vmatpush1.msra.mxu0 0.0
  %241 = vmatprep.subr.mxu0 0.0
  %242 = vmatpush1.msra.mxu0 0.0
  %243 = vmatprep.subr.mxu0 0.0
  %244 = vmatpush1.msra.mxu0 0.0
  %245 = vmatprep.subr.mxu0 0.0
  %246 = vmatpush1.msra.mxu0 0.0
  %247 = vmatprep.subr.mxu0 0.0
  %248 = vmatpush1.msra.mxu0 0.0
  %249 = vmatprep.subr.mxu0 0.0
  %250 = vmatpush1.msra.mxu0 0.0
  %251 = vmatprep.subr.mxu0 0.0
  %252 = vmatpush1.msra.mxu0 0.0
  %253 = vmatprep.subr.mxu0 0.0
  %254 = vmatpush1.msra.mxu0 0.0
  %255 = vmatprep.subr.mxu0 0.0
  %256 = vmatpush1.msra.mxu0 0.0
  %257 = vmatprep.subr.mxu0 0.0
  %258 = vmatpush1.msra.mxu0 0.0
  %259 = vmatprep.subr.mxu0 0.0
  %260 = vmatpush1.msra.mxu0 0.0
  %261 = vmatprep.subr.mxu0 0.0
  %262 = vmatpush1.msra.mxu0 0.0
  %263 = vmatprep.mubr.f32.mxu0 0.0
  %264 = vmatmul.mubr.f32.gmra.mrb[0].mxu0 %v152
  %v265 = vpop.f32.mrb[0].mxu0
  %v266 = vadd.f32 %v148, %v265
  %v267 = vpop.f32.mrb[0].mxu0
  %268 = vmatprep.mubr.f32.mxu0 0.0
  %269 = vmatmul.mubr.f32.gmra.mrb[0].mxu0 %v155
  %v270 = vpop.f32.mrb[0].mxu0
  %v271 = vadd.f32 %v148, %v270
  %v272 = vpop.f32.mrb[0].mxu0
  %273 = vmatprep.mubr.f32.mxu0 0.0
  %274 = vmatmul.mubr.f32.gmra.mrb[0].mxu0 %v158
  %v275 = vpop.f32.mrb[0].mxu0
  %v276 = vadd.f32 %v148, %v275
  %v277 = vpop.f32.mrb[0].mxu0
  %278 = vmatprep.mubr.f32.mxu0 0.0
  %279 = vmatmul.mubr.f32.gmra.mrb[0].mxu0 %v161
  %v280 = vpop.f32.mrb[0].mxu0
  %v281 = vadd.f32 %v148, %v280
  %v282 = vpop.f32.mrb[0].mxu0
  %283 = vmatprep.mubr.f32.mxu0 0.0
  %284 = vmatmul.mubr.f32.gmra.mrb[0].mxu0 %v164
  %v285 = vpop.f32.mrb[0].mxu0
  %v286 = vadd.f32 %v148, %v285
  %v287 = vpop.f32.mrb[0].mxu0
  %288 = vmatprep.mubr.f32.mxu0 0.0
  %289 = vmatmul.mubr.f32.gmra.mrb[0].mxu0 %v167
  %v290 = vpop.f32.mrb[0].mxu0
  %v291 = vadd.f32 %v148, %v290
  %v292 = vpop.f32.mrb[0].mxu0
  %293 = vmatprep.mubr.f32.mxu0 0.0
  %294 = vmatmul.mubr.f32.gmra.mrb[0].mxu0 %v170
  %v295 = vpop.f32.mrb[0].mxu0
  %v296 = vadd.f32 %v148, %v295
  %v297 = vpop.f32.mrb[0].mxu0
  %298 = vmatprep.mubr.f32.mxu0 0.0
  %299 = vmatmul.mubr.f32.gmra.mrb[0].mxu0 %v173
  %v300 = vpop.f32.mrb[0].mxu0
  %v301 = vadd.f32 %v148, %v300
  %v302 = vpop.f32.mrb[0].mxu0
  %303 = vmatprep.mubr.f32.mxu0 0.0
  %304 = vmatmul.mubr.f32.gmra.mrb[0].mxu0 %v176
  %v305 = vpop.f32.mrb[0].mxu0
  %v306 = vadd.f32 %v148, %v305
  %v307 = vpop.f32.mrb[0].mxu0
  %308 = vmatprep.mubr.f32.mxu0 0.0
  %309 = vmatmul.mubr.f32.gmra.mrb[0].mxu0 %v179
  %v310 = vpop.f32.mrb[0].mxu0
  %v311 = vadd.f32 %v148, %v310
  %v312 = vpop.f32.mrb[0].mxu0
  %313 = vmatprep.mubr.f32.mxu0 0.0
  %314 = vmatmul.mubr.f32.gmra.mrb[0].mxu0 %v182
  %v315 = vpop.f32.mrb[0].mxu0
  %v316 = vadd.f32 %v148, %v315
  %v317 = vpop.f32.mrb[0].mxu0
  %318 = vmatprep.mubr.f32.mxu0 0.0
  %319 = vmatmul.mubr.f32.gmra.mrb[0].mxu0 %v185
  %v320 = vpop.f32.mrb[0].mxu0
  %v321 = vadd.f32 %v148, %v320
  %v322 = vpop.f32.mrb[0].mxu0
  %323 = vmatprep.mubr.f32.mxu0 0.0
  %324 = vmatmul.mubr.f32.gmra.mrb[0].mxu0 %v188
  %v325 = vpop.f32.mrb[0].mxu0
  %v326 = vadd.f32 %v148, %v325
  %v327 = vpop.f32.mrb[0].mxu0
  %328 = vmatprep.mubr.f32.mxu0 0.0
  %329 = vmatmul.mubr.f32.gmra.mrb[0].mxu0 %v191
  %v330 = vpop.f32.mrb[0].mxu0
  %v331 = vadd.f32 %v148, %v330
  %v332 = vpop.f32.mrb[0].mxu0
  %333 = vmatprep.mubr.f32.mxu0 0.0
  %334 = vmatmul.mubr.f32.gmra.mrb[0].mxu0 %v194
  %v335 = vpop.f32.mrb[0].mxu0
  %v336 = vadd.f32 %v148, %v335
  %v337 = vpop.f32.mrb[0].mxu0
  %338 = vmatprep.mubr.f32.mxu0 0.0
  %339 = vmatmul.mubr.f32.gmra.mrb[0].mxu0 %v197
  %v340 = vpop.f32.mrb[0].mxu0
  %v341 = vadd.f32 %v148, %v340
  %v342 = vpop.f32.mrb[0].mxu0
  %343 = vdwg.mxu0
  %v344 = vmax.f32 %v266, 0.0
  %v345 = vmax.f32 %v271, 0.0
  %v346 = vmax.f32 %v276, 0.0
  %v347 = vmax.f32 %v281, 0.0
  %v348 = vmax.f32 %v286, 0.0
  %v349 = vmax.f32 %v291, 0.0
  %v350 = vmax.f32 %v296, 0.0
  %v351 = vmax.f32 %v301, 0.0
  %v352 = vmax.f32 %v306, 0.0
  %v353 = vmax.f32 %v311, 0.0
  %v354 = vmax.f32 %v316, 0.0
  %v355 = vmax.f32 %v321, 0.0
  %v356 = vmax.f32 %v326, 0.0
  %v357 = vmax.f32 %v331, 0.0
  %v358 = vmax.f32 %v336, 0.0
  %v359 = vmax.f32 %v341, 0.0
  %v360 = vld [vmem:[%s6] sm:$0xff]
  %v361 = vld [vmem:[%s6 + $0x8] sm:$0xff]
  %v362 = vld [vmem:[%s6 + $0x10] sm:$0xff]
  %v363 = vld [vmem:[%s6 + $0x18] sm:$0xff]
  %v364 = vld [vmem:[%s7] sm:$0x1]
  %v366 = vlaneseq
  %v367 = vshrl.u32 %v366, 7
  %v368 = vsub.s32 0, %v367
  %v369 = vrot.slane %v364, %v368
  %v372 = vsel %vm150, %v344, 0
  %v375 = vsel %vm150, %v345, 0
  %v378 = vsel %vm150, %v346, 0
  %v381 = vsel %vm150, %v347, 0
  %v384 = vsel %vm150, %v348, 0
  %v387 = vsel %vm150, %v349, 0
  %v390 = vsel %vm150, %v350, 0
  %v393 = vsel %vm150, %v351, 0
  %v396 = vsel %vm150, %v352, 0
  %v399 = vsel %vm150, %v353, 0
  %v402 = vsel %vm150, %v354, 0
  %v405 = vsel %vm150, %v355, 0
  %v408 = vsel %vm150, %v356, 0
  %v411 = vsel %vm150, %v357, 0
  %v414 = vsel %vm150, %v358, 0
  %v417 = vsel %vm150, %v359, 0
  %419 = vmatprep.subr.mxu0 0.0
  %420 = vmatpush1.msra.mxu0 %v360
  %421 = vmatprep.subr.mxu0 0.0
  %422 = vmatpush1.msra.mxu0 %v361
  %423 = vmatprep.subr.mxu0 0.0
  %424 = vmatpush1.msra.mxu0 %v362
  %425 = vmatprep.subr.mxu0 0.0
  %426 = vmatpush1.msra.mxu0 %v363
  %427 = vmatprep.subr.mxu0 0.0
  %428 = vmatpush1.msra.mxu0 0.0
  %429 = vmatprep.subr.mxu0 0.0
  %430 = vmatpush1.msra.mxu0 0.0
  %431 = vmatprep.subr.mxu0 0.0
  %432 = vmatpush1.msra.mxu0 0.0
  %433 = vmatprep.subr.mxu0 0.0
  %434 = vmatpush1.msra.mxu0 0.0
  %435 = vmatprep.subr.mxu0 0.0
  %436 = vmatpush1.msra.mxu0 0.0
  %437 = vmatprep.subr.mxu0 0.0
  %438 = vmatpush1.msra.mxu0 0.0
  %439 = vmatprep.subr.mxu0 0.0
  %440 = vmatpush1.msra.mxu0 0.0
  %441 = vmatprep.subr.mxu0 0.0
  %442 = vmatpush1.msra.mxu0 0.0
  %443 = vmatprep.subr.mxu0 0.0
  %444 = vmatpush1.msra.mxu0 0.0
  %445 = vmatprep.subr.mxu0 0.0
  %446 = vmatpush1.msra.mxu0 0.0
  %447 = vmatprep.subr.mxu0 0.0
  %448 = vmatpush1.msra.mxu0 0.0
  %449 = vmatprep.subr.mxu0 0.0
  %450 = vmatpush1.msra.mxu0 0.0
  %451 = vmatprep.subr.mxu0 0.0
  %452 = vmatpush1.msra.mxu0 0.0
  %453 = vmatprep.subr.mxu0 0.0
  %454 = vmatpush1.msra.mxu0 0.0
  %455 = vmatprep.subr.mxu0 0.0
  %456 = vmatpush1.msra.mxu0 0.0
  %457 = vmatprep.subr.mxu0 0.0
  %458 = vmatpush1.msra.mxu0 0.0
  %459 = vmatprep.subr.mxu0 0.0
  %460 = vmatpush1.msra.mxu0 0.0
  %461 = vmatprep.subr.mxu0 0.0
  %462 = vmatpush1.msra.mxu0 0.0
  %463 = vmatprep.subr.mxu0 0.0
  %464 = vmatpush1.msra.mxu0 0.0
  %465 = vmatprep.subr.mxu0 0.0
  %466 = vmatpush1.msra.mxu0 0.0
  %467 = vmatprep.subr.mxu0 0.0
  %468 = vmatpush1.msra.mxu0 0.0
  %469 = vmatprep.subr.mxu0 0.0
  %470 = vmatpush1.msra.mxu0 0.0
  %471 = vmatprep.subr.mxu0 0.0
  %472 = vmatpush1.msra.mxu0 0.0
  %473 = vmatprep.subr.mxu0 0.0
  %474 = vmatpush1.msra.mxu0 0.0
  %475 = vmatprep.subr.mxu0 0.0
  %476 = vmatpush1.msra.mxu0 0.0
  %477 = vmatprep.subr.mxu0 0.0
  %478 = vmatpush1.msra.mxu0 0.0
  %479 = vmatprep.subr.mxu0 0.0
  %480 = vmatpush1.msra.mxu0 0.0
  %481 = vmatprep.subr.mxu0 0.0
  %482 = vmatpush1.msra.mxu0 0.0
  %483 = vmatprep.mubr.f32.mxu0 0.0
  %484 = vmatmul.mubr.f32.gmra.mrb[0].mxu0 %v372
  %v485 = vpop.f32.mrb[0].mxu0
  %v486 = vadd.f32 %v369, %v485
  %v487 = vpop.f32.mrb[0].mxu0
  %488 = vmatprep.mubr.f32.mxu0 0.0
  %489 = vmatmul.mubr.f32.gmra.mrb[0].mxu0 %v375
  %v490 = vpop.f32.mrb[0].mxu0
  %v491 = vadd.f32 %v369, %v490
  %v492 = vpop.f32.mrb[0].mxu0
  %493 = vmatprep.mubr.f32.mxu0 0.0
  %494 = vmatmul.mubr.f32.gmra.mrb[0].mxu0 %v378
  %v495 = vpop.f32.mrb[0].mxu0
  %v496 = vadd.f32 %v369, %v495
  %v497 = vpop.f32.mrb[0].mxu0
  %498 = vmatprep.mubr.f32.mxu0 0.0
  %499 = vmatmul.mubr.f32.gmra.mrb[0].mxu0 %v381
  %v500 = vpop.f32.mrb[0].mxu0
  %v501 = vadd.f32 %v369, %v500
  %v502 = vpop.f32.mrb[0].mxu0
  %503 = vmatprep.mubr.f32.mxu0 0.0
  %504 = vmatmul.mubr.f32.gmra.mrb[0].mxu0 %v384
  %v505 = vpop.f32.mrb[0].mxu0
  %v506 = vadd.f32 %v369, %v505
  %v507 = vpop.f32.mrb[0].mxu0
  %508 = vmatprep.mubr.f32.mxu0 0.0
  %509 = vmatmul.mubr.f32.gmra.mrb[0].mxu0 %v387
  %v510 = vpop.f32.mrb[0].mxu0
  %v511 = vadd.f32 %v369, %v510
  %v512 = vpop.f32.mrb[0].mxu0
  %513 = vmatprep.mubr.f32.mxu0 0.0
  %514 = vmatmul.mubr.f32.gmra.mrb[0].mxu0 %v390
  %v515 = vpop.f32.mrb[0].mxu0
  %v516 = vadd.f32 %v369, %v515
  %v517 = vpop.f32.mrb[0].mxu0
  %518 = vmatprep.mubr.f32.mxu0 0.0
  %519 = vmatmul.mubr.f32.gmra.mrb[0].mxu0 %v393
  %v520 = vpop.f32.mrb[0].mxu0
  %v521 = vadd.f32 %v369, %v520
  %v522 = vpop.f32.mrb[0].mxu0
  %523 = vmatprep.mubr.f32.mxu0 0.0
  %524 = vmatmul.mubr.f32.gmra.mrb[0].mxu0 %v396
  %v525 = vpop.f32.mrb[0].mxu0
  %v526 = vadd.f32 %v369, %v525
  %v527 = vpop.f32.mrb[0].mxu0
  %528 = vmatprep.mubr.f32.mxu0 0.0
  %529 = vmatmul.mubr.f32.gmra.mrb[0].mxu0 %v399
  %v530 = vpop.f32.mrb[0].mxu0
  %v531 = vadd.f32 %v369, %v530
  %v532 = vpop.f32.mrb[0].mxu0
  %533 = vmatprep.mubr.f32.mxu0 0.0
  %534 = vmatmul.mubr.f32.gmra.mrb[0].mxu0 %v402
  %v535 = vpop.f32.mrb[0].mxu0
  %v536 = vadd.f32 %v369, %v535
  %v537 = vpop.f32.mrb[0].mxu0
  %538 = vmatprep.mubr.f32.mxu0 0.0
  %539 = vmatmul.mubr.f32.gmra.mrb[0].mxu0 %v405
  %v540 = vpop.f32.mrb[0].mxu0
  %v541 = vadd.f32 %v369, %v540
  %v542 = vpop.f32.mrb[0].mxu0
  %543 = vmatprep.mubr.f32.mxu0 0.0
  %544 = vmatmul.mubr.f32.gmra.mrb[0].mxu0 %v408
  %v545 = vpop.f32.mrb[0].mxu0
  %v546 = vadd.f32 %v369, %v545
  %v547 = vpop.f32.mrb[0].mxu0
  %548 = vmatprep.mubr.f32.mxu0 0.0
  %549 = vmatmul.mubr.f32.gmra.mrb[0].mxu0 %v411
  %v550 = vpop.f32.mrb[0].mxu0
  %v551 = vadd.f32 %v369, %v550
  %v552 = vpop.f32.mrb[0].mxu0
  %553 = vmatprep.mubr.f32.mxu0 0.0
  %554 = vmatmul.mubr.f32.gmra.mrb[0].mxu0 %v414
  %v555 = vpop.f32.mrb[0].mxu0
  %v556 = vadd.f32 %v369, %v555
  %v557 = vpop.f32.mrb[0].mxu0
  %558 = vmatprep.mubr.f32.mxu0 0.0
  %559 = vmatmul.mubr.f32.gmra.mrb[0].mxu0 %v417
  %v560 = vpop.f32.mrb[0].mxu0
  %v561 = vadd.f32 %v369, %v560
  %v562 = vpop.f32.mrb[0].mxu0
  %563 = vdwg.mxu0
  %vm564 = vcmask 15360
  %565 = vst.msk [vmem:[%s8] sm:$0xff] %vm564, %v486
  %566 = vst.msk [vmem:[%s8 + $0x8] sm:$0xff] %vm564, %v491
  %567 = vst.msk [vmem:[%s8 + $0x10] sm:$0xff] %vm564, %v496
  %568 = vst.msk [vmem:[%s8 + $0x18] sm:$0xff] %vm564, %v501
  %569 = vst.msk [vmem:[%s8 + $0x20] sm:$0xff] %vm564, %v506
  %570 = vst.msk [vmem:[%s8 + $0x28] sm:$0xff] %vm564, %v511
  %571 = vst.msk [vmem:[%s8 + $0x30] sm:$0xff] %vm564, %v516
  %572 = vst.msk [vmem:[%s8 + $0x38] sm:$0xff] %vm564, %v521
  %573 = vst.msk [vmem:[%s8 + $0x40] sm:$0xff] %vm564, %v526
  %574 = vst.msk [vmem:[%s8 + $0x48] sm:$0xff] %vm564, %v531
  %575 = vst.msk [vmem:[%s8 + $0x50] sm:$0xff] %vm564, %v536
  %576 = vst.msk [vmem:[%s8 + $0x58] sm:$0xff] %vm564, %v541
  %577 = vst.msk [vmem:[%s8 + $0x60] sm:$0xff] %vm564, %v546
  %578 = vst.msk [vmem:[%s8 + $0x68] sm:$0xff] %vm564, %v551
  %579 = vst.msk [vmem:[%s8 + $0x70] sm:$0xff] %vm564, %v556
  %580 = vst.msk [vmem:[%s8 + $0x78] sm:$0xff] %vm564, %v561
  // Predicated region
  $region34: #{sparse_residual_gated_gcn_forward.17} parent=0 // pred_check
    _
  $region35: #{sparse_residual_gated_gcn_forward.17} parent=0 // pred_check_branch
    %582 = sbr.rel (0) target = $region37
  $region36: #{sparse_residual_gated_gcn_forward.17} parent=0 // pred_region
    _
  $region37: #{sparse_residual_gated_gcn_forward.17} parent=0 // pred_fallthru
    _
  // Predicated region
  $region38: #{sparse_residual_gated_gcn_forward.17} parent=0 // pred_check
    _
  $region39: #{sparse_residual_gated_gcn_forward.17} parent=0 // pred_check_branch
    %584 = sbr.rel (0) target = $region41
  $region40: #{sparse_residual_gated_gcn_forward.17} parent=0 // pred_region
    _
  $region41: #{sparse_residual_gated_gcn_forward.17} parent=0 // pred_fallthru
    _

</llo_original>
